<compile_context>
chip_gen: v7x
topology: tpu7x:2x2x1
jax: 0.10.0
libtpu: 0.0.40
codegen_flags: <defaults>
</compile_context>

<pallas_src>
import jax
import jax.numpy as jnp
from jax.experimental import pallas as pl
from jax.experimental.pallas import tpu as pltpu


def _fused_patch_embed_kernel(p_ref, w1_ref, b1_ref, w2_ref, b2_ref,
                              wp_ref, bp_ref, o_ref):
    # p_ref : (16, T, C*256) bf16  -- conv1 im2col, sub-patch-major
    # w1_ref: (C*256, hidden) bf16
    # w2_ref: (16, hidden, hidden) bf16, indexed [s, c_in, c_out], s = kh*4+kw
    # wp_ref: (hidden, embed) bf16
    # b*_ref: (1, hidden|embed) f32
    # o_ref : (T, embed) f32
    t_tile = o_ref.shape[0]
    hidden = w2_ref.shape[2]

    acc = jnp.zeros((t_tile, hidden), jnp.float32)
    # Static unroll over the 4x4 grid of 16x16 sub-patches inside one token.
    for s in range(16):
        # conv1 for sub-patch s of every token in the tile (+ bias + relu).
        y1 = jnp.dot(p_ref[s], w1_ref[...],
                     preferred_element_type=jnp.float32)
        y1 = jnp.maximum(y1 + b1_ref[...], 0.0)
        # conv2 contribution of this sub-patch, accumulated in f32.
        acc = acc + jnp.dot(y1.astype(jnp.bfloat16), w2_ref[s],
                            preferred_element_type=jnp.float32)
    y2 = jnp.maximum(acc + b2_ref[...], 0.0)
    # 1x1 projection (no relu).
    y3 = jnp.dot(y2.astype(jnp.bfloat16), wp_ref[...],
                 preferred_element_type=jnp.float32) + bp_ref[...]
    o_ref[...] = y3.astype(o_ref.dtype)


def _pick_token_tile(m):
    """Largest sublane-aligned divisor of m (<=128) that still leaves >= 2
    grid blocks (so the parallel axis can be sharded across TensorCores)."""
    best = None
    for t in range(min(m, 128), 0, -1):
        if m % t:
            continue
        aligned = (t % 8 == 0) or (t == m)
        if aligned and (m // t) >= 2:
            return t
        if best is None and aligned:
            best = t
    return best if best is not None else m


def small_patch_embed_forward(x, params):
    """x: [B, C, H, W] NCHW, H and W multiples of 64.
    Returns [B, (H//64)*(W//64), embed_dim], matching the PyTorch module."""
    w1, b1, w2, b2, wp, bp = params
    B, C, H, W = x.shape
    hidden = w1.shape[0]
    embed = wp.shape[0]
    H2, W2 = H // 64, W // 64
    m = B * H2 * W2              # number of output tokens
    k1 = C * 256                 # conv1 contraction dim (multiple of 256)

    # Single XLA-side patchify for conv1 (sub-patch-major), cast to bf16 so the
    # kernel input DMA moves half the bytes.  Shape: (16, tokens, C*256) with
    # columns in (c, kh, kw) order to match torch's OIHW weight flattening.
    p1 = (x.reshape(B, C, H2, 4, 16, W2, 4, 16)
            .transpose(3, 6, 0, 2, 5, 1, 4, 7)      # (kh, kw, B, H2, W2, C, 16, 16)
            .reshape(16, m, k1)
            .astype(jnp.bfloat16))

    # Weight packing (cheap, once per call).
    w1m = w1.reshape(hidden, k1).T.astype(jnp.bfloat16)                  # (k1, hidden)
    w2m = jnp.transpose(w2, (2, 3, 1, 0)).reshape(16, hidden, hidden)\
             .astype(jnp.bfloat16)                                       # (s, cin, cout)
    wpm = wp.reshape(embed, hidden).T.astype(jnp.bfloat16)               # (hidden, embed)
    b1m = b1.reshape(1, hidden).astype(jnp.float32)
    b2m = b2.reshape(1, hidden).astype(jnp.float32)
    bpm = bp.reshape(1, embed).astype(jnp.float32)

    t_tile = _pick_token_tile(m)
    grid = (m // t_tile,)

    out = pl.pallas_call(
        _fused_patch_embed_kernel,
        out_shape=jax.ShapeDtypeStruct((m, embed), jnp.float32),
        grid_spec=pltpu.PrefetchScalarGridSpec(
            num_scalar_prefetch=0,
            grid=grid,
            in_specs=[
                pl.BlockSpec((16, t_tile, k1), lambda i: (0, i, 0)),
                # Grid-invariant operands: constant block index -> DMA'd once.
                pl.BlockSpec((k1, hidden), lambda i: (0, 0)),
                pl.BlockSpec((1, hidden), lambda i: (0, 0)),
                pl.BlockSpec((16, hidden, hidden), lambda i: (0, 0, 0)),
                pl.BlockSpec((1, hidden), lambda i: (0, 0)),
                pl.BlockSpec((hidden, embed), lambda i: (0, 0)),
                pl.BlockSpec((1, embed), lambda i: (0, 0)),
            ],
            out_specs=pl.BlockSpec((t_tile, embed), lambda i: (i, 0)),
        ),
        compiler_params=pltpu.CompilerParams(
            dimension_semantics=("parallel",)),
    )(p1, w1m, b1m, w2m, b2m, wpm, bpm)

    # flatten(2).transpose(1,2) equivalent: tokens are already in
    # (b, h2, w2) row-major order, so this reshape is free.
    return out.reshape(B, H2 * W2, embed)


def reference_forward(x, params):
    """Pure-JAX f32 reference using lax convs (NCHW / OIHW, like PyTorch)."""
    w1, b1, w2, b2, wp, bp = params
    dn = ("NCHW", "OIHW", "NCHW")
    hp = jax.lax.Precision.HIGHEST
    y = jax.lax.conv_general_dilated(x, w1, (16, 16), "VALID",
                                     dimension_numbers=dn, precision=hp)
    y = jnp.maximum(y + b1[None, :, None, None], 0.0)
    y = jax.lax.conv_general_dilated(y, w2, (4, 4), "VALID",
                                     dimension_numbers=dn, precision=hp)
    y = jnp.maximum(y + b2[None, :, None, None], 0.0)
    y = jax.lax.conv_general_dilated(y, wp, (1, 1), "VALID",
                                     dimension_numbers=dn, precision=hp)
    y = y + bp[None, :, None, None]
    B, E, H2, W2 = y.shape
    return y.reshape(B, E, H2 * W2).transpose(0, 2, 1)


def init_params(key, in_chans, hidden_dim, embed_dim):
    ks = jax.random.split(key, 6)
    w1 = jax.random.normal(ks[0], (hidden_dim, in_chans, 16, 16),
                           jnp.float32) * (1.0 / jnp.sqrt(in_chans * 256.0))
    b1 = jax.random.normal(ks[1], (hidden_dim,), jnp.float32) * 0.01
    w2 = jax.random.normal(ks[2], (hidden_dim, hidden_dim, 4, 4),
                           jnp.float32) * (1.0 / jnp.sqrt(hidden_dim * 16.0))
    b2 = jax.random.normal(ks[3], (hidden_dim,), jnp.float32) * 0.01
    wp = jax.random.normal(ks[4], (embed_dim, hidden_dim, 1, 1),
                           jnp.float32) * (1.0 / jnp.sqrt(hidden_dim * 1.0))
    bp = jax.random.normal(ks[5], (embed_dim,), jnp.float32) * 0.01
    return (w1, b1, w2, b2, wp, bp)


if __name__ == "__main__":
    # Small config consistent with the module (total stride 64 = 16*4):
    # H = W = 256 gives a 4x4 grid of 64x64 patches -> 16 patches per image.
    # hidden/embed = 128 keeps the MXU contraction and the stored output
    # lane-dense (the real module uses 1024, also lane-dense).
    B, C, H, W = 2, 1, 256, 256
    hidden_dim, embed_dim = 128, 128

    key = jax.random.PRNGKey(0)
    k_x, k_p = jax.random.split(key)
    x = jax.random.normal(k_x, (B, C, H, W), jnp.float32)
    params = init_params(k_p, C, hidden_dim, embed_dim)

    fwd = jax.jit(small_patch_embed_forward)
    out = jax.block_until_ready(fwd(x, params))

    n_patches = (H // 64) * (W // 64)
    assert out.shape == (B, n_patches, embed_dim), out.shape

    ref = jax.block_until_ready(reference_forward(x, params))
    max_err = float(jnp.max(jnp.abs(out - ref)))
    # bf16 MXU inputs with f32 accumulation -> small, bounded mismatch vs f32.
    assert jnp.allclose(out, ref, atol=3e-2, rtol=3e-2), max_err

    print("KERNEL_OK")
</pallas_src>

<mosaic_0001>
module attributes {stable_mosaic.version = 11 : i64} {
  func.func @_fused_patch_embed_kernel(%arg0: i32, %arg1: memref<16x16x256xbf16, #tpu.memory_space<vmem>>, %arg2: memref<256x128xbf16, #tpu.memory_space<vmem>>, %arg3: memref<1x128xf32, #tpu.memory_space<vmem>>, %arg4: memref<16x128x128xbf16, #tpu.memory_space<vmem>>, %arg5: memref<1x128xf32, #tpu.memory_space<vmem>>, %arg6: memref<128x128xbf16, #tpu.memory_space<vmem>>, %arg7: memref<1x128xf32, #tpu.memory_space<vmem>>, %arg8: memref<16x128xf32, #tpu.memory_space<vmem>>) attributes {dimension_semantics = [#tpu.dimension_semantics<parallel>], iteration_bounds = array<i64: 2>, scalar_prefetch = 0 : i64, scratch_operands = 0 : i64, tpu.core_type = #tpu.core_type<tc>, window_params = [{transform_indices = @transform_0, window_bounds = array<i64: 16, 16, 256>}, {pipeline_mode = #tpu.pipeline_mode<synchronous>, transform_indices = @transform_1, window_bounds = array<i64: 256, 128>}, {pipeline_mode = #tpu.pipeline_mode<synchronous>, transform_indices = @transform_2, window_bounds = array<i64: 1, 128>}, {pipeline_mode = #tpu.pipeline_mode<synchronous>, transform_indices = @transform_3, window_bounds = array<i64: 16, 128, 128>}, {pipeline_mode = #tpu.pipeline_mode<synchronous>, transform_indices = @transform_4, window_bounds = array<i64: 1, 128>}, {pipeline_mode = #tpu.pipeline_mode<synchronous>, transform_indices = @transform_5, window_bounds = array<i64: 128, 128>}, {pipeline_mode = #tpu.pipeline_mode<synchronous>, transform_indices = @transform_6, window_bounds = array<i64: 1, 128>}, {transform_indices = @transform_7, window_bounds = array<i64: 16, 128>}]} {
    %cst = arith.constant 0.000000e+00 : f32
    %0 = vector.broadcast %cst : f32 to vector<16x128xf32>
    %c0 = arith.constant 0 : index
    %c0_0 = arith.constant 0 : index
    %c0_1 = arith.constant 0 : index
    %1 = vector.load %arg1[%c0, %c0_0, %c0_1] : memref<16x16x256xbf16, #tpu.memory_space<vmem>>, vector<1x16x256xbf16>
    %2 = vector.shape_cast %1 : vector<1x16x256xbf16> to vector<16x256xbf16>
    %c0_2 = arith.constant 0 : index
    %c0_3 = arith.constant 0 : index
    %3 = vector.load %arg2[%c0_2, %c0_3] : memref<256x128xbf16, #tpu.memory_space<vmem>>, vector<256x128xbf16>
    %cst_4 = arith.constant dense<0.000000e+00> : vector<16x128xf32>
    %4 = tpu.matmul %2, %3, %cst_4 {dimension_numbers = #tpu.dot_dimension_numbers<[1], [0], [0], [1], [0, 0, 1, 1], [], []>} : vector<16x256xbf16>, vector<256x128xbf16>, vector<16x128xf32> -> vector<16x128xf32>
    %c0_5 = arith.constant 0 : index
    %c0_6 = arith.constant 0 : index
    %5 = vector.load %arg3[%c0_5, %c0_6] : memref<1x128xf32, #tpu.memory_space<vmem>>, vector<1x128xf32>
    %6 = vector.broadcast %5 : vector<1x128xf32> to vector<16x128xf32>
    %7 = arith.addf %4, %6 : vector<16x128xf32>
    %cst_7 = arith.constant 0.000000e+00 : f32
    %8 = vector.broadcast %cst_7 : f32 to vector<16x128xf32>
    %9 = arith.maximumf %7, %8 : vector<16x128xf32>
    %10 = arith.truncf %9 : vector<16x128xf32> to vector<16x128xbf16>
    %c0_8 = arith.constant 0 : index
    %c0_9 = arith.constant 0 : index
    %c0_10 = arith.constant 0 : index
    %11 = vector.load %arg4[%c0_8, %c0_9, %c0_10] : memref<16x128x128xbf16, #tpu.memory_space<vmem>>, vector<1x128x128xbf16>
    %12 = vector.shape_cast %11 : vector<1x128x128xbf16> to vector<128x128xbf16>
    %cst_11 = arith.constant dense<0.000000e+00> : vector<16x128xf32>
    %13 = tpu.matmul %10, %12, %cst_11 {dimension_numbers = #tpu.dot_dimension_numbers<[1], [0], [0], [1], [0, 0, 1, 1], [], []>} : vector<16x128xbf16>, vector<128x128xbf16>, vector<16x128xf32> -> vector<16x128xf32>
    %14 = arith.addf %0, %13 : vector<16x128xf32>
    %c1 = arith.constant 1 : index
    %c0_12 = arith.constant 0 : index
    %c0_13 = arith.constant 0 : index
    %15 = vector.load %arg1[%c1, %c0_12, %c0_13] : memref<16x16x256xbf16, #tpu.memory_space<vmem>>, vector<1x16x256xbf16>
    %16 = vector.shape_cast %15 : vector<1x16x256xbf16> to vector<16x256xbf16>
    %c0_14 = arith.constant 0 : index
    %c0_15 = arith.constant 0 : index
    %17 = vector.load %arg2[%c0_14, %c0_15] : memref<256x128xbf16, #tpu.memory_space<vmem>>, vector<256x128xbf16>
    %cst_16 = arith.constant dense<0.000000e+00> : vector<16x128xf32>
    %18 = tpu.matmul %16, %17, %cst_16 {dimension_numbers = #tpu.dot_dimension_numbers<[1], [0], [0], [1], [0, 0, 1, 1], [], []>} : vector<16x256xbf16>, vector<256x128xbf16>, vector<16x128xf32> -> vector<16x128xf32>
    %c0_17 = arith.constant 0 : index
    %c0_18 = arith.constant 0 : index
    %19 = vector.load %arg3[%c0_17, %c0_18] : memref<1x128xf32, #tpu.memory_space<vmem>>, vector<1x128xf32>
    %20 = vector.broadcast %19 : vector<1x128xf32> to vector<16x128xf32>
    %21 = arith.addf %18, %20 : vector<16x128xf32>
    %cst_19 = arith.constant 0.000000e+00 : f32
    %22 = vector.broadcast %cst_19 : f32 to vector<16x128xf32>
    %23 = arith.maximumf %21, %22 : vector<16x128xf32>
    %24 = arith.truncf %23 : vector<16x128xf32> to vector<16x128xbf16>
    %c1_20 = arith.constant 1 : index
    %c0_21 = arith.constant 0 : index
    %c0_22 = arith.constant 0 : index
    %25 = vector.load %arg4[%c1_20, %c0_21, %c0_22] : memref<16x128x128xbf16, #tpu.memory_space<vmem>>, vector<1x128x128xbf16>
    %26 = vector.shape_cast %25 : vector<1x128x128xbf16> to vector<128x128xbf16>
    %cst_23 = arith.constant dense<0.000000e+00> : vector<16x128xf32>
    %27 = tpu.matmul %24, %26, %cst_23 {dimension_numbers = #tpu.dot_dimension_numbers<[1], [0], [0], [1], [0, 0, 1, 1], [], []>} : vector<16x128xbf16>, vector<128x128xbf16>, vector<16x128xf32> -> vector<16x128xf32>
    %28 = arith.addf %14, %27 : vector<16x128xf32>
    %c2 = arith.constant 2 : index
    %c0_24 = arith.constant 0 : index
    %c0_25 = arith.constant 0 : index
    %29 = vector.load %arg1[%c2, %c0_24, %c0_25] : memref<16x16x256xbf16, #tpu.memory_space<vmem>>, vector<1x16x256xbf16>
    %30 = vector.shape_cast %29 : vector<1x16x256xbf16> to vector<16x256xbf16>
    %c0_26 = arith.constant 0 : index
    %c0_27 = arith.constant 0 : index
    %31 = vector.load %arg2[%c0_26, %c0_27] : memref<256x128xbf16, #tpu.memory_space<vmem>>, vector<256x128xbf16>
    %cst_28 = arith.constant dense<0.000000e+00> : vector<16x128xf32>
    %32 = tpu.matmul %30, %31, %cst_28 {dimension_numbers = #tpu.dot_dimension_numbers<[1], [0], [0], [1], [0, 0, 1, 1], [], []>} : vector<16x256xbf16>, vector<256x128xbf16>, vector<16x128xf32> -> vector<16x128xf32>
    %c0_29 = arith.constant 0 : index
    %c0_30 = arith.constant 0 : index
    %33 = vector.load %arg3[%c0_29, %c0_30] : memref<1x128xf32, #tpu.memory_space<vmem>>, vector<1x128xf32>
    %34 = vector.broadcast %33 : vector<1x128xf32> to vector<16x128xf32>
    %35 = arith.addf %32, %34 : vector<16x128xf32>
    %cst_31 = arith.constant 0.000000e+00 : f32
    %36 = vector.broadcast %cst_31 : f32 to vector<16x128xf32>
    %37 = arith.maximumf %35, %36 : vector<16x128xf32>
    %38 = arith.truncf %37 : vector<16x128xf32> to vector<16x128xbf16>
    %c2_32 = arith.constant 2 : index
    %c0_33 = arith.constant 0 : index
    %c0_34 = arith.constant 0 : index
    %39 = vector.load %arg4[%c2_32, %c0_33, %c0_34] : memref<16x128x128xbf16, #tpu.memory_space<vmem>>, vector<1x128x128xbf16>
    %40 = vector.shape_cast %39 : vector<1x128x128xbf16> to vector<128x128xbf16>
    %cst_35 = arith.constant dense<0.000000e+00> : vector<16x128xf32>
    %41 = tpu.matmul %38, %40, %cst_35 {dimension_numbers = #tpu.dot_dimension_numbers<[1], [0], [0], [1], [0, 0, 1, 1], [], []>} : vector<16x128xbf16>, vector<128x128xbf16>, vector<16x128xf32> -> vector<16x128xf32>
    %42 = arith.addf %28, %41 : vector<16x128xf32>
    %c3 = arith.constant 3 : index
    %c0_36 = arith.constant 0 : index
    %c0_37 = arith.constant 0 : index
    %43 = vector.load %arg1[%c3, %c0_36, %c0_37] : memref<16x16x256xbf16, #tpu.memory_space<vmem>>, vector<1x16x256xbf16>
    %44 = vector.shape_cast %43 : vector<1x16x256xbf16> to vector<16x256xbf16>
    %c0_38 = arith.constant 0 : index
    %c0_39 = arith.constant 0 : index
    %45 = vector.load %arg2[%c0_38, %c0_39] : memref<256x128xbf16, #tpu.memory_space<vmem>>, vector<256x128xbf16>
    %cst_40 = arith.constant dense<0.000000e+00> : vector<16x128xf32>
    %46 = tpu.matmul %44, %45, %cst_40 {dimension_numbers = #tpu.dot_dimension_numbers<[1], [0], [0], [1], [0, 0, 1, 1], [], []>} : vector<16x256xbf16>, vector<256x128xbf16>, vector<16x128xf32> -> vector<16x128xf32>
    %c0_41 = arith.constant 0 : index
    %c0_42 = arith.constant 0 : index
    %47 = vector.load %arg3[%c0_41, %c0_42] : memref<1x128xf32, #tpu.memory_space<vmem>>, vector<1x128xf32>
    %48 = vector.broadcast %47 : vector<1x128xf32> to vector<16x128xf32>
    %49 = arith.addf %46, %48 : vector<16x128xf32>
    %cst_43 = arith.constant 0.000000e+00 : f32
    %50 = vector.broadcast %cst_43 : f32 to vector<16x128xf32>
    %51 = arith.maximumf %49, %50 : vector<16x128xf32>
    %52 = arith.truncf %51 : vector<16x128xf32> to vector<16x128xbf16>
    %c3_44 = arith.constant 3 : index
    %c0_45 = arith.constant 0 : index
    %c0_46 = arith.constant 0 : index
    %53 = vector.load %arg4[%c3_44, %c0_45, %c0_46] : memref<16x128x128xbf16, #tpu.memory_space<vmem>>, vector<1x128x128xbf16>
    %54 = vector.shape_cast %53 : vector<1x128x128xbf16> to vector<128x128xbf16>
    %cst_47 = arith.constant dense<0.000000e+00> : vector<16x128xf32>
    %55 = tpu.matmul %52, %54, %cst_47 {dimension_numbers = #tpu.dot_dimension_numbers<[1], [0], [0], [1], [0, 0, 1, 1], [], []>} : vector<16x128xbf16>, vector<128x128xbf16>, vector<16x128xf32> -> vector<16x128xf32>
    %56 = arith.addf %42, %55 : vector<16x128xf32>
    %c4 = arith.constant 4 : index
    %c0_48 = arith.constant 0 : index
    %c0_49 = arith.constant 0 : index
    %57 = vector.load %arg1[%c4, %c0_48, %c0_49] : memref<16x16x256xbf16, #tpu.memory_space<vmem>>, vector<1x16x256xbf16>
    %58 = vector.shape_cast %57 : vector<1x16x256xbf16> to vector<16x256xbf16>
    %c0_50 = arith.constant 0 : index
    %c0_51 = arith.constant 0 : index
    %59 = vector.load %arg2[%c0_50, %c0_51] : memref<256x128xbf16, #tpu.memory_space<vmem>>, vector<256x128xbf16>
    %cst_52 = arith.constant dense<0.000000e+00> : vector<16x128xf32>
    %60 = tpu.matmul %58, %59, %cst_52 {dimension_numbers = #tpu.dot_dimension_numbers<[1], [0], [0], [1], [0, 0, 1, 1], [], []>} : vector<16x256xbf16>, vector<256x128xbf16>, vector<16x128xf32> -> vector<16x128xf32>
    %c0_53 = arith.constant 0 : index
    %c0_54 = arith.constant 0 : index
    %61 = vector.load %arg3[%c0_53, %c0_54] : memref<1x128xf32, #tpu.memory_space<vmem>>, vector<1x128xf32>
    %62 = vector.broadcast %61 : vector<1x128xf32> to vector<16x128xf32>
    %63 = arith.addf %60, %62 : vector<16x128xf32>
    %cst_55 = arith.constant 0.000000e+00 : f32
    %64 = vector.broadcast %cst_55 : f32 to vector<16x128xf32>
    %65 = arith.maximumf %63, %64 : vector<16x128xf32>
    %66 = arith.truncf %65 : vector<16x128xf32> to vector<16x128xbf16>
    %c4_56 = arith.constant 4 : index
    %c0_57 = arith.constant 0 : index
    %c0_58 = arith.constant 0 : index
    %67 = vector.load %arg4[%c4_56, %c0_57, %c0_58] : memref<16x128x128xbf16, #tpu.memory_space<vmem>>, vector<1x128x128xbf16>
    %68 = vector.shape_cast %67 : vector<1x128x128xbf16> to vector<128x128xbf16>
    %cst_59 = arith.constant dense<0.000000e+00> : vector<16x128xf32>
    %69 = tpu.matmul %66, %68, %cst_59 {dimension_numbers = #tpu.dot_dimension_numbers<[1], [0], [0], [1], [0, 0, 1, 1], [], []>} : vector<16x128xbf16>, vector<128x128xbf16>, vector<16x128xf32> -> vector<16x128xf32>
    %70 = arith.addf %56, %69 : vector<16x128xf32>
    %c5 = arith.constant 5 : index
    %c0_60 = arith.constant 0 : index
    %c0_61 = arith.constant 0 : index
    %71 = vector.load %arg1[%c5, %c0_60, %c0_61] : memref<16x16x256xbf16, #tpu.memory_space<vmem>>, vector<1x16x256xbf16>
    %72 = vector.shape_cast %71 : vector<1x16x256xbf16> to vector<16x256xbf16>
    %c0_62 = arith.constant 0 : index
    %c0_63 = arith.constant 0 : index
    %73 = vector.load %arg2[%c0_62, %c0_63] : memref<256x128xbf16, #tpu.memory_space<vmem>>, vector<256x128xbf16>
    %cst_64 = arith.constant dense<0.000000e+00> : vector<16x128xf32>
    %74 = tpu.matmul %72, %73, %cst_64 {dimension_numbers = #tpu.dot_dimension_numbers<[1], [0], [0], [1], [0, 0, 1, 1], [], []>} : vector<16x256xbf16>, vector<256x128xbf16>, vector<16x128xf32> -> vector<16x128xf32>
    %c0_65 = arith.constant 0 : index
    %c0_66 = arith.constant 0 : index
    %75 = vector.load %arg3[%c0_65, %c0_66] : memref<1x128xf32, #tpu.memory_space<vmem>>, vector<1x128xf32>
    %76 = vector.broadcast %75 : vector<1x128xf32> to vector<16x128xf32>
    %77 = arith.addf %74, %76 : vector<16x128xf32>
    %cst_67 = arith.constant 0.000000e+00 : f32
    %78 = vector.broadcast %cst_67 : f32 to vector<16x128xf32>
    %79 = arith.maximumf %77, %78 : vector<16x128xf32>
    %80 = arith.truncf %79 : vector<16x128xf32> to vector<16x128xbf16>
    %c5_68 = arith.constant 5 : index
    %c0_69 = arith.constant 0 : index
    %c0_70 = arith.constant 0 : index
    %81 = vector.load %arg4[%c5_68, %c0_69, %c0_70] : memref<16x128x128xbf16, #tpu.memory_space<vmem>>, vector<1x128x128xbf16>
    %82 = vector.shape_cast %81 : vector<1x128x128xbf16> to vector<128x128xbf16>
    %cst_71 = arith.constant dense<0.000000e+00> : vector<16x128xf32>
    %83 = tpu.matmul %80, %82, %cst_71 {dimension_numbers = #tpu.dot_dimension_numbers<[1], [0], [0], [1], [0, 0, 1, 1], [], []>} : vector<16x128xbf16>, vector<128x128xbf16>, vector<16x128xf32> -> vector<16x128xf32>
    %84 = arith.addf %70, %83 : vector<16x128xf32>
    %c6 = arith.constant 6 : index
    %c0_72 = arith.constant 0 : index
    %c0_73 = arith.constant 0 : index
    %85 = vector.load %arg1[%c6, %c0_72, %c0_73] : memref<16x16x256xbf16, #tpu.memory_space<vmem>>, vector<1x16x256xbf16>
    %86 = vector.shape_cast %85 : vector<1x16x256xbf16> to vector<16x256xbf16>
    %c0_74 = arith.constant 0 : index
    %c0_75 = arith.constant 0 : index
    %87 = vector.load %arg2[%c0_74, %c0_75] : memref<256x128xbf16, #tpu.memory_space<vmem>>, vector<256x128xbf16>
    %cst_76 = arith.constant dense<0.000000e+00> : vector<16x128xf32>
    %88 = tpu.matmul %86, %87, %cst_76 {dimension_numbers = #tpu.dot_dimension_numbers<[1], [0], [0], [1], [0, 0, 1, 1], [], []>} : vector<16x256xbf16>, vector<256x128xbf16>, vector<16x128xf32> -> vector<16x128xf32>
    %c0_77 = arith.constant 0 : index
    %c0_78 = arith.constant 0 : index
    %89 = vector.load %arg3[%c0_77, %c0_78] : memref<1x128xf32, #tpu.memory_space<vmem>>, vector<1x128xf32>
    %90 = vector.broadcast %89 : vector<1x128xf32> to vector<16x128xf32>
    %91 = arith.addf %88, %90 : vector<16x128xf32>
    %cst_79 = arith.constant 0.000000e+00 : f32
    %92 = vector.broadcast %cst_79 : f32 to vector<16x128xf32>
    %93 = arith.maximumf %91, %92 : vector<16x128xf32>
    %94 = arith.truncf %93 : vector<16x128xf32> to vector<16x128xbf16>
    %c6_80 = arith.constant 6 : index
    %c0_81 = arith.constant 0 : index
    %c0_82 = arith.constant 0 : index
    %95 = vector.load %arg4[%c6_80, %c0_81, %c0_82] : memref<16x128x128xbf16, #tpu.memory_space<vmem>>, vector<1x128x128xbf16>
    %96 = vector.shape_cast %95 : vector<1x128x128xbf16> to vector<128x128xbf16>
    %cst_83 = arith.constant dense<0.000000e+00> : vector<16x128xf32>
    %97 = tpu.matmul %94, %96, %cst_83 {dimension_numbers = #tpu.dot_dimension_numbers<[1], [0], [0], [1], [0, 0, 1, 1], [], []>} : vector<16x128xbf16>, vector<128x128xbf16>, vector<16x128xf32> -> vector<16x128xf32>
    %98 = arith.addf %84, %97 : vector<16x128xf32>
    %c7 = arith.constant 7 : index
    %c0_84 = arith.constant 0 : index
    %c0_85 = arith.constant 0 : index
    %99 = vector.load %arg1[%c7, %c0_84, %c0_85] : memref<16x16x256xbf16, #tpu.memory_space<vmem>>, vector<1x16x256xbf16>
    %100 = vector.shape_cast %99 : vector<1x16x256xbf16> to vector<16x256xbf16>
    %c0_86 = arith.constant 0 : index
    %c0_87 = arith.constant 0 : index
    %101 = vector.load %arg2[%c0_86, %c0_87] : memref<256x128xbf16, #tpu.memory_space<vmem>>, vector<256x128xbf16>
    %cst_88 = arith.constant dense<0.000000e+00> : vector<16x128xf32>
    %102 = tpu.matmul %100, %101, %cst_88 {dimension_numbers = #tpu.dot_dimension_numbers<[1], [0], [0], [1], [0, 0, 1, 1], [], []>} : vector<16x256xbf16>, vector<256x128xbf16>, vector<16x128xf32> -> vector<16x128xf32>
    %c0_89 = arith.constant 0 : index
    %c0_90 = arith.constant 0 : index
    %103 = vector.load %arg3[%c0_89, %c0_90] : memref<1x128xf32, #tpu.memory_space<vmem>>, vector<1x128xf32>
    %104 = vector.broadcast %103 : vector<1x128xf32> to vector<16x128xf32>
    %105 = arith.addf %102, %104 : vector<16x128xf32>
    %cst_91 = arith.constant 0.000000e+00 : f32
    %106 = vector.broadcast %cst_91 : f32 to vector<16x128xf32>
    %107 = arith.maximumf %105, %106 : vector<16x128xf32>
    %108 = arith.truncf %107 : vector<16x128xf32> to vector<16x128xbf16>
    %c7_92 = arith.constant 7 : index
    %c0_93 = arith.constant 0 : index
    %c0_94 = arith.constant 0 : index
    %109 = vector.load %arg4[%c7_92, %c0_93, %c0_94] : memref<16x128x128xbf16, #tpu.memory_space<vmem>>, vector<1x128x128xbf16>
    %110 = vector.shape_cast %109 : vector<1x128x128xbf16> to vector<128x128xbf16>
    %cst_95 = arith.constant dense<0.000000e+00> : vector<16x128xf32>
    %111 = tpu.matmul %108, %110, %cst_95 {dimension_numbers = #tpu.dot_dimension_numbers<[1], [0], [0], [1], [0, 0, 1, 1], [], []>} : vector<16x128xbf16>, vector<128x128xbf16>, vector<16x128xf32> -> vector<16x128xf32>
    %112 = arith.addf %98, %111 : vector<16x128xf32>
    %c8 = arith.constant 8 : index
    %c0_96 = arith.constant 0 : index
    %c0_97 = arith.constant 0 : index
    %113 = vector.load %arg1[%c8, %c0_96, %c0_97] : memref<16x16x256xbf16, #tpu.memory_space<vmem>>, vector<1x16x256xbf16>
    %114 = vector.shape_cast %113 : vector<1x16x256xbf16> to vector<16x256xbf16>
    %c0_98 = arith.constant 0 : index
    %c0_99 = arith.constant 0 : index
    %115 = vector.load %arg2[%c0_98, %c0_99] : memref<256x128xbf16, #tpu.memory_space<vmem>>, vector<256x128xbf16>
    %cst_100 = arith.constant dense<0.000000e+00> : vector<16x128xf32>
    %116 = tpu.matmul %114, %115, %cst_100 {dimension_numbers = #tpu.dot_dimension_numbers<[1], [0], [0], [1], [0, 0, 1, 1], [], []>} : vector<16x256xbf16>, vector<256x128xbf16>, vector<16x128xf32> -> vector<16x128xf32>
    %c0_101 = arith.constant 0 : index
    %c0_102 = arith.constant 0 : index
    %117 = vector.load %arg3[%c0_101, %c0_102] : memref<1x128xf32, #tpu.memory_space<vmem>>, vector<1x128xf32>
    %118 = vector.broadcast %117 : vector<1x128xf32> to vector<16x128xf32>
    %119 = arith.addf %116, %118 : vector<16x128xf32>
    %cst_103 = arith.constant 0.000000e+00 : f32
    %120 = vector.broadcast %cst_103 : f32 to vector<16x128xf32>
    %121 = arith.maximumf %119, %120 : vector<16x128xf32>
    %122 = arith.truncf %121 : vector<16x128xf32> to vector<16x128xbf16>
    %c8_104 = arith.constant 8 : index
    %c0_105 = arith.constant 0 : index
    %c0_106 = arith.constant 0 : index
    %123 = vector.load %arg4[%c8_104, %c0_105, %c0_106] : memref<16x128x128xbf16, #tpu.memory_space<vmem>>, vector<1x128x128xbf16>
    %124 = vector.shape_cast %123 : vector<1x128x128xbf16> to vector<128x128xbf16>
    %cst_107 = arith.constant dense<0.000000e+00> : vector<16x128xf32>
    %125 = tpu.matmul %122, %124, %cst_107 {dimension_numbers = #tpu.dot_dimension_numbers<[1], [0], [0], [1], [0, 0, 1, 1], [], []>} : vector<16x128xbf16>, vector<128x128xbf16>, vector<16x128xf32> -> vector<16x128xf32>
    %126 = arith.addf %112, %125 : vector<16x128xf32>
    %c9 = arith.constant 9 : index
    %c0_108 = arith.constant 0 : index
    %c0_109 = arith.constant 0 : index
    %127 = vector.load %arg1[%c9, %c0_108, %c0_109] : memref<16x16x256xbf16, #tpu.memory_space<vmem>>, vector<1x16x256xbf16>
    %128 = vector.shape_cast %127 : vector<1x16x256xbf16> to vector<16x256xbf16>
    %c0_110 = arith.constant 0 : index
    %c0_111 = arith.constant 0 : index
    %129 = vector.load %arg2[%c0_110, %c0_111] : memref<256x128xbf16, #tpu.memory_space<vmem>>, vector<256x128xbf16>
    %cst_112 = arith.constant dense<0.000000e+00> : vector<16x128xf32>
    %130 = tpu.matmul %128, %129, %cst_112 {dimension_numbers = #tpu.dot_dimension_numbers<[1], [0], [0], [1], [0, 0, 1, 1], [], []>} : vector<16x256xbf16>, vector<256x128xbf16>, vector<16x128xf32> -> vector<16x128xf32>
    %c0_113 = arith.constant 0 : index
    %c0_114 = arith.constant 0 : index
    %131 = vector.load %arg3[%c0_113, %c0_114] : memref<1x128xf32, #tpu.memory_space<vmem>>, vector<1x128xf32>
    %132 = vector.broadcast %131 : vector<1x128xf32> to vector<16x128xf32>
    %133 = arith.addf %130, %132 : vector<16x128xf32>
    %cst_115 = arith.constant 0.000000e+00 : f32
    %134 = vector.broadcast %cst_115 : f32 to vector<16x128xf32>
    %135 = arith.maximumf %133, %134 : vector<16x128xf32>
    %136 = arith.truncf %135 : vector<16x128xf32> to vector<16x128xbf16>
    %c9_116 = arith.constant 9 : index
    %c0_117 = arith.constant 0 : index
    %c0_118 = arith.constant 0 : index
    %137 = vector.load %arg4[%c9_116, %c0_117, %c0_118] : memref<16x128x128xbf16, #tpu.memory_space<vmem>>, vector<1x128x128xbf16>
    %138 = vector.shape_cast %137 : vector<1x128x128xbf16> to vector<128x128xbf16>
    %cst_119 = arith.constant dense<0.000000e+00> : vector<16x128xf32>
    %139 = tpu.matmul %136, %138, %cst_119 {dimension_numbers = #tpu.dot_dimension_numbers<[1], [0], [0], [1], [0, 0, 1, 1], [], []>} : vector<16x128xbf16>, vector<128x128xbf16>, vector<16x128xf32> -> vector<16x128xf32>
    %140 = arith.addf %126, %139 : vector<16x128xf32>
    %c10 = arith.constant 10 : index
    %c0_120 = arith.constant 0 : index
    %c0_121 = arith.constant 0 : index
    %141 = vector.load %arg1[%c10, %c0_120, %c0_121] : memref<16x16x256xbf16, #tpu.memory_space<vmem>>, vector<1x16x256xbf16>
    %142 = vector.shape_cast %141 : vector<1x16x256xbf16> to vector<16x256xbf16>
    %c0_122 = arith.constant 0 : index
    %c0_123 = arith.constant 0 : index
    %143 = vector.load %arg2[%c0_122, %c0_123] : memref<256x128xbf16, #tpu.memory_space<vmem>>, vector<256x128xbf16>
    %cst_124 = arith.constant dense<0.000000e+00> : vector<16x128xf32>
    %144 = tpu.matmul %142, %143, %cst_124 {dimension_numbers = #tpu.dot_dimension_numbers<[1], [0], [0], [1], [0, 0, 1, 1], [], []>} : vector<16x256xbf16>, vector<256x128xbf16>, vector<16x128xf32> -> vector<16x128xf32>
    %c0_125 = arith.constant 0 : index
    %c0_126 = arith.constant 0 : index
    %145 = vector.load %arg3[%c0_125, %c0_126] : memref<1x128xf32, #tpu.memory_space<vmem>>, vector<1x128xf32>
    %146 = vector.broadcast %145 : vector<1x128xf32> to vector<16x128xf32>
    %147 = arith.addf %144, %146 : vector<16x128xf32>
    %cst_127 = arith.constant 0.000000e+00 : f32
    %148 = vector.broadcast %cst_127 : f32 to vector<16x128xf32>
    %149 = arith.maximumf %147, %148 : vector<16x128xf32>
    %150 = arith.truncf %149 : vector<16x128xf32> to vector<16x128xbf16>
    %c10_128 = arith.constant 10 : index
    %c0_129 = arith.constant 0 : index
    %c0_130 = arith.constant 0 : index
    %151 = vector.load %arg4[%c10_128, %c0_129, %c0_130] : memref<16x128x128xbf16, #tpu.memory_space<vmem>>, vector<1x128x128xbf16>
    %152 = vector.shape_cast %151 : vector<1x128x128xbf16> to vector<128x128xbf16>
    %cst_131 = arith.constant dense<0.000000e+00> : vector<16x128xf32>
    %153 = tpu.matmul %150, %152, %cst_131 {dimension_numbers = #tpu.dot_dimension_numbers<[1], [0], [0], [1], [0, 0, 1, 1], [], []>} : vector<16x128xbf16>, vector<128x128xbf16>, vector<16x128xf32> -> vector<16x128xf32>
    %154 = arith.addf %140, %153 : vector<16x128xf32>
    %c11 = arith.constant 11 : index
    %c0_132 = arith.constant 0 : index
    %c0_133 = arith.constant 0 : index
    %155 = vector.load %arg1[%c11, %c0_132, %c0_133] : memref<16x16x256xbf16, #tpu.memory_space<vmem>>, vector<1x16x256xbf16>
    %156 = vector.shape_cast %155 : vector<1x16x256xbf16> to vector<16x256xbf16>
    %c0_134 = arith.constant 0 : index
    %c0_135 = arith.constant 0 : index
    %157 = vector.load %arg2[%c0_134, %c0_135] : memref<256x128xbf16, #tpu.memory_space<vmem>>, vector<256x128xbf16>
    %cst_136 = arith.constant dense<0.000000e+00> : vector<16x128xf32>
    %158 = tpu.matmul %156, %157, %cst_136 {dimension_numbers = #tpu.dot_dimension_numbers<[1], [0], [0], [1], [0, 0, 1, 1], [], []>} : vector<16x256xbf16>, vector<256x128xbf16>, vector<16x128xf32> -> vector<16x128xf32>
    %c0_137 = arith.constant 0 : index
    %c0_138 = arith.constant 0 : index
    %159 = vector.load %arg3[%c0_137, %c0_138] : memref<1x128xf32, #tpu.memory_space<vmem>>, vector<1x128xf32>
    %160 = vector.broadcast %159 : vector<1x128xf32> to vector<16x128xf32>
    %161 = arith.addf %158, %160 : vector<16x128xf32>
    %cst_139 = arith.constant 0.000000e+00 : f32
    %162 = vector.broadcast %cst_139 : f32 to vector<16x128xf32>
    %163 = arith.maximumf %161, %162 : vector<16x128xf32>
    %164 = arith.truncf %163 : vector<16x128xf32> to vector<16x128xbf16>
    %c11_140 = arith.constant 11 : index
    %c0_141 = arith.constant 0 : index
    %c0_142 = arith.constant 0 : index
    %165 = vector.load %arg4[%c11_140, %c0_141, %c0_142] : memref<16x128x128xbf16, #tpu.memory_space<vmem>>, vector<1x128x128xbf16>
    %166 = vector.shape_cast %165 : vector<1x128x128xbf16> to vector<128x128xbf16>
    %cst_143 = arith.constant dense<0.000000e+00> : vector<16x128xf32>
    %167 = tpu.matmul %164, %166, %cst_143 {dimension_numbers = #tpu.dot_dimension_numbers<[1], [0], [0], [1], [0, 0, 1, 1], [], []>} : vector<16x128xbf16>, vector<128x128xbf16>, vector<16x128xf32> -> vector<16x128xf32>
    %168 = arith.addf %154, %167 : vector<16x128xf32>
    %c12 = arith.constant 12 : index
    %c0_144 = arith.constant 0 : index
    %c0_145 = arith.constant 0 : index
    %169 = vector.load %arg1[%c12, %c0_144, %c0_145] : memref<16x16x256xbf16, #tpu.memory_space<vmem>>, vector<1x16x256xbf16>
    %170 = vector.shape_cast %169 : vector<1x16x256xbf16> to vector<16x256xbf16>
    %c0_146 = arith.constant 0 : index
    %c0_147 = arith.constant 0 : index
    %171 = vector.load %arg2[%c0_146, %c0_147] : memref<256x128xbf16, #tpu.memory_space<vmem>>, vector<256x128xbf16>
    %cst_148 = arith.constant dense<0.000000e+00> : vector<16x128xf32>
    %172 = tpu.matmul %170, %171, %cst_148 {dimension_numbers = #tpu.dot_dimension_numbers<[1], [0], [0], [1], [0, 0, 1, 1], [], []>} : vector<16x256xbf16>, vector<256x128xbf16>, vector<16x128xf32> -> vector<16x128xf32>
    %c0_149 = arith.constant 0 : index
    %c0_150 = arith.constant 0 : index
    %173 = vector.load %arg3[%c0_149, %c0_150] : memref<1x128xf32, #tpu.memory_space<vmem>>, vector<1x128xf32>
    %174 = vector.broadcast %173 : vector<1x128xf32> to vector<16x128xf32>
    %175 = arith.addf %172, %174 : vector<16x128xf32>
    %cst_151 = arith.constant 0.000000e+00 : f32
    %176 = vector.broadcast %cst_151 : f32 to vector<16x128xf32>
    %177 = arith.maximumf %175, %176 : vector<16x128xf32>
    %178 = arith.truncf %177 : vector<16x128xf32> to vector<16x128xbf16>
    %c12_152 = arith.constant 12 : index
    %c0_153 = arith.constant 0 : index
    %c0_154 = arith.constant 0 : index
    %179 = vector.load %arg4[%c12_152, %c0_153, %c0_154] : memref<16x128x128xbf16, #tpu.memory_space<vmem>>, vector<1x128x128xbf16>
    %180 = vector.shape_cast %179 : vector<1x128x128xbf16> to vector<128x128xbf16>
    %cst_155 = arith.constant dense<0.000000e+00> : vector<16x128xf32>
    %181 = tpu.matmul %178, %180, %cst_155 {dimension_numbers = #tpu.dot_dimension_numbers<[1], [0], [0], [1], [0, 0, 1, 1], [], []>} : vector<16x128xbf16>, vector<128x128xbf16>, vector<16x128xf32> -> vector<16x128xf32>
    %182 = arith.addf %168, %181 : vector<16x128xf32>
    %c13 = arith.constant 13 : index
    %c0_156 = arith.constant 0 : index
    %c0_157 = arith.constant 0 : index
    %183 = vector.load %arg1[%c13, %c0_156, %c0_157] : memref<16x16x256xbf16, #tpu.memory_space<vmem>>, vector<1x16x256xbf16>
    %184 = vector.shape_cast %183 : vector<1x16x256xbf16> to vector<16x256xbf16>
    %c0_158 = arith.constant 0 : index
    %c0_159 = arith.constant 0 : index
    %185 = vector.load %arg2[%c0_158, %c0_159] : memref<256x128xbf16, #tpu.memory_space<vmem>>, vector<256x128xbf16>
    %cst_160 = arith.constant dense<0.000000e+00> : vector<16x128xf32>
    %186 = tpu.matmul %184, %185, %cst_160 {dimension_numbers = #tpu.dot_dimension_numbers<[1], [0], [0], [1], [0, 0, 1, 1], [], []>} : vector<16x256xbf16>, vector<256x128xbf16>, vector<16x128xf32> -> vector<16x128xf32>
    %c0_161 = arith.constant 0 : index
    %c0_162 = arith.constant 0 : index
    %187 = vector.load %arg3[%c0_161, %c0_162] : memref<1x128xf32, #tpu.memory_space<vmem>>, vector<1x128xf32>
    %188 = vector.broadcast %187 : vector<1x128xf32> to vector<16x128xf32>
    %189 = arith.addf %186, %188 : vector<16x128xf32>
    %cst_163 = arith.constant 0.000000e+00 : f32
    %190 = vector.broadcast %cst_163 : f32 to vector<16x128xf32>
    %191 = arith.maximumf %189, %190 : vector<16x128xf32>
    %192 = arith.truncf %191 : vector<16x128xf32> to vector<16x128xbf16>
    %c13_164 = arith.constant 13 : index
    %c0_165 = arith.constant 0 : index
    %c0_166 = arith.constant 0 : index
    %193 = vector.load %arg4[%c13_164, %c0_165, %c0_166] : memref<16x128x128xbf16, #tpu.memory_space<vmem>>, vector<1x128x128xbf16>
    %194 = vector.shape_cast %193 : vector<1x128x128xbf16> to vector<128x128xbf16>
    %cst_167 = arith.constant dense<0.000000e+00> : vector<16x128xf32>
    %195 = tpu.matmul %192, %194, %cst_167 {dimension_numbers = #tpu.dot_dimension_numbers<[1], [0], [0], [1], [0, 0, 1, 1], [], []>} : vector<16x128xbf16>, vector<128x128xbf16>, vector<16x128xf32> -> vector<16x128xf32>
    %196 = arith.addf %182, %195 : vector<16x128xf32>
    %c14 = arith.constant 14 : index
    %c0_168 = arith.constant 0 : index
    %c0_169 = arith.constant 0 : index
    %197 = vector.load %arg1[%c14, %c0_168, %c0_169] : memref<16x16x256xbf16, #tpu.memory_space<vmem>>, vector<1x16x256xbf16>
    %198 = vector.shape_cast %197 : vector<1x16x256xbf16> to vector<16x256xbf16>
    %c0_170 = arith.constant 0 : index
    %c0_171 = arith.constant 0 : index
    %199 = vector.load %arg2[%c0_170, %c0_171] : memref<256x128xbf16, #tpu.memory_space<vmem>>, vector<256x128xbf16>
    %cst_172 = arith.constant dense<0.000000e+00> : vector<16x128xf32>
    %200 = tpu.matmul %198, %199, %cst_172 {dimension_numbers = #tpu.dot_dimension_numbers<[1], [0], [0], [1], [0, 0, 1, 1], [], []>} : vector<16x256xbf16>, vector<256x128xbf16>, vector<16x128xf32> -> vector<16x128xf32>
    %c0_173 = arith.constant 0 : index
    %c0_174 = arith.constant 0 : index
    %201 = vector.load %arg3[%c0_173, %c0_174] : memref<1x128xf32, #tpu.memory_space<vmem>>, vector<1x128xf32>
    %202 = vector.broadcast %201 : vector<1x128xf32> to vector<16x128xf32>
    %203 = arith.addf %200, %202 : vector<16x128xf32>
    %cst_175 = arith.constant 0.000000e+00 : f32
    %204 = vector.broadcast %cst_175 : f32 to vector<16x128xf32>
    %205 = arith.maximumf %203, %204 : vector<16x128xf32>
    %206 = arith.truncf %205 : vector<16x128xf32> to vector<16x128xbf16>
    %c14_176 = arith.constant 14 : index
    %c0_177 = arith.constant 0 : index
    %c0_178 = arith.constant 0 : index
    %207 = vector.load %arg4[%c14_176, %c0_177, %c0_178] : memref<16x128x128xbf16, #tpu.memory_space<vmem>>, vector<1x128x128xbf16>
    %208 = vector.shape_cast %207 : vector<1x128x128xbf16> to vector<128x128xbf16>
    %cst_179 = arith.constant dense<0.000000e+00> : vector<16x128xf32>
    %209 = tpu.matmul %206, %208, %cst_179 {dimension_numbers = #tpu.dot_dimension_numbers<[1], [0], [0], [1], [0, 0, 1, 1], [], []>} : vector<16x128xbf16>, vector<128x128xbf16>, vector<16x128xf32> -> vector<16x128xf32>
    %210 = arith.addf %196, %209 : vector<16x128xf32>
    %c15 = arith.constant 15 : index
    %c0_180 = arith.constant 0 : index
    %c0_181 = arith.constant 0 : index
    %211 = vector.load %arg1[%c15, %c0_180, %c0_181] : memref<16x16x256xbf16, #tpu.memory_space<vmem>>, vector<1x16x256xbf16>
    %212 = vector.shape_cast %211 : vector<1x16x256xbf16> to vector<16x256xbf16>
    %c0_182 = arith.constant 0 : index
    %c0_183 = arith.constant 0 : index
    %213 = vector.load %arg2[%c0_182, %c0_183] : memref<256x128xbf16, #tpu.memory_space<vmem>>, vector<256x128xbf16>
    %cst_184 = arith.constant dense<0.000000e+00> : vector<16x128xf32>
    %214 = tpu.matmul %212, %213, %cst_184 {dimension_numbers = #tpu.dot_dimension_numbers<[1], [0], [0], [1], [0, 0, 1, 1], [], []>} : vector<16x256xbf16>, vector<256x128xbf16>, vector<16x128xf32> -> vector<16x128xf32>
    %c0_185 = arith.constant 0 : index
    %c0_186 = arith.constant 0 : index
    %215 = vector.load %arg3[%c0_185, %c0_186] : memref<1x128xf32, #tpu.memory_space<vmem>>, vector<1x128xf32>
    %216 = vector.broadcast %215 : vector<1x128xf32> to vector<16x128xf32>
    %217 = arith.addf %214, %216 : vector<16x128xf32>
    %cst_187 = arith.constant 0.000000e+00 : f32
    %218 = vector.broadcast %cst_187 : f32 to vector<16x128xf32>
    %219 = arith.maximumf %217, %218 : vector<16x128xf32>
    %220 = arith.truncf %219 : vector<16x128xf32> to vector<16x128xbf16>
    %c15_188 = arith.constant 15 : index
    %c0_189 = arith.constant 0 : index
    %c0_190 = arith.constant 0 : index
    %221 = vector.load %arg4[%c15_188, %c0_189, %c0_190] : memref<16x128x128xbf16, #tpu.memory_space<vmem>>, vector<1x128x128xbf16>
    %222 = vector.shape_cast %221 : vector<1x128x128xbf16> to vector<128x128xbf16>
    %cst_191 = arith.constant dense<0.000000e+00> : vector<16x128xf32>
    %223 = tpu.matmul %220, %222, %cst_191 {dimension_numbers = #tpu.dot_dimension_numbers<[1], [0], [0], [1], [0, 0, 1, 1], [], []>} : vector<16x128xbf16>, vector<128x128xbf16>, vector<16x128xf32> -> vector<16x128xf32>
    %224 = arith.addf %210, %223 : vector<16x128xf32>
    %c0_192 = arith.constant 0 : index
    %c0_193 = arith.constant 0 : index
    %225 = vector.load %arg5[%c0_192, %c0_193] : memref<1x128xf32, #tpu.memory_space<vmem>>, vector<1x128xf32>
    %226 = vector.broadcast %225 : vector<1x128xf32> to vector<16x128xf32>
    %227 = arith.addf %224, %226 : vector<16x128xf32>
    %cst_194 = arith.constant 0.000000e+00 : f32
    %228 = vector.broadcast %cst_194 : f32 to vector<16x128xf32>
    %229 = arith.maximumf %227, %228 : vector<16x128xf32>
    %230 = arith.truncf %229 : vector<16x128xf32> to vector<16x128xbf16>
    %c0_195 = arith.constant 0 : index
    %c0_196 = arith.constant 0 : index
    %231 = vector.load %arg6[%c0_195, %c0_196] : memref<128x128xbf16, #tpu.memory_space<vmem>>, vector<128x128xbf16>
    %cst_197 = arith.constant dense<0.000000e+00> : vector<16x128xf32>
    %232 = tpu.matmul %230, %231, %cst_197 {dimension_numbers = #tpu.dot_dimension_numbers<[1], [0], [0], [1], [0, 0, 1, 1], [], []>} : vector<16x128xbf16>, vector<128x128xbf16>, vector<16x128xf32> -> vector<16x128xf32>
    %c0_198 = arith.constant 0 : index
    %c0_199 = arith.constant 0 : index
    %233 = vector.load %arg7[%c0_198, %c0_199] : memref<1x128xf32, #tpu.memory_space<vmem>>, vector<1x128xf32>
    %234 = vector.broadcast %233 : vector<1x128xf32> to vector<16x128xf32>
    %235 = arith.addf %232, %234 : vector<16x128xf32>
    %c0_200 = arith.constant 0 : index
    %c0_201 = arith.constant 0 : index
    %236 = vector.load %arg8[%c0_200, %c0_201] : memref<16x128xf32, #tpu.memory_space<vmem>>, vector<16x128xf32>
    tpu.vector_store %arg8[%c0_200, %c0_201], %235 {strides = array<i32>} : memref<16x128xf32, #tpu.memory_space<vmem>>, vector<16x128xf32>,
    return
  }
  func.func @transform_0(%arg0: i32) -> (i32, i32, i32) {
    %c0_i32 = arith.constant 0 : i32
    %c0_i32_0 = arith.constant 0 : i32
    %c0_i32_1 = arith.constant 0 : i32
    return %c0_i32, %arg0, %c0_i32_0 : i32, i32, i32
  }
  func.func @transform_1(%arg0: i32) -> (i32, i32) {
    %c0_i32 = arith.constant 0 : i32
    %c0_i32_0 = arith.constant 0 : i32
    %c0_i32_1 = arith.constant 0 : i32
    return %c0_i32, %c0_i32_0 : i32, i32
  }
  func.func @transform_2(%arg0: i32) -> (i32, i32) {
    %c0_i32 = arith.constant 0 : i32
    %c0_i32_0 = arith.constant 0 : i32
    %c0_i32_1 = arith.constant 0 : i32
    return %c0_i32, %c0_i32_0 : i32, i32
  }
  func.func @transform_3(%arg0: i32) -> (i32, i32, i32) {
    %c0_i32 = arith.constant 0 : i32
    %c0_i32_0 = arith.constant 0 : i32
    %c0_i32_1 = arith.constant 0 : i32
    %c0_i32_2 = arith.constant 0 : i32
    return %c0_i32, %c0_i32_0, %c0_i32_1 : i32, i32, i32
  }
  func.func @transform_4(%arg0: i32) -> (i32, i32) {
    %c0_i32 = arith.constant 0 : i32
    %c0_i32_0 = arith.constant 0 : i32
    %c0_i32_1 = arith.constant 0 : i32
    return %c0_i32, %c0_i32_0 : i32, i32
  }
  func.func @transform_5(%arg0: i32) -> (i32, i32) {
    %c0_i32 = arith.constant 0 : i32
    %c0_i32_0 = arith.constant 0 : i32
    %c0_i32_1 = arith.constant 0 : i32
    return %c0_i32, %c0_i32_0 : i32, i32
  }
  func.func @transform_6(%arg0: i32) -> (i32, i32) {
    %c0_i32 = arith.constant 0 : i32
    %c0_i32_0 = arith.constant 0 : i32
    %c0_i32_1 = arith.constant 0 : i32
    return %c0_i32, %c0_i32_0 : i32, i32
  }
  func.func @transform_7(%arg0: i32) -> (i32, i32) {
    %c0_i32 = arith.constant 0 : i32
    %c0_i32_0 = arith.constant 0 : i32
    return %arg0, %c0_i32 : i32, i32
  }
}

</mosaic_0001>

<llo_original>
// kernel: small_patch_embed_forward.1
$region0: #{small_patch_embed_forward.1}
  #allocation0 [shape = 'u32[]', space=smem, size = 0x4, offset = 0x4, fixed_abs, tag = 'smem constant byte address 0x4 - core index']
  #allocation1 [shape = 'u32[144,128]{1,0:T(1,128)}', space=vmem, size = 0x12000, scoped, tag = 'internal scratch']
  %s0 = inlined_call_operand.vmem [shape: bf16[16,32,256], index: 0, kind: input, shape index: {}]
  %s1 = inlined_call_operand.vmem [shape: bf16[256,128], index: 1, kind: input, shape index: {}]
  %s2 = inlined_call_operand.vmem [shape: f32[1,128], index: 2, kind: input, shape index: {}]
  %s3 = inlined_call_operand.vmem [shape: bf16[16,128,128], index: 3, kind: input, shape index: {}]
  %s4 = inlined_call_operand.vmem [shape: f32[1,128], index: 4, kind: input, shape index: {}]
  %s5 = inlined_call_operand.vmem [shape: bf16[128,128], index: 5, kind: input, shape index: {}]
  %s6 = inlined_call_operand.vmem [shape: f32[1,128], index: 6, kind: input, shape index: {}]
  %s7 = inlined_call_operand.hbm [shape: f32[32,128], index: 7, kind: output, shape index: {}]
  %s8 = sld [smem:[#allocation0]]
  $region99: #{small_patch_embed_forward.1} parent=0
    _
  %s10 = ssub.s32 1, %s8
  %s11 = scalar_select 0, %s10, %s8
  $region1: #{small_patch_embed_forward.1} parent=0
    #allocation2 [shape = 'u8[262144]{0}', space=vmem, size = 0x40000, scoped, tag = 'input window, operand 0']
    #allocation3 [shape = 'u8[16384]{0}', space=vmem, size = 0x4000, scoped, tag = 'output window, operand 0']
    #allocation4 [shape = 's32[2]{0}', space=sflag, size = 0x8, scoped, tag = 'scoped memory for small_patch_embed_forward.1']
    %12 = vsyncpa [#allocation4], 0
    %s13 = scalar_lea.sflag [#allocation4], 1
    %14 = vsyncpa %s13, 0
    loop: start=0, step=1, limit=4
    $region2: #{small_patch_embed_forward.1} parent=1 // loop_pre_header
      _
    $region3: #{small_patch_embed_forward.1} parent=1 // loop_header
      %s16 = sphi 0, %s20
      %p17 = scmp.ge.s32.totalorder %s16, 4
      %s26 = sphi 0, %s28
      %s29 = sphi 0, %s26
      %s30 = sphi 0, %s29
      %s46 = sphi 0, %s30
      %s50 = sphi 0, %s50
      %s52 = sphi 0, %s50
      %s53 = sphi 0, %s52
      %s67 = sphi 0, %s53
      %s71 = sphi 0, %s71
      %s73 = sphi 0, %s71
      %s74 = sphi 0, %s73
      %s88 = sphi 0, %s74
      %s92 = sphi 0, %s92
      %s94 = sphi 0, %s92
      %s95 = sphi 0, %s94
      %s109 = sphi 0, %s95
      %s113 = sphi 0, %s113
      %s115 = sphi 0, %s113
      %s116 = sphi 0, %s115
      %s130 = sphi 0, %s116
      %s134 = sphi 0, %s134
      %s136 = sphi 0, %s134
      %s137 = sphi 0, %s136
      %s151 = sphi 0, %s137
      %s155 = sphi 0, %s155
      %s157 = sphi 0, %s155
      %s158 = sphi 0, %s157
      %s172 = sphi 0, %s158
      %s178 = sphi 0, %s180
      %s181 = sphi 0, %s178
      %s182 = sphi 0, %s181
      %s198 = sphi 0, %s182
    $region4: #{small_patch_embed_forward.1} parent=1 // loop_header_branch
      %19 = sbr.rel (%p17) target = $region8
    $region5: #{small_patch_embed_forward.1} parent=1 // loop_body
      %s21 = ssub.s32 %s16, 1
      %s22 = ssub.s32 %s16, 2
      %s23 = sadd.s32 %s16, 1
      %s24 = ssub.s32 %s16, %s23
      %p25 = scmp.eq.s32.totalorder %s24, 0
      %s27 = sadd.s32 %s26, 1
      %s28 = scalar_select %p25, %s26, %s27
      %p31 = pneg %p25
      %p32 = scmp.eq.s32.totalorder %s16, 1
      %p33 = por %p31, %p32
      %p34 = scmp.ne.s32.totalorder %s26, %s29
      %p35 = scmp.eq.s32.totalorder %s16, 0
      %p36 = por %p34, %p35
      %p37 = scmp.ne.s32.totalorder %s26, %s29
      %p38 = scmp.eq.s32.totalorder %s21, 1
      %p39 = por %p37, %p38
      %p40 = scmp.ne.s32.totalorder %s29, %s30
      %p41 = scmp.eq.s32.totalorder %s21, 0
      %p42 = por %p40, %p41
      %p43 = scmp.ne.s32.totalorder %s29, %s30
      %p44 = scmp.eq.s32.totalorder %s22, 1
      %p45 = por %p43, %p44
      %p47 = scmp.ne.s32.totalorder %s30, %s46
      %p48 = scmp.eq.s32.totalorder %s22, 0
      %p49 = por %p47, %p48
      %s51 = sadd.s32 %s50, 1
      %p54 = scmp.eq.s32.totalorder %s16, 1
      %p55 = scmp.ne.s32.totalorder %s50, %s52
      %p56 = scmp.eq.s32.totalorder %s16, 0
      %p57 = por %p55, %p56
      %p58 = scmp.ne.s32.totalorder %s50, %s52
      %p59 = scmp.eq.s32.totalorder %s21, 1
      %p60 = por %p58, %p59
      %p61 = scmp.ne.s32.totalorder %s52, %s53
      %p62 = scmp.eq.s32.totalorder %s21, 0
      %p63 = por %p61, %p62
      %p64 = scmp.ne.s32.totalorder %s52, %s53
      %p65 = scmp.eq.s32.totalorder %s22, 1
      %p66 = por %p64, %p65
      %p68 = scmp.ne.s32.totalorder %s53, %s67
      %p69 = scmp.eq.s32.totalorder %s22, 0
      %p70 = por %p68, %p69
      %s72 = sadd.s32 %s71, 1
      %p75 = scmp.eq.s32.totalorder %s16, 1
      %p76 = scmp.ne.s32.totalorder %s71, %s73
      %p77 = scmp.eq.s32.totalorder %s16, 0
      %p78 = por %p76, %p77
      %p79 = scmp.ne.s32.totalorder %s71, %s73
      %p80 = scmp.eq.s32.totalorder %s21, 1
      %p81 = por %p79, %p80
      %p82 = scmp.ne.s32.totalorder %s73, %s74
      %p83 = scmp.eq.s32.totalorder %s21, 0
      %p84 = por %p82, %p83
      %p85 = scmp.ne.s32.totalorder %s73, %s74
      %p86 = scmp.eq.s32.totalorder %s22, 1
      %p87 = por %p85, %p86
      %p89 = scmp.ne.s32.totalorder %s74, %s88
      %p90 = scmp.eq.s32.totalorder %s22, 0
      %p91 = por %p89, %p90
      %s93 = sadd.s32 %s92, 1
      %p96 = scmp.eq.s32.totalorder %s16, 1
      %p97 = scmp.ne.s32.totalorder %s92, %s94
      %p98 = scmp.eq.s32.totalorder %s16, 0
      %p99 = por %p97, %p98
      %p100 = scmp.ne.s32.totalorder %s92, %s94
      %p101 = scmp.eq.s32.totalorder %s21, 1
      %p102 = por %p100, %p101
      %p103 = scmp.ne.s32.totalorder %s94, %s95
      %p104 = scmp.eq.s32.totalorder %s21, 0
      %p105 = por %p103, %p104
      %p106 = scmp.ne.s32.totalorder %s94, %s95
      %p107 = scmp.eq.s32.totalorder %s22, 1
      %p108 = por %p106, %p107
      %p110 = scmp.ne.s32.totalorder %s95, %s109
      %p111 = scmp.eq.s32.totalorder %s22, 0
      %p112 = por %p110, %p111
      %s114 = sadd.s32 %s113, 1
      %p117 = scmp.eq.s32.totalorder %s16, 1
      %p118 = scmp.ne.s32.totalorder %s113, %s115
      %p119 = scmp.eq.s32.totalorder %s16, 0
      %p120 = por %p118, %p119
      %p121 = scmp.ne.s32.totalorder %s113, %s115
      %p122 = scmp.eq.s32.totalorder %s21, 1
      %p123 = por %p121, %p122
      %p124 = scmp.ne.s32.totalorder %s115, %s116
      %p125 = scmp.eq.s32.totalorder %s21, 0
      %p126 = por %p124, %p125
      %p127 = scmp.ne.s32.totalorder %s115, %s116
      %p128 = scmp.eq.s32.totalorder %s22, 1
      %p129 = por %p127, %p128
      %p131 = scmp.ne.s32.totalorder %s116, %s130
      %p132 = scmp.eq.s32.totalorder %s22, 0
      %p133 = por %p131, %p132
      %s135 = sadd.s32 %s134, 1
      %p138 = scmp.eq.s32.totalorder %s16, 1
      %p139 = scmp.ne.s32.totalorder %s134, %s136
      %p140 = scmp.eq.s32.totalorder %s16, 0
      %p141 = por %p139, %p140
      %p142 = scmp.ne.s32.totalorder %s134, %s136
      %p143 = scmp.eq.s32.totalorder %s21, 1
      %p144 = por %p142, %p143
      %p145 = scmp.ne.s32.totalorder %s136, %s137
      %p146 = scmp.eq.s32.totalorder %s21, 0
      %p147 = por %p145, %p146
      %p148 = scmp.ne.s32.totalorder %s136, %s137
      %p149 = scmp.eq.s32.totalorder %s22, 1
      %p150 = por %p148, %p149
      %p152 = scmp.ne.s32.totalorder %s137, %s151
      %p153 = scmp.eq.s32.totalorder %s22, 0
      %p154 = por %p152, %p153
      %s156 = sadd.s32 %s155, 1
      %p159 = scmp.eq.s32.totalorder %s16, 1
      %p160 = scmp.ne.s32.totalorder %s155, %s157
      %p161 = scmp.eq.s32.totalorder %s16, 0
      %p162 = por %p160, %p161
      %p163 = scmp.ne.s32.totalorder %s155, %s157
      %p164 = scmp.eq.s32.totalorder %s21, 1
      %p165 = por %p163, %p164
      %p166 = scmp.ne.s32.totalorder %s157, %s158
      %p167 = scmp.eq.s32.totalorder %s21, 0
      %p168 = por %p166, %p167
      %p169 = scmp.ne.s32.totalorder %s157, %s158
      %p170 = scmp.eq.s32.totalorder %s22, 1
      %p171 = por %p169, %p170
      %p173 = scmp.ne.s32.totalorder %s158, %s172
      %p174 = scmp.eq.s32.totalorder %s22, 0
      %p175 = por %p173, %p174
      %s176 = ssub.s32 %s16, %s23
      %p177 = scmp.eq.s32.totalorder %s176, 0
      %s179 = sadd.s32 %s178, 1
      %s180 = scalar_select %p177, %s178, %s179
      %p183 = pneg %p177
      %p184 = scmp.eq.s32.totalorder %s16, 1
      %p185 = por %p183, %p184
      %p186 = scmp.ne.s32.totalorder %s178, %s181
      %p187 = scmp.eq.s32.totalorder %s16, 0
      %p188 = por %p186, %p187
      %p189 = scmp.ne.s32.totalorder %s178, %s181
      %p190 = scmp.eq.s32.totalorder %s21, 1
      %p191 = por %p189, %p190
      %p192 = scmp.ne.s32.totalorder %s181, %s182
      %p193 = scmp.eq.s32.totalorder %s21, 0
      %p194 = por %p192, %p193
      %p195 = scmp.ne.s32.totalorder %s181, %s182
      %p196 = scmp.eq.s32.totalorder %s22, 1
      %p197 = por %p195, %p196
      %p199 = scmp.ne.s32.totalorder %s182, %s198
      %p200 = scmp.eq.s32.totalorder %s22, 0
      %p201 = por %p199, %p200
      %p202 = scmp.le.s32.totalorder 1, %s16
      %p203 = scmp.lt.s32.totalorder %s16, 3
      %p204 = pnand %p202, %p203
      %p205 = pneg %p204
      // Predicated region
      $region9: #{small_patch_embed_forward.1} parent=5 // pred_check
        _
      $region10: #{small_patch_embed_forward.1} parent=5 // pred_check_branch
        %207 = sbr.rel (%p204) target = $region12
      $region11: #{small_patch_embed_forward.1} parent=5 // pred_region
        %s208 = ssub.s32 %s16, 1
        // Predicated region
        $region13: #{small_patch_embed_forward.1} parent=11 // pred_check
          %p209 = pneg %p63
        $region14: #{small_patch_embed_forward.1} parent=11 // pred_check_branch
          %211 = sbr.rel (%p209) target = $region16
        $region15: #{small_patch_embed_forward.1} parent=11 // pred_region
          _
        $region16: #{small_patch_embed_forward.1} parent=11 // pred_fallthru
          _
        // Predicated region
        $region17: #{small_patch_embed_forward.1} parent=11 // pred_check
          %p212 = pneg %p84
        $region18: #{small_patch_embed_forward.1} parent=11 // pred_check_branch
          %214 = sbr.rel (%p212) target = $region20
        $region19: #{small_patch_embed_forward.1} parent=11 // pred_region
          _
        $region20: #{small_patch_embed_forward.1} parent=11 // pred_fallthru
          _
        // Predicated region
        $region21: #{small_patch_embed_forward.1} parent=11 // pred_check
          %p215 = pneg %p105
        $region22: #{small_patch_embed_forward.1} parent=11 // pred_check_branch
          %217 = sbr.rel (%p215) target = $region24
        $region23: #{small_patch_embed_forward.1} parent=11 // pred_region
          _
        $region24: #{small_patch_embed_forward.1} parent=11 // pred_fallthru
          _
        // Predicated region
        $region25: #{small_patch_embed_forward.1} parent=11 // pred_check
          %p218 = pneg %p126
        $region26: #{small_patch_embed_forward.1} parent=11 // pred_check_branch
          %220 = sbr.rel (%p218) target = $region28
        $region27: #{small_patch_embed_forward.1} parent=11 // pred_region
          _
        $region28: #{small_patch_embed_forward.1} parent=11 // pred_fallthru
          _
        // Predicated region
        $region29: #{small_patch_embed_forward.1} parent=11 // pred_check
          %p221 = pneg %p147
        $region30: #{small_patch_embed_forward.1} parent=11 // pred_check_branch
          %223 = sbr.rel (%p221) target = $region32
        $region31: #{small_patch_embed_forward.1} parent=11 // pred_region
          _
        $region32: #{small_patch_embed_forward.1} parent=11 // pred_fallthru
          _
        // Predicated region
        $region33: #{small_patch_embed_forward.1} parent=11 // pred_check
          %p224 = pneg %p168
        $region34: #{small_patch_embed_forward.1} parent=11 // pred_check_branch
          %226 = sbr.rel (%p224) target = $region36
        $region35: #{small_patch_embed_forward.1} parent=11 // pred_region
          _
        $region36: #{small_patch_embed_forward.1} parent=11 // pred_fallthru
          _
      $region12: #{small_patch_embed_forward.1} parent=5 // pred_fallthru
        _
      %p227 = scmp.lt.s32.totalorder %s16, 2
      // Predicated region
      $region37: #{small_patch_embed_forward.1} parent=5 // pred_check
        %p228 = pneg %p227
      $region38: #{small_patch_embed_forward.1} parent=5 // pred_check_branch
        %230 = sbr.rel (%p228) target = $region40
      $region39: #{small_patch_embed_forward.1} parent=5 // pred_region
        // Predicated region
        $region41: #{small_patch_embed_forward.1} parent=39 // pred_check
          %p231 = pneg %p36
        $region42: #{small_patch_embed_forward.1} parent=39 // pred_check_branch
          %233 = sbr.rel (%p231) target = $region44
        $region43: #{small_patch_embed_forward.1} parent=39 // pred_region
          %s234 = sand.u32 %s26, 1
          %s235 = sand.u32 %s26, 1
          %s236 = smul.addr %s235, 256
          %s237 = scalar_lea.vmem [#allocation2], %s236
          %s238 = smul.u32 2, %s16
          %s239 = smul.addr %s238, 2
          %s240 = smul.addr %s239, 4
          %s241 = scalar_lea.vmem %s0, %s240
          // Predicated region
          $region45: #{small_patch_embed_forward.1} parent=43 // pred_check
            _
          $region46: #{small_patch_embed_forward.1} parent=43 // pred_check_branch
            %243 = sbr.rel (0) target = $region48
          $region47: #{small_patch_embed_forward.1} parent=43 // pred_region
            // Predicated region
            $region49: #{small_patch_embed_forward.1} parent=47 // pred_check
              _
            $region50: #{small_patch_embed_forward.1} parent=47 // pred_check_branch
              %245 = sbr.rel (0) target = $region52
            $region51: #{small_patch_embed_forward.1} parent=47 // pred_region
              // Predicated region
              $region64: #{small_patch_embed_forward.1} parent=51 // pred_check
                _
              $region65: #{small_patch_embed_forward.1} parent=51 // pred_check_branch
                %322 = sbr.rel (0) target = $region67
              $region66: #{small_patch_embed_forward.1} parent=51 // pred_region
                loop: start=0, step=1, limit=1
                $region68: #{small_patch_embed_forward.1} parent=66 // loop_pre_header
                  _
                $region69: #{small_patch_embed_forward.1} parent=66 // loop_header
                  %s324 = sphi 0, %s328
                  %p325 = scmp.ge.s32.totalorder %s324, 1
                  %s329 = sphi %s241, %s241
                  %s330 = sphi %s237, %s237
                $region70: #{small_patch_embed_forward.1} parent=66 // loop_header_branch
                  %327 = sbr.rel (%p325) target = $region74
                $region71: #{small_patch_embed_forward.1} parent=66 // loop_body
                  %v331 = vld [vmem:[%s329] sm:$0xff]
                  %332 = vst [vmem:[%s330] sm:$0xff] %v331
                  %v333 = vld [vmem:[%s329 + $0x8] sm:$0xff]
                  %334 = vst [vmem:[%s330 + $0x8] sm:$0xff] %v333
                  %v335 = vld [vmem:[%s329 + $0x20] sm:$0xff]
                  %336 = vst [vmem:[%s330 + $0x10] sm:$0xff] %v335
                  %v337 = vld [vmem:[%s329 + $0x28] sm:$0xff]
                  %338 = vst [vmem:[%s330 + $0x18] sm:$0xff] %v337
                  %v339 = vld [vmem:[%s329 + $0x40] sm:$0xff]
                  %340 = vst [vmem:[%s330 + $0x20] sm:$0xff] %v339
                  %v341 = vld [vmem:[%s329 + $0x48] sm:$0xff]
                  %342 = vst [vmem:[%s330 + $0x28] sm:$0xff] %v341
                  %v343 = vld [vmem:[%s329 + $0x60] sm:$0xff]
                  %344 = vst [vmem:[%s330 + $0x30] sm:$0xff] %v343
                  %v345 = vld [vmem:[%s329 + $0x68] sm:$0xff]
                  %346 = vst [vmem:[%s330 + $0x38] sm:$0xff] %v345
                  %v347 = vld [vmem:[%s329 + $0x80] sm:$0xff]
                  %348 = vst [vmem:[%s330 + $0x40] sm:$0xff] %v347
                  %v349 = vld [vmem:[%s329 + $0x88] sm:$0xff]
                  %350 = vst [vmem:[%s330 + $0x48] sm:$0xff] %v349
                  %v351 = vld [vmem:[%s329 + $0xa0] sm:$0xff]
                  %352 = vst [vmem:[%s330 + $0x50] sm:$0xff] %v351
                  %v353 = vld [vmem:[%s329 + $0xa8] sm:$0xff]
                  %354 = vst [vmem:[%s330 + $0x58] sm:$0xff] %v353
                  %v355 = vld [vmem:[%s329 + $0xc0] sm:$0xff]
                  %356 = vst [vmem:[%s330 + $0x60] sm:$0xff] %v355
                  %v357 = vld [vmem:[%s329 + $0xc8] sm:$0xff]
                  %358 = vst [vmem:[%s330 + $0x68] sm:$0xff] %v357
                  %v359 = vld [vmem:[%s329 + $0xe0] sm:$0xff]
                  %360 = vst [vmem:[%s330 + $0x70] sm:$0xff] %v359
                  %v361 = vld [vmem:[%s329 + $0xe8] sm:$0xff]
                  %362 = vst [vmem:[%s330 + $0x78] sm:$0xff] %v361
                  %v363 = vld [vmem:[%s329 + $0x100] sm:$0xff]
                  %364 = vst [vmem:[%s330 + $0x80] sm:$0xff] %v363
                  %v365 = vld [vmem:[%s329 + $0x108] sm:$0xff]
                  %366 = vst [vmem:[%s330 + $0x88] sm:$0xff] %v365
                  %v367 = vld [vmem:[%s329 + $0x120] sm:$0xff]
                  %368 = vst [vmem:[%s330 + $0x90] sm:$0xff] %v367
                  %v369 = vld [vmem:[%s329 + $0x128] sm:$0xff]
                  %370 = vst [vmem:[%s330 + $0x98] sm:$0xff] %v369
                  %v371 = vld [vmem:[%s329 + $0x140] sm:$0xff]
                  %372 = vst [vmem:[%s330 + $0xa0] sm:$0xff] %v371
                  %v373 = vld [vmem:[%s329 + $0x148] sm:$0xff]
                  %374 = vst [vmem:[%s330 + $0xa8] sm:$0xff] %v373
                  %v375 = vld [vmem:[%s329 + $0x160] sm:$0xff]
                  %376 = vst [vmem:[%s330 + $0xb0] sm:$0xff] %v375
                  %v377 = vld [vmem:[%s329 + $0x168] sm:$0xff]
                  %378 = vst [vmem:[%s330 + $0xb8] sm:$0xff] %v377
                  %v379 = vld [vmem:[%s329 + $0x180] sm:$0xff]
                  %380 = vst [vmem:[%s330 + $0xc0] sm:$0xff] %v379
                  %v381 = vld [vmem:[%s329 + $0x188] sm:$0xff]
                  %382 = vst [vmem:[%s330 + $0xc8] sm:$0xff] %v381
                  %v383 = vld [vmem:[%s329 + $0x1a0] sm:$0xff]
                  %384 = vst [vmem:[%s330 + $0xd0] sm:$0xff] %v383
                  %v385 = vld [vmem:[%s329 + $0x1a8] sm:$0xff]
                  %386 = vst [vmem:[%s330 + $0xd8] sm:$0xff] %v385
                  %v387 = vld [vmem:[%s329 + $0x1c0] sm:$0xff]
                  %388 = vst [vmem:[%s330 + $0xe0] sm:$0xff] %v387
                  %v389 = vld [vmem:[%s329 + $0x1c8] sm:$0xff]
                  %390 = vst [vmem:[%s330 + $0xe8] sm:$0xff] %v389
                  %v391 = vld [vmem:[%s329 + $0x1e0] sm:$0xff]
                  %392 = vst [vmem:[%s330 + $0xf0] sm:$0xff] %v391
                  %v393 = vld [vmem:[%s329 + $0x1e8] sm:$0xff]
                  %394 = vst [vmem:[%s330 + $0xf8] sm:$0xff] %v393
                $region72: #{small_patch_embed_forward.1} parent=66 // loop_footer
                  %s328 = sadd.s32 1, %s324
                $region73: #{small_patch_embed_forward.1} parent=66 // loop_footer_branch
                  %323 = sbr.rel target = $region69
                $region74: #{small_patch_embed_forward.1} parent=66 // loop_exit
                  _
              $region67: #{small_patch_embed_forward.1} parent=51 // pred_fallthru
                _
              // Predicated region
              $region75: #{small_patch_embed_forward.1} parent=51 // pred_check
                _
              $region76: #{small_patch_embed_forward.1} parent=51 // pred_check_branch
                %396 = sbr.rel target = $region78
              $region77: #{small_patch_embed_forward.1} parent=51 // pred_region
                _
              $region78: #{small_patch_embed_forward.1} parent=51 // pred_fallthru
                _
            $region52: #{small_patch_embed_forward.1} parent=47 // pred_fallthru
              _
            // Predicated region
            $region53: #{small_patch_embed_forward.1} parent=47 // pred_check
              _
            $region54: #{small_patch_embed_forward.1} parent=47 // pred_check_branch
              %247 = sbr.rel target = $region56
            $region55: #{small_patch_embed_forward.1} parent=47 // pred_region
              loop: start=0, step=1, limit=1
              $region57: #{small_patch_embed_forward.1} parent=55 // loop_pre_header
                _
              $region58: #{small_patch_embed_forward.1} parent=55 // loop_header
                %s250 = sphi 0, %s254
                %p251 = scmp.ge.s32.totalorder %s250, 1
                %s255 = sphi %s241, %s241
                %s256 = sphi %s237, %s237
              $region59: #{small_patch_embed_forward.1} parent=55 // loop_header_branch
                %253 = sbr.rel (%p251) target = $region63
              $region60: #{small_patch_embed_forward.1} parent=55 // loop_body
                %v257 = vld [vmem:[%s255] sm:$0xff]
                %258 = vst [vmem:[%s256] sm:$0xff] %v257
                %v259 = vld [vmem:[%s255 + $0x8] sm:$0xff]
                %260 = vst [vmem:[%s256 + $0x8] sm:$0xff] %v259
                %v261 = vld [vmem:[%s255 + $0x20] sm:$0xff]
                %262 = vst [vmem:[%s256 + $0x10] sm:$0xff] %v261
                %v263 = vld [vmem:[%s255 + $0x28] sm:$0xff]
                %264 = vst [vmem:[%s256 + $0x18] sm:$0xff] %v263
                %v265 = vld [vmem:[%s255 + $0x40] sm:$0xff]
                %266 = vst [vmem:[%s256 + $0x20] sm:$0xff] %v265
                %v267 = vld [vmem:[%s255 + $0x48] sm:$0xff]
                %268 = vst [vmem:[%s256 + $0x28] sm:$0xff] %v267
                %v269 = vld [vmem:[%s255 + $0x60] sm:$0xff]
                %270 = vst [vmem:[%s256 + $0x30] sm:$0xff] %v269
                %v271 = vld [vmem:[%s255 + $0x68] sm:$0xff]
                %272 = vst [vmem:[%s256 + $0x38] sm:$0xff] %v271
                %v273 = vld [vmem:[%s255 + $0x80] sm:$0xff]
                %274 = vst [vmem:[%s256 + $0x40] sm:$0xff] %v273
                %v275 = vld [vmem:[%s255 + $0x88] sm:$0xff]
                %276 = vst [vmem:[%s256 + $0x48] sm:$0xff] %v275
                %v277 = vld [vmem:[%s255 + $0xa0] sm:$0xff]
                %278 = vst [vmem:[%s256 + $0x50] sm:$0xff] %v277
                %v279 = vld [vmem:[%s255 + $0xa8] sm:$0xff]
                %280 = vst [vmem:[%s256 + $0x58] sm:$0xff] %v279
                %v281 = vld [vmem:[%s255 + $0xc0] sm:$0xff]
                %282 = vst [vmem:[%s256 + $0x60] sm:$0xff] %v281
                %v283 = vld [vmem:[%s255 + $0xc8] sm:$0xff]
                %284 = vst [vmem:[%s256 + $0x68] sm:$0xff] %v283
                %v285 = vld [vmem:[%s255 + $0xe0] sm:$0xff]
                %286 = vst [vmem:[%s256 + $0x70] sm:$0xff] %v285
                %v287 = vld [vmem:[%s255 + $0xe8] sm:$0xff]
                %288 = vst [vmem:[%s256 + $0x78] sm:$0xff] %v287
                %v289 = vld [vmem:[%s255 + $0x100] sm:$0xff]
                %290 = vst [vmem:[%s256 + $0x80] sm:$0xff] %v289
                %v291 = vld [vmem:[%s255 + $0x108] sm:$0xff]
                %292 = vst [vmem:[%s256 + $0x88] sm:$0xff] %v291
                %v293 = vld [vmem:[%s255 + $0x120] sm:$0xff]
                %294 = vst [vmem:[%s256 + $0x90] sm:$0xff] %v293
                %v295 = vld [vmem:[%s255 + $0x128] sm:$0xff]
                %296 = vst [vmem:[%s256 + $0x98] sm:$0xff] %v295
                %v297 = vld [vmem:[%s255 + $0x140] sm:$0xff]
                %298 = vst [vmem:[%s256 + $0xa0] sm:$0xff] %v297
                %v299 = vld [vmem:[%s255 + $0x148] sm:$0xff]
                %300 = vst [vmem:[%s256 + $0xa8] sm:$0xff] %v299
                %v301 = vld [vmem:[%s255 + $0x160] sm:$0xff]
                %302 = vst [vmem:[%s256 + $0xb0] sm:$0xff] %v301
                %v303 = vld [vmem:[%s255 + $0x168] sm:$0xff]
                %304 = vst [vmem:[%s256 + $0xb8] sm:$0xff] %v303
                %v305 = vld [vmem:[%s255 + $0x180] sm:$0xff]
                %306 = vst [vmem:[%s256 + $0xc0] sm:$0xff] %v305
                %v307 = vld [vmem:[%s255 + $0x188] sm:$0xff]
                %308 = vst [vmem:[%s256 + $0xc8] sm:$0xff] %v307
                %v309 = vld [vmem:[%s255 + $0x1a0] sm:$0xff]
                %310 = vst [vmem:[%s256 + $0xd0] sm:$0xff] %v309
                %v311 = vld [vmem:[%s255 + $0x1a8] sm:$0xff]
                %312 = vst [vmem:[%s256 + $0xd8] sm:$0xff] %v311
                %v313 = vld [vmem:[%s255 + $0x1c0] sm:$0xff]
                %314 = vst [vmem:[%s256 + $0xe0] sm:$0xff] %v313
                %v315 = vld [vmem:[%s255 + $0x1c8] sm:$0xff]
                %316 = vst [vmem:[%s256 + $0xe8] sm:$0xff] %v315
                %v317 = vld [vmem:[%s255 + $0x1e0] sm:$0xff]
                %318 = vst [vmem:[%s256 + $0xf0] sm:$0xff] %v317
                %v319 = vld [vmem:[%s255 + $0x1e8] sm:$0xff]
                %320 = vst [vmem:[%s256 + $0xf8] sm:$0xff] %v319
              $region61: #{small_patch_embed_forward.1} parent=55 // loop_footer
                %s254 = sadd.s32 1, %s250
              $region62: #{small_patch_embed_forward.1} parent=55 // loop_footer_branch
                %249 = sbr.rel target = $region58
              $region63: #{small_patch_embed_forward.1} parent=55 // loop_exit
                _
            $region56: #{small_patch_embed_forward.1} parent=47 // pred_fallthru
              _
          $region48: #{small_patch_embed_forward.1} parent=43 // pred_fallthru
            _
          %397 = vnop
        $region44: #{small_patch_embed_forward.1} parent=39 // pred_fallthru
          _
      $region40: #{small_patch_embed_forward.1} parent=5 // pred_fallthru
        _
      %p398 = scmp.le.s32.totalorder 1, %s16
      %p399 = scmp.lt.s32.totalorder %s16, 3
      %p400 = pnand %p398, %p399
      %p401 = pneg %p400
      // Predicated region
      $region79: #{small_patch_embed_forward.1} parent=5 // pred_check
        _
      $region80: #{small_patch_embed_forward.1} parent=5 // pred_check_branch
        %403 = sbr.rel (%p400) target = $region82
      $region81: #{small_patch_embed_forward.1} parent=5 // pred_region
        %s404 = ssub.s32 %s16, 1
        %s405 = sand.u32 %s29, 1
        %s406 = sand.u32 %s29, 1
        %s407 = smul.addr %s406, 256
        %s408 = scalar_lea.vmem [#allocation2], %s407
        // Predicated region
        $region83: #{small_patch_embed_forward.1} parent=81 // pred_check
          %p409 = pneg %p42
        $region84: #{small_patch_embed_forward.1} parent=81 // pred_check_branch
          %411 = sbr.rel (%p409) target = $region86
        $region85: #{small_patch_embed_forward.1} parent=81 // pred_region
          _
        $region86: #{small_patch_embed_forward.1} parent=81 // pred_fallthru
          _
        %s412 = sand.u32 %s29, 1
        %s413 = sand.u32 %s29, 1
        %s414 = smul.addr %s413, 256
        %s415 = scalar_lea.vmem [#allocation2], %s414
        %p416 = pneg %p42
        %p417 = pneg %p39
        %p418 = pneg %p63
        %p419 = pneg %p60
        %p420 = pneg %p84
        %p421 = pneg %p81
        %p422 = pneg %p105
        %p423 = pneg %p102
        %p424 = pneg %p126
        %p425 = pneg %p123
        %p426 = pneg %p147
        %p427 = pneg %p144
        %p428 = pneg %p168
        %p429 = pneg %p165
        %p430 = pneg %p194
        %p431 = pneg %p191
        %s432 = sand.u32 %s181, 1
        %s433 = scalar_lea.sflag [#allocation4], %s432
        %s434 = sand.u32 %s181, 1
        %s435 = smul.addr %s434, 16
        %s436 = scalar_lea.vmem [#allocation3], %s435
        %s437 = smul.u32 2, %s21
        %s438 = smul.u32 2, %s21
        %v440 = vld [vmem:[%s408] sm:$0xff]
        %v441 = vld [vmem:[%s408 + $0x8] sm:$0xff]
        %v442 = vld [vmem:[%s1] sm:$0xf]
        %v443 = vld [vmem:[%s1 + $0x4] sm:$0xf]
        %v444 = vld [vmem:[%s1 + $0x8] sm:$0xf]
        %v445 = vld [vmem:[%s1 + $0xc] sm:$0xf]
        %v446 = vld [vmem:[%s1 + $0x10] sm:$0xf]
        %v447 = vld [vmem:[%s1 + $0x14] sm:$0xf]
        %v448 = vld [vmem:[%s1 + $0x18] sm:$0xf]
        %v449 = vld [vmem:[%s1 + $0x1c] sm:$0xf]
        %v450 = vld [vmem:[%s1 + $0x20] sm:$0xf]
        %v451 = vld [vmem:[%s1 + $0x24] sm:$0xf]
        %v452 = vld [vmem:[%s1 + $0x28] sm:$0xf]
        %v453 = vld [vmem:[%s1 + $0x2c] sm:$0xf]
        %v454 = vld [vmem:[%s1 + $0x30] sm:$0xf]
        %v455 = vld [vmem:[%s1 + $0x34] sm:$0xf]
        %v456 = vld [vmem:[%s1 + $0x38] sm:$0xf]
        %v457 = vld [vmem:[%s1 + $0x3c] sm:$0xf]
        %v458 = vld [vmem:[%s1 + $0x40] sm:$0xf]
        %v459 = vld [vmem:[%s1 + $0x44] sm:$0xf]
        %v460 = vld [vmem:[%s1 + $0x48] sm:$0xf]
        %v461 = vld [vmem:[%s1 + $0x4c] sm:$0xf]
        %v462 = vld [vmem:[%s1 + $0x50] sm:$0xf]
        %v463 = vld [vmem:[%s1 + $0x54] sm:$0xf]
        %v464 = vld [vmem:[%s1 + $0x58] sm:$0xf]
        %v465 = vld [vmem:[%s1 + $0x5c] sm:$0xf]
        %v466 = vld [vmem:[%s1 + $0x60] sm:$0xf]
        %v467 = vld [vmem:[%s1 + $0x64] sm:$0xf]
        %v468 = vld [vmem:[%s1 + $0x68] sm:$0xf]
        %v469 = vld [vmem:[%s1 + $0x6c] sm:$0xf]
        %v470 = vld [vmem:[%s1 + $0x70] sm:$0xf]
        %v471 = vld [vmem:[%s1 + $0x74] sm:$0xf]
        %v472 = vld [vmem:[%s1 + $0x78] sm:$0xf]
        %v473 = vld [vmem:[%s1 + $0x7c] sm:$0xf]
        %v474 = vld [vmem:[%s2] sm:$0x1]
        %v476 = vlaneseq
        %v477 = vshrl.u32 %v476, 7
        %v478 = vsub.s32 0, %v477
        %v479 = vrot.slane %v474, %v478
        %v483 = vunpack.c.l.b16 %v440
        %v484 = vunpack.c.h.b16 %v440
        %v485 = vunpack.c.l.b16 %v441
        %v486 = vunpack.c.h.b16 %v441
        %v487 = vpack.c.b16 %v485, %v483
        %v488 = vpack.c.b16 %v486, %v484
        %v523 = vunpack.c.l.b16 %v442
        %v524 = vunpack.c.l.b16 %v443
        %v525 = vunpack.c.l.b16 %v444
        %v526 = vunpack.c.l.b16 %v445
        %v527 = vunpack.c.l.b16 %v446
        %v528 = vunpack.c.l.b16 %v447
        %v529 = vunpack.c.l.b16 %v448
        %v530 = vunpack.c.l.b16 %v449
        %v531 = vunpack.c.l.b16 %v450
        %v532 = vunpack.c.l.b16 %v451
        %v533 = vunpack.c.l.b16 %v452
        %v534 = vunpack.c.l.b16 %v453
        %v535 = vunpack.c.l.b16 %v454
        %v536 = vunpack.c.l.b16 %v455
        %v537 = vunpack.c.l.b16 %v456
        %v538 = vunpack.c.l.b16 %v457
        %v539 = vunpack.c.l.b16 %v458
        %v540 = vunpack.c.l.b16 %v459
        %v541 = vunpack.c.l.b16 %v460
        %v542 = vunpack.c.l.b16 %v461
        %v543 = vunpack.c.l.b16 %v462
        %v544 = vunpack.c.l.b16 %v463
        %v545 = vunpack.c.l.b16 %v464
        %v546 = vunpack.c.l.b16 %v465
        %v547 = vunpack.c.l.b16 %v466
        %v548 = vunpack.c.l.b16 %v467
        %v549 = vunpack.c.l.b16 %v468
        %v550 = vunpack.c.l.b16 %v469
        %v551 = vunpack.c.l.b16 %v470
        %v552 = vunpack.c.l.b16 %v471
        %v553 = vunpack.c.l.b16 %v472
        %v554 = vunpack.c.l.b16 %v473
        %v555 = vpack.c.b16 %v524, %v523
        %v556 = vpack.c.b16 %v526, %v525
        %v557 = vpack.c.b16 %v528, %v527
        %v558 = vpack.c.b16 %v530, %v529
        %v559 = vpack.c.b16 %v532, %v531
        %v560 = vpack.c.b16 %v534, %v533
        %v561 = vpack.c.b16 %v536, %v535
        %v562 = vpack.c.b16 %v538, %v537
        %v563 = vpack.c.b16 %v540, %v539
        %v564 = vpack.c.b16 %v542, %v541
        %v565 = vpack.c.b16 %v544, %v543
        %v566 = vpack.c.b16 %v546, %v545
        %v567 = vpack.c.b16 %v548, %v547
        %v568 = vpack.c.b16 %v550, %v549
        %v569 = vpack.c.b16 %v552, %v551
        %v570 = vpack.c.b16 %v554, %v553
        %587 = vmatprep.subr.bf16.mxu0 0
        %588 = vmatpush1.bf16.msra.mxu0 %v555
        %589 = vmatprep.subr.bf16.mxu0 0
        %590 = vmatpush1.bf16.msra.mxu0 %v556
        %591 = vmatprep.subr.bf16.mxu0 0
        %592 = vmatpush1.bf16.msra.mxu0 %v557
        %593 = vmatprep.subr.bf16.mxu0 0
        %594 = vmatpush1.bf16.msra.mxu0 %v558
        %595 = vmatprep.subr.bf16.mxu0 0
        %596 = vmatpush1.bf16.msra.mxu0 %v559
        %597 = vmatprep.subr.bf16.mxu0 0
        %598 = vmatpush1.bf16.msra.mxu0 %v560
        %599 = vmatprep.subr.bf16.mxu0 0
        %600 = vmatpush1.bf16.msra.mxu0 %v561
        %601 = vmatprep.subr.bf16.mxu0 0
        %602 = vmatpush1.bf16.msra.mxu0 %v562
        %603 = vmatprep.subr.bf16.mxu0 0
        %604 = vmatpush1.bf16.msra.mxu0 %v563
        %605 = vmatprep.subr.bf16.mxu0 0
        %606 = vmatpush1.bf16.msra.mxu0 %v564
        %607 = vmatprep.subr.bf16.mxu0 0
        %608 = vmatpush1.bf16.msra.mxu0 %v565
        %609 = vmatprep.subr.bf16.mxu0 0
        %610 = vmatpush1.bf16.msra.mxu0 %v566
        %611 = vmatprep.subr.bf16.mxu0 0
        %612 = vmatpush1.bf16.msra.mxu0 %v567
        %613 = vmatprep.subr.bf16.mxu0 0
        %614 = vmatpush1.bf16.msra.mxu0 %v568
        %615 = vmatprep.subr.bf16.mxu0 0
        %616 = vmatpush1.bf16.msra.mxu0 %v569
        %617 = vmatprep.subr.bf16.mxu0 0
        %618 = vmatpush1.bf16.msra.mxu0 %v570
        %619 = vmatprep.mubr.bf16.mxu0 %v488
        %620 = vmatmul.mubr.bf16.gmra.mrb[0].mxu0 %v487
        %v621 = vpop.f32.mrb[0].mxu0
        %v622 = vadd.f32 %v479, %v621
        %v623 = vpop.f32.mrb[0].mxu0
        %v624 = vpop.f32.mrb[0].mxu0
        %v625 = vadd.f32 %v479, %v624
        %v626 = vpop.f32.mrb[0].mxu0
        %627 = vdwg.mxu0
        %v628 = vmax.f32 %v622, 0.0
        %v629 = vmax.f32 %v625, 0.0
        %v630 = vpack.c.bf16 %v629, %v628
        %v631 = vld [vmem:[%s3] sm:$0xf]
        %v632 = vld [vmem:[%s3 + $0x4] sm:$0xf]
        %v633 = vld [vmem:[%s3 + $0x8] sm:$0xf]
        %v634 = vld [vmem:[%s3 + $0xc] sm:$0xf]
        %v635 = vld [vmem:[%s3 + $0x10] sm:$0xf]
        %v636 = vld [vmem:[%s3 + $0x14] sm:$0xf]
        %v637 = vld [vmem:[%s3 + $0x18] sm:$0xf]
        %v638 = vld [vmem:[%s3 + $0x1c] sm:$0xf]
        %v639 = vld [vmem:[%s3 + $0x20] sm:$0xf]
        %v640 = vld [vmem:[%s3 + $0x24] sm:$0xf]
        %v641 = vld [vmem:[%s3 + $0x28] sm:$0xf]
        %v642 = vld [vmem:[%s3 + $0x2c] sm:$0xf]
        %v643 = vld [vmem:[%s3 + $0x30] sm:$0xf]
        %v644 = vld [vmem:[%s3 + $0x34] sm:$0xf]
        %v645 = vld [vmem:[%s3 + $0x38] sm:$0xf]
        %v646 = vld [vmem:[%s3 + $0x3c] sm:$0xf]
        %s647 = scalar_lea.vmem %s408, 16 [#allocation2]
        %v648 = vld [vmem:[%s647] sm:$0xff]
        %v649 = vld [vmem:[%s647 + $0x8] sm:$0xff]
        %v652 = vunpack.c.l.b16 %v648
        %v653 = vunpack.c.h.b16 %v648
        %v654 = vunpack.c.l.b16 %v649
        %v655 = vunpack.c.h.b16 %v649
        %v656 = vpack.c.b16 %v654, %v652
        %v657 = vpack.c.b16 %v655, %v653
        %660 = vmatprep.subr.bf16.mxu0 0
        %661 = vmatpush1.bf16.msra.mxu0 %v555
        %662 = vmatprep.subr.bf16.mxu0 0
        %663 = vmatpush1.bf16.msra.mxu0 %v556
        %664 = vmatprep.subr.bf16.mxu0 0
        %665 = vmatpush1.bf16.msra.mxu0 %v557
        %666 = vmatprep.subr.bf16.mxu0 0
        %667 = vmatpush1.bf16.msra.mxu0 %v558
        %668 = vmatprep.subr.bf16.mxu0 0
        %669 = vmatpush1.bf16.msra.mxu0 %v559
        %670 = vmatprep.subr.bf16.mxu0 0
        %671 = vmatpush1.bf16.msra.mxu0 %v560
        %672 = vmatprep.subr.bf16.mxu0 0
        %673 = vmatpush1.bf16.msra.mxu0 %v561
        %674 = vmatprep.subr.bf16.mxu0 0
        %675 = vmatpush1.bf16.msra.mxu0 %v562
        %676 = vmatprep.subr.bf16.mxu0 0
        %677 = vmatpush1.bf16.msra.mxu0 %v563
        %678 = vmatprep.subr.bf16.mxu0 0
        %679 = vmatpush1.bf16.msra.mxu0 %v564
        %680 = vmatprep.subr.bf16.mxu0 0
        %681 = vmatpush1.bf16.msra.mxu0 %v565
        %682 = vmatprep.subr.bf16.mxu0 0
        %683 = vmatpush1.bf16.msra.mxu0 %v566
        %684 = vmatprep.subr.bf16.mxu0 0
        %685 = vmatpush1.bf16.msra.mxu0 %v567
        %686 = vmatprep.subr.bf16.mxu0 0
        %687 = vmatpush1.bf16.msra.mxu0 %v568
        %688 = vmatprep.subr.bf16.mxu0 0
        %689 = vmatpush1.bf16.msra.mxu0 %v569
        %690 = vmatprep.subr.bf16.mxu0 0
        %691 = vmatpush1.bf16.msra.mxu0 %v570
        %692 = vmatprep.mubr.bf16.mxu0 %v657
        %693 = vmatmul.mubr.bf16.gmra.mrb[0].mxu0 %v656
        %v694 = vpop.f32.mrb[0].mxu0
        %v695 = vadd.f32 %v479, %v694
        %v696 = vpop.f32.mrb[0].mxu0
        %v697 = vpop.f32.mrb[0].mxu0
        %v698 = vadd.f32 %v479, %v697
        %v699 = vpop.f32.mrb[0].mxu0
        %700 = vdwg.mxu0
        %v701 = vmax.f32 %v695, 0.0
        %v702 = vmax.f32 %v698, 0.0
        %v703 = vpack.c.bf16 %v702, %v701
        %s704 = scalar_lea.vmem %s3, 64
        %v705 = vld [vmem:[%s704] sm:$0xf]
        %v706 = vld [vmem:[%s704 + $0x4] sm:$0xf]
        %v707 = vld [vmem:[%s704 + $0x8] sm:$0xf]
        %v708 = vld [vmem:[%s704 + $0xc] sm:$0xf]
        %v709 = vld [vmem:[%s704 + $0x10] sm:$0xf]
        %v710 = vld [vmem:[%s704 + $0x14] sm:$0xf]
        %v711 = vld [vmem:[%s704 + $0x18] sm:$0xf]
        %v712 = vld [vmem:[%s704 + $0x1c] sm:$0xf]
        %v713 = vld [vmem:[%s704 + $0x20] sm:$0xf]
        %v714 = vld [vmem:[%s704 + $0x24] sm:$0xf]
        %v715 = vld [vmem:[%s704 + $0x28] sm:$0xf]
        %v716 = vld [vmem:[%s704 + $0x2c] sm:$0xf]
        %v717 = vld [vmem:[%s704 + $0x30] sm:$0xf]
        %v718 = vld [vmem:[%s704 + $0x34] sm:$0xf]
        %v719 = vld [vmem:[%s704 + $0x38] sm:$0xf]
        %v720 = vld [vmem:[%s704 + $0x3c] sm:$0xf]
        %v737 = vunpack.c.l.b16 %v705
        %v738 = vunpack.c.l.b16 %v706
        %v739 = vunpack.c.l.b16 %v707
        %v740 = vunpack.c.l.b16 %v708
        %v741 = vunpack.c.l.b16 %v709
        %v742 = vunpack.c.l.b16 %v710
        %v743 = vunpack.c.l.b16 %v711
        %v744 = vunpack.c.l.b16 %v712
        %v745 = vunpack.c.l.b16 %v713
        %v746 = vunpack.c.l.b16 %v714
        %v747 = vunpack.c.l.b16 %v715
        %v748 = vunpack.c.l.b16 %v716
        %v749 = vunpack.c.l.b16 %v717
        %v750 = vunpack.c.l.b16 %v718
        %v751 = vunpack.c.l.b16 %v719
        %v752 = vunpack.c.l.b16 %v720
        %v753 = vpack.c.b16 %v738, %v737
        %v754 = vpack.c.b16 %v740, %v739
        %v755 = vpack.c.b16 %v742, %v741
        %v756 = vpack.c.b16 %v744, %v743
        %v757 = vpack.c.b16 %v746, %v745
        %v758 = vpack.c.b16 %v748, %v747
        %v759 = vpack.c.b16 %v750, %v749
        %v760 = vpack.c.b16 %v752, %v751
        %769 = vmatprep.subr.bf16.mxu0 0
        %770 = vmatpush1.bf16.msra.mxu0 %v753
        %771 = vmatprep.subr.bf16.mxu0 0
        %772 = vmatpush1.bf16.msra.mxu0 %v754
        %773 = vmatprep.subr.bf16.mxu0 0
        %774 = vmatpush1.bf16.msra.mxu0 %v755
        %775 = vmatprep.subr.bf16.mxu0 0
        %776 = vmatpush1.bf16.msra.mxu0 %v756
        %777 = vmatprep.subr.bf16.mxu0 0
        %778 = vmatpush1.bf16.msra.mxu0 %v757
        %779 = vmatprep.subr.bf16.mxu0 0
        %780 = vmatpush1.bf16.msra.mxu0 %v758
        %781 = vmatprep.subr.bf16.mxu0 0
        %782 = vmatpush1.bf16.msra.mxu0 %v759
        %783 = vmatprep.subr.bf16.mxu0 0
        %784 = vmatpush1.bf16.msra.mxu0 %v760
        %785 = vmatprep.subr.bf16.mxu0 0
        %786 = vmatpush1.bf16.msra.mxu0 0
        %787 = vmatprep.subr.bf16.mxu0 0
        %788 = vmatpush1.bf16.msra.mxu0 0
        %789 = vmatprep.subr.bf16.mxu0 0
        %790 = vmatpush1.bf16.msra.mxu0 0
        %791 = vmatprep.subr.bf16.mxu0 0
        %792 = vmatpush1.bf16.msra.mxu0 0
        %793 = vmatprep.subr.bf16.mxu0 0
        %794 = vmatpush1.bf16.msra.mxu0 0
        %795 = vmatprep.subr.bf16.mxu0 0
        %796 = vmatpush1.bf16.msra.mxu0 0
        %797 = vmatprep.subr.bf16.mxu0 0
        %798 = vmatpush1.bf16.msra.mxu0 0
        %799 = vmatprep.subr.bf16.mxu0 0
        %800 = vmatpush1.bf16.msra.mxu0 0
        %801 = vmatprep.mubr.bf16.mxu0 0
        %802 = vmatmul.mubr.bf16.gmra.mrb[0].mxu0 %v703
        %v803 = vpop.f32.mrb[0].mxu0
        %v804 = vadd.f32 0.0, %v803
        %v805 = vpop.f32.mrb[0].mxu0
        %v806 = vpop.f32.mrb[0].mxu0
        %v807 = vadd.f32 0.0, %v806
        %v808 = vpop.f32.mrb[0].mxu0
        %809 = vdwg.mxu0
        %v826 = vunpack.c.l.b16 %v631
        %v827 = vunpack.c.l.b16 %v632
        %v828 = vunpack.c.l.b16 %v633
        %v829 = vunpack.c.l.b16 %v634
        %v830 = vunpack.c.l.b16 %v635
        %v831 = vunpack.c.l.b16 %v636
        %v832 = vunpack.c.l.b16 %v637
        %v833 = vunpack.c.l.b16 %v638
        %v834 = vunpack.c.l.b16 %v639
        %v835 = vunpack.c.l.b16 %v640
        %v836 = vunpack.c.l.b16 %v641
        %v837 = vunpack.c.l.b16 %v642
        %v838 = vunpack.c.l.b16 %v643
        %v839 = vunpack.c.l.b16 %v644
        %v840 = vunpack.c.l.b16 %v645
        %v841 = vunpack.c.l.b16 %v646
        %v842 = vpack.c.b16 %v827, %v826
        %v843 = vpack.c.b16 %v829, %v828
        %v844 = vpack.c.b16 %v831, %v830
        %v845 = vpack.c.b16 %v833, %v832
        %v846 = vpack.c.b16 %v835, %v834
        %v847 = vpack.c.b16 %v837, %v836
        %v848 = vpack.c.b16 %v839, %v838
        %v849 = vpack.c.b16 %v841, %v840
        %858 = vmatprep.subr.bf16.mxu0 0
        %859 = vmatpush1.bf16.msra.mxu0 %v842
        %860 = vmatprep.subr.bf16.mxu0 0
        %861 = vmatpush1.bf16.msra.mxu0 %v843
        %862 = vmatprep.subr.bf16.mxu0 0
        %863 = vmatpush1.bf16.msra.mxu0 %v844
        %864 = vmatprep.subr.bf16.mxu0 0
        %865 = vmatpush1.bf16.msra.mxu0 %v845
        %866 = vmatprep.subr.bf16.mxu0 0
        %867 = vmatpush1.bf16.msra.mxu0 %v846
        %868 = vmatprep.subr.bf16.mxu0 0
        %869 = vmatpush1.bf16.msra.mxu0 %v847
        %870 = vmatprep.subr.bf16.mxu0 0
        %871 = vmatpush1.bf16.msra.mxu0 %v848
        %872 = vmatprep.subr.bf16.mxu0 0
        %873 = vmatpush1.bf16.msra.mxu0 %v849
        %874 = vmatprep.subr.bf16.mxu0 0
        %875 = vmatpush1.bf16.msra.mxu0 0
        %876 = vmatprep.subr.bf16.mxu0 0
        %877 = vmatpush1.bf16.msra.mxu0 0
        %878 = vmatprep.subr.bf16.mxu0 0
        %879 = vmatpush1.bf16.msra.mxu0 0
        %880 = vmatprep.subr.bf16.mxu0 0
        %881 = vmatpush1.bf16.msra.mxu0 0
        %882 = vmatprep.subr.bf16.mxu0 0
        %883 = vmatpush1.bf16.msra.mxu0 0
        %884 = vmatprep.subr.bf16.mxu0 0
        %885 = vmatpush1.bf16.msra.mxu0 0
        %886 = vmatprep.subr.bf16.mxu0 0
        %887 = vmatpush1.bf16.msra.mxu0 0
        %888 = vmatprep.subr.bf16.mxu0 0
        %889 = vmatpush1.bf16.msra.mxu0 0
        %890 = vmatprep.mubr.bf16.mxu0 0
        %891 = vmatmul.mubr.bf16.gmra.mrb[0].mxu0 %v630
        %v892 = vpop.f32.mrb[0].mxu0
        %v893 = vadd.f32 %v804, %v892
        %v894 = vpop.f32.mrb[0].mxu0
        %v895 = vpop.f32.mrb[0].mxu0
        %v896 = vadd.f32 %v807, %v895
        %v897 = vpop.f32.mrb[0].mxu0
        %898 = vdwg.mxu0
        %s899 = scalar_lea.vmem %s408, 32 [#allocation2]
        %v900 = vld [vmem:[%s899] sm:$0xff]
        %v901 = vld [vmem:[%s899 + $0x8] sm:$0xff]
        %v904 = vunpack.c.l.b16 %v900
        %v905 = vunpack.c.h.b16 %v900
        %v906 = vunpack.c.l.b16 %v901
        %v907 = vunpack.c.h.b16 %v901
        %v908 = vpack.c.b16 %v906, %v904
        %v909 = vpack.c.b16 %v907, %v905
        %912 = vmatprep.subr.bf16.mxu0 0
        %913 = vmatpush1.bf16.msra.mxu0 %v555
        %914 = vmatprep.subr.bf16.mxu0 0
        %915 = vmatpush1.bf16.msra.mxu0 %v556
        %916 = vmatprep.subr.bf16.mxu0 0
        %917 = vmatpush1.bf16.msra.mxu0 %v557
        %918 = vmatprep.subr.bf16.mxu0 0
        %919 = vmatpush1.bf16.msra.mxu0 %v558
        %920 = vmatprep.subr.bf16.mxu0 0
        %921 = vmatpush1.bf16.msra.mxu0 %v559
        %922 = vmatprep.subr.bf16.mxu0 0
        %923 = vmatpush1.bf16.msra.mxu0 %v560
        %924 = vmatprep.subr.bf16.mxu0 0
        %925 = vmatpush1.bf16.msra.mxu0 %v561
        %926 = vmatprep.subr.bf16.mxu0 0
        %927 = vmatpush1.bf16.msra.mxu0 %v562
        %928 = vmatprep.subr.bf16.mxu0 0
        %929 = vmatpush1.bf16.msra.mxu0 %v563
        %930 = vmatprep.subr.bf16.mxu0 0
        %931 = vmatpush1.bf16.msra.mxu0 %v564
        %932 = vmatprep.subr.bf16.mxu0 0
        %933 = vmatpush1.bf16.msra.mxu0 %v565
        %934 = vmatprep.subr.bf16.mxu0 0
        %935 = vmatpush1.bf16.msra.mxu0 %v566
        %936 = vmatprep.subr.bf16.mxu0 0
        %937 = vmatpush1.bf16.msra.mxu0 %v567
        %938 = vmatprep.subr.bf16.mxu0 0
        %939 = vmatpush1.bf16.msra.mxu0 %v568
        %940 = vmatprep.subr.bf16.mxu0 0
        %941 = vmatpush1.bf16.msra.mxu0 %v569
        %942 = vmatprep.subr.bf16.mxu0 0
        %943 = vmatpush1.bf16.msra.mxu0 %v570
        %944 = vmatprep.mubr.bf16.mxu0 %v909
        %945 = vmatmul.mubr.bf16.gmra.mrb[0].mxu0 %v908
        %v946 = vpop.f32.mrb[0].mxu0
        %v947 = vadd.f32 %v479, %v946
        %v948 = vpop.f32.mrb[0].mxu0
        %v949 = vpop.f32.mrb[0].mxu0
        %v950 = vadd.f32 %v479, %v949
        %v951 = vpop.f32.mrb[0].mxu0
        %952 = vdwg.mxu0
        %v953 = vmax.f32 %v947, 0.0
        %v954 = vmax.f32 %v950, 0.0
        %v955 = vpack.c.bf16 %v954, %v953
        %s956 = scalar_lea.vmem %s3, 128
        %v957 = vld [vmem:[%s956] sm:$0xf]
        %v958 = vld [vmem:[%s956 + $0x4] sm:$0xf]
        %v959 = vld [vmem:[%s956 + $0x8] sm:$0xf]
        %v960 = vld [vmem:[%s956 + $0xc] sm:$0xf]
        %v961 = vld [vmem:[%s956 + $0x10] sm:$0xf]
        %v962 = vld [vmem:[%s956 + $0x14] sm:$0xf]
        %v963 = vld [vmem:[%s956 + $0x18] sm:$0xf]
        %v964 = vld [vmem:[%s956 + $0x1c] sm:$0xf]
        %v965 = vld [vmem:[%s956 + $0x20] sm:$0xf]
        %v966 = vld [vmem:[%s956 + $0x24] sm:$0xf]
        %v967 = vld [vmem:[%s956 + $0x28] sm:$0xf]
        %v968 = vld [vmem:[%s956 + $0x2c] sm:$0xf]
        %v969 = vld [vmem:[%s956 + $0x30] sm:$0xf]
        %v970 = vld [vmem:[%s956 + $0x34] sm:$0xf]
        %v971 = vld [vmem:[%s956 + $0x38] sm:$0xf]
        %v972 = vld [vmem:[%s956 + $0x3c] sm:$0xf]
        %v989 = vunpack.c.l.b16 %v957
        %v990 = vunpack.c.l.b16 %v958
        %v991 = vunpack.c.l.b16 %v959
        %v992 = vunpack.c.l.b16 %v960
        %v993 = vunpack.c.l.b16 %v961
        %v994 = vunpack.c.l.b16 %v962
        %v995 = vunpack.c.l.b16 %v963
        %v996 = vunpack.c.l.b16 %v964
        %v997 = vunpack.c.l.b16 %v965
        %v998 = vunpack.c.l.b16 %v966
        %v999 = vunpack.c.l.b16 %v967
        %v1000 = vunpack.c.l.b16 %v968
        %v1001 = vunpack.c.l.b16 %v969
        %v1002 = vunpack.c.l.b16 %v970
        %v1003 = vunpack.c.l.b16 %v971
        %v1004 = vunpack.c.l.b16 %v972
        %v1005 = vpack.c.b16 %v990, %v989
        %v1006 = vpack.c.b16 %v992, %v991
        %v1007 = vpack.c.b16 %v994, %v993
        %v1008 = vpack.c.b16 %v996, %v995
        %v1009 = vpack.c.b16 %v998, %v997
        %v1010 = vpack.c.b16 %v1000, %v999
        %v1011 = vpack.c.b16 %v1002, %v1001
        %v1012 = vpack.c.b16 %v1004, %v1003
        %1021 = vmatprep.subr.bf16.mxu0 0
        %1022 = vmatpush1.bf16.msra.mxu0 %v1005
        %1023 = vmatprep.subr.bf16.mxu0 0
        %1024 = vmatpush1.bf16.msra.mxu0 %v1006
        %1025 = vmatprep.subr.bf16.mxu0 0
        %1026 = vmatpush1.bf16.msra.mxu0 %v1007
        %1027 = vmatprep.subr.bf16.mxu0 0
        %1028 = vmatpush1.bf16.msra.mxu0 %v1008
        %1029 = vmatprep.subr.bf16.mxu0 0
        %1030 = vmatpush1.bf16.msra.mxu0 %v1009
        %1031 = vmatprep.subr.bf16.mxu0 0
        %1032 = vmatpush1.bf16.msra.mxu0 %v1010
        %1033 = vmatprep.subr.bf16.mxu0 0
        %1034 = vmatpush1.bf16.msra.mxu0 %v1011
        %1035 = vmatprep.subr.bf16.mxu0 0
        %1036 = vmatpush1.bf16.msra.mxu0 %v1012
        %1037 = vmatprep.subr.bf16.mxu0 0
        %1038 = vmatpush1.bf16.msra.mxu0 0
        %1039 = vmatprep.subr.bf16.mxu0 0
        %1040 = vmatpush1.bf16.msra.mxu0 0
        %1041 = vmatprep.subr.bf16.mxu0 0
        %1042 = vmatpush1.bf16.msra.mxu0 0
        %1043 = vmatprep.subr.bf16.mxu0 0
        %1044 = vmatpush1.bf16.msra.mxu0 0
        %1045 = vmatprep.subr.bf16.mxu0 0
        %1046 = vmatpush1.bf16.msra.mxu0 0
        %1047 = vmatprep.subr.bf16.mxu0 0
        %1048 = vmatpush1.bf16.msra.mxu0 0
        %1049 = vmatprep.subr.bf16.mxu0 0
        %1050 = vmatpush1.bf16.msra.mxu0 0
        %1051 = vmatprep.subr.bf16.mxu0 0
        %1052 = vmatpush1.bf16.msra.mxu0 0
        %1053 = vmatprep.mubr.bf16.mxu0 0
        %1054 = vmatmul.mubr.bf16.gmra.mrb[0].mxu0 %v955
        %v1055 = vpop.f32.mrb[0].mxu0
        %v1056 = vadd.f32 0.0, %v1055
        %v1057 = vpop.f32.mrb[0].mxu0
        %v1058 = vpop.f32.mrb[0].mxu0
        %v1059 = vadd.f32 0.0, %v1058
        %v1060 = vpop.f32.mrb[0].mxu0
        %1061 = vdwg.mxu0
        %v1062 = vadd.f32 %v893, %v1056
        %v1063 = vadd.f32 %v896, %v1059
        %s1064 = scalar_lea.vmem %s408, 48 [#allocation2]
        %v1065 = vld [vmem:[%s1064] sm:$0xff]
        %v1066 = vld [vmem:[%s1064 + $0x8] sm:$0xff]
        %v1069 = vunpack.c.l.b16 %v1065
        %v1070 = vunpack.c.h.b16 %v1065
        %v1071 = vunpack.c.l.b16 %v1066
        %v1072 = vunpack.c.h.b16 %v1066
        %v1073 = vpack.c.b16 %v1071, %v1069
        %v1074 = vpack.c.b16 %v1072, %v1070
        %1077 = vmatprep.subr.bf16.mxu0 0
        %1078 = vmatpush1.bf16.msra.mxu0 %v555
        %1079 = vmatprep.subr.bf16.mxu0 0
        %1080 = vmatpush1.bf16.msra.mxu0 %v556
        %1081 = vmatprep.subr.bf16.mxu0 0
        %1082 = vmatpush1.bf16.msra.mxu0 %v557
        %1083 = vmatprep.subr.bf16.mxu0 0
        %1084 = vmatpush1.bf16.msra.mxu0 %v558
        %1085 = vmatprep.subr.bf16.mxu0 0
        %1086 = vmatpush1.bf16.msra.mxu0 %v559
        %1087 = vmatprep.subr.bf16.mxu0 0
        %1088 = vmatpush1.bf16.msra.mxu0 %v560
        %1089 = vmatprep.subr.bf16.mxu0 0
        %1090 = vmatpush1.bf16.msra.mxu0 %v561
        %1091 = vmatprep.subr.bf16.mxu0 0
        %1092 = vmatpush1.bf16.msra.mxu0 %v562
        %1093 = vmatprep.subr.bf16.mxu0 0
        %1094 = vmatpush1.bf16.msra.mxu0 %v563
        %1095 = vmatprep.subr.bf16.mxu0 0
        %1096 = vmatpush1.bf16.msra.mxu0 %v564
        %1097 = vmatprep.subr.bf16.mxu0 0
        %1098 = vmatpush1.bf16.msra.mxu0 %v565
        %1099 = vmatprep.subr.bf16.mxu0 0
        %1100 = vmatpush1.bf16.msra.mxu0 %v566
        %1101 = vmatprep.subr.bf16.mxu0 0
        %1102 = vmatpush1.bf16.msra.mxu0 %v567
        %1103 = vmatprep.subr.bf16.mxu0 0
        %1104 = vmatpush1.bf16.msra.mxu0 %v568
        %1105 = vmatprep.subr.bf16.mxu0 0
        %1106 = vmatpush1.bf16.msra.mxu0 %v569
        %1107 = vmatprep.subr.bf16.mxu0 0
        %1108 = vmatpush1.bf16.msra.mxu0 %v570
        %1109 = vmatprep.mubr.bf16.mxu0 %v1074
        %1110 = vmatmul.mubr.bf16.gmra.mrb[0].mxu0 %v1073
        %v1111 = vpop.f32.mrb[0].mxu0
        %v1112 = vadd.f32 %v479, %v1111
        %v1113 = vpop.f32.mrb[0].mxu0
        %v1114 = vpop.f32.mrb[0].mxu0
        %v1115 = vadd.f32 %v479, %v1114
        %v1116 = vpop.f32.mrb[0].mxu0
        %1117 = vdwg.mxu0
        %v1118 = vmax.f32 %v1112, 0.0
        %v1119 = vmax.f32 %v1115, 0.0
        %v1120 = vpack.c.bf16 %v1119, %v1118
        %s1121 = scalar_lea.vmem %s3, 192
        %v1122 = vld [vmem:[%s1121] sm:$0xf]
        %v1123 = vld [vmem:[%s1121 + $0x4] sm:$0xf]
        %v1124 = vld [vmem:[%s1121 + $0x8] sm:$0xf]
        %v1125 = vld [vmem:[%s1121 + $0xc] sm:$0xf]
        %v1126 = vld [vmem:[%s1121 + $0x10] sm:$0xf]
        %v1127 = vld [vmem:[%s1121 + $0x14] sm:$0xf]
        %v1128 = vld [vmem:[%s1121 + $0x18] sm:$0xf]
        %v1129 = vld [vmem:[%s1121 + $0x1c] sm:$0xf]
        %v1130 = vld [vmem:[%s1121 + $0x20] sm:$0xf]
        %v1131 = vld [vmem:[%s1121 + $0x24] sm:$0xf]
        %v1132 = vld [vmem:[%s1121 + $0x28] sm:$0xf]
        %v1133 = vld [vmem:[%s1121 + $0x2c] sm:$0xf]
        %v1134 = vld [vmem:[%s1121 + $0x30] sm:$0xf]
        %v1135 = vld [vmem:[%s1121 + $0x34] sm:$0xf]
        %v1136 = vld [vmem:[%s1121 + $0x38] sm:$0xf]
        %v1137 = vld [vmem:[%s1121 + $0x3c] sm:$0xf]
        %v1154 = vunpack.c.l.b16 %v1122
        %v1155 = vunpack.c.l.b16 %v1123
        %v1156 = vunpack.c.l.b16 %v1124
        %v1157 = vunpack.c.l.b16 %v1125
        %v1158 = vunpack.c.l.b16 %v1126
        %v1159 = vunpack.c.l.b16 %v1127
        %v1160 = vunpack.c.l.b16 %v1128
        %v1161 = vunpack.c.l.b16 %v1129
        %v1162 = vunpack.c.l.b16 %v1130
        %v1163 = vunpack.c.l.b16 %v1131
        %v1164 = vunpack.c.l.b16 %v1132
        %v1165 = vunpack.c.l.b16 %v1133
        %v1166 = vunpack.c.l.b16 %v1134
        %v1167 = vunpack.c.l.b16 %v1135
        %v1168 = vunpack.c.l.b16 %v1136
        %v1169 = vunpack.c.l.b16 %v1137
        %v1170 = vpack.c.b16 %v1155, %v1154
        %v1171 = vpack.c.b16 %v1157, %v1156
        %v1172 = vpack.c.b16 %v1159, %v1158
        %v1173 = vpack.c.b16 %v1161, %v1160
        %v1174 = vpack.c.b16 %v1163, %v1162
        %v1175 = vpack.c.b16 %v1165, %v1164
        %v1176 = vpack.c.b16 %v1167, %v1166
        %v1177 = vpack.c.b16 %v1169, %v1168
        %1186 = vmatprep.subr.bf16.mxu0 0
        %1187 = vmatpush1.bf16.msra.mxu0 %v1170
        %1188 = vmatprep.subr.bf16.mxu0 0
        %1189 = vmatpush1.bf16.msra.mxu0 %v1171
        %1190 = vmatprep.subr.bf16.mxu0 0
        %1191 = vmatpush1.bf16.msra.mxu0 %v1172
        %1192 = vmatprep.subr.bf16.mxu0 0
        %1193 = vmatpush1.bf16.msra.mxu0 %v1173
        %1194 = vmatprep.subr.bf16.mxu0 0
        %1195 = vmatpush1.bf16.msra.mxu0 %v1174
        %1196 = vmatprep.subr.bf16.mxu0 0
        %1197 = vmatpush1.bf16.msra.mxu0 %v1175
        %1198 = vmatprep.subr.bf16.mxu0 0
        %1199 = vmatpush1.bf16.msra.mxu0 %v1176
        %1200 = vmatprep.subr.bf16.mxu0 0
        %1201 = vmatpush1.bf16.msra.mxu0 %v1177
        %1202 = vmatprep.subr.bf16.mxu0 0
        %1203 = vmatpush1.bf16.msra.mxu0 0
        %1204 = vmatprep.subr.bf16.mxu0 0
        %1205 = vmatpush1.bf16.msra.mxu0 0
        %1206 = vmatprep.subr.bf16.mxu0 0
        %1207 = vmatpush1.bf16.msra.mxu0 0
        %1208 = vmatprep.subr.bf16.mxu0 0
        %1209 = vmatpush1.bf16.msra.mxu0 0
        %1210 = vmatprep.subr.bf16.mxu0 0
        %1211 = vmatpush1.bf16.msra.mxu0 0
        %1212 = vmatprep.subr.bf16.mxu0 0
        %1213 = vmatpush1.bf16.msra.mxu0 0
        %1214 = vmatprep.subr.bf16.mxu0 0
        %1215 = vmatpush1.bf16.msra.mxu0 0
        %1216 = vmatprep.subr.bf16.mxu0 0
        %1217 = vmatpush1.bf16.msra.mxu0 0
        %1218 = vmatprep.mubr.bf16.mxu0 0
        %1219 = vmatmul.mubr.bf16.gmra.mrb[0].mxu0 %v1120
        %v1220 = vpop.f32.mrb[0].mxu0
        %v1221 = vadd.f32 0.0, %v1220
        %v1222 = vpop.f32.mrb[0].mxu0
        %v1223 = vpop.f32.mrb[0].mxu0
        %v1224 = vadd.f32 0.0, %v1223
        %v1225 = vpop.f32.mrb[0].mxu0
        %1226 = vdwg.mxu0
        %v1227 = vadd.f32 %v1062, %v1221
        %v1228 = vadd.f32 %v1063, %v1224
        %s1229 = scalar_lea.vmem %s408, 64 [#allocation2]
        %v1230 = vld [vmem:[%s1229] sm:$0xff]
        %v1231 = vld [vmem:[%s1229 + $0x8] sm:$0xff]
        %v1234 = vunpack.c.l.b16 %v1230
        %v1235 = vunpack.c.h.b16 %v1230
        %v1236 = vunpack.c.l.b16 %v1231
        %v1237 = vunpack.c.h.b16 %v1231
        %v1238 = vpack.c.b16 %v1236, %v1234
        %v1239 = vpack.c.b16 %v1237, %v1235
        %1242 = vmatprep.subr.bf16.mxu0 0
        %1243 = vmatpush1.bf16.msra.mxu0 %v555
        %1244 = vmatprep.subr.bf16.mxu0 0
        %1245 = vmatpush1.bf16.msra.mxu0 %v556
        %1246 = vmatprep.subr.bf16.mxu0 0
        %1247 = vmatpush1.bf16.msra.mxu0 %v557
        %1248 = vmatprep.subr.bf16.mxu0 0
        %1249 = vmatpush1.bf16.msra.mxu0 %v558
        %1250 = vmatprep.subr.bf16.mxu0 0
        %1251 = vmatpush1.bf16.msra.mxu0 %v559
        %1252 = vmatprep.subr.bf16.mxu0 0
        %1253 = vmatpush1.bf16.msra.mxu0 %v560
        %1254 = vmatprep.subr.bf16.mxu0 0
        %1255 = vmatpush1.bf16.msra.mxu0 %v561
        %1256 = vmatprep.subr.bf16.mxu0 0
        %1257 = vmatpush1.bf16.msra.mxu0 %v562
        %1258 = vmatprep.subr.bf16.mxu0 0
        %1259 = vmatpush1.bf16.msra.mxu0 %v563
        %1260 = vmatprep.subr.bf16.mxu0 0
        %1261 = vmatpush1.bf16.msra.mxu0 %v564
        %1262 = vmatprep.subr.bf16.mxu0 0
        %1263 = vmatpush1.bf16.msra.mxu0 %v565
        %1264 = vmatprep.subr.bf16.mxu0 0
        %1265 = vmatpush1.bf16.msra.mxu0 %v566
        %1266 = vmatprep.subr.bf16.mxu0 0
        %1267 = vmatpush1.bf16.msra.mxu0 %v567
        %1268 = vmatprep.subr.bf16.mxu0 0
        %1269 = vmatpush1.bf16.msra.mxu0 %v568
        %1270 = vmatprep.subr.bf16.mxu0 0
        %1271 = vmatpush1.bf16.msra.mxu0 %v569
        %1272 = vmatprep.subr.bf16.mxu0 0
        %1273 = vmatpush1.bf16.msra.mxu0 %v570
        %1274 = vmatprep.mubr.bf16.mxu0 %v1239
        %1275 = vmatmul.mubr.bf16.gmra.mrb[0].mxu0 %v1238
        %v1276 = vpop.f32.mrb[0].mxu0
        %v1277 = vadd.f32 %v479, %v1276
        %v1278 = vpop.f32.mrb[0].mxu0
        %v1279 = vpop.f32.mrb[0].mxu0
        %v1280 = vadd.f32 %v479, %v1279
        %v1281 = vpop.f32.mrb[0].mxu0
        %1282 = vdwg.mxu0
        %v1283 = vmax.f32 %v1277, 0.0
        %v1284 = vmax.f32 %v1280, 0.0
        %v1285 = vpack.c.bf16 %v1284, %v1283
        %s1286 = scalar_lea.vmem %s3, 256
        %v1287 = vld [vmem:[%s1286] sm:$0xf]
        %v1288 = vld [vmem:[%s1286 + $0x4] sm:$0xf]
        %v1289 = vld [vmem:[%s1286 + $0x8] sm:$0xf]
        %v1290 = vld [vmem:[%s1286 + $0xc] sm:$0xf]
        %v1291 = vld [vmem:[%s1286 + $0x10] sm:$0xf]
        %v1292 = vld [vmem:[%s1286 + $0x14] sm:$0xf]
        %v1293 = vld [vmem:[%s1286 + $0x18] sm:$0xf]
        %v1294 = vld [vmem:[%s1286 + $0x1c] sm:$0xf]
        %v1295 = vld [vmem:[%s1286 + $0x20] sm:$0xf]
        %v1296 = vld [vmem:[%s1286 + $0x24] sm:$0xf]
        %v1297 = vld [vmem:[%s1286 + $0x28] sm:$0xf]
        %v1298 = vld [vmem:[%s1286 + $0x2c] sm:$0xf]
        %v1299 = vld [vmem:[%s1286 + $0x30] sm:$0xf]
        %v1300 = vld [vmem:[%s1286 + $0x34] sm:$0xf]
        %v1301 = vld [vmem:[%s1286 + $0x38] sm:$0xf]
        %v1302 = vld [vmem:[%s1286 + $0x3c] sm:$0xf]
        %v1319 = vunpack.c.l.b16 %v1287
        %v1320 = vunpack.c.l.b16 %v1288
        %v1321 = vunpack.c.l.b16 %v1289
        %v1322 = vunpack.c.l.b16 %v1290
        %v1323 = vunpack.c.l.b16 %v1291
        %v1324 = vunpack.c.l.b16 %v1292
        %v1325 = vunpack.c.l.b16 %v1293
        %v1326 = vunpack.c.l.b16 %v1294
        %v1327 = vunpack.c.l.b16 %v1295
        %v1328 = vunpack.c.l.b16 %v1296
        %v1329 = vunpack.c.l.b16 %v1297
        %v1330 = vunpack.c.l.b16 %v1298
        %v1331 = vunpack.c.l.b16 %v1299
        %v1332 = vunpack.c.l.b16 %v1300
        %v1333 = vunpack.c.l.b16 %v1301
        %v1334 = vunpack.c.l.b16 %v1302
        %v1335 = vpack.c.b16 %v1320, %v1319
        %v1336 = vpack.c.b16 %v1322, %v1321
        %v1337 = vpack.c.b16 %v1324, %v1323
        %v1338 = vpack.c.b16 %v1326, %v1325
        %v1339 = vpack.c.b16 %v1328, %v1327
        %v1340 = vpack.c.b16 %v1330, %v1329
        %v1341 = vpack.c.b16 %v1332, %v1331
        %v1342 = vpack.c.b16 %v1334, %v1333
        %1351 = vmatprep.subr.bf16.mxu0 0
        %1352 = vmatpush1.bf16.msra.mxu0 %v1335
        %1353 = vmatprep.subr.bf16.mxu0 0
        %1354 = vmatpush1.bf16.msra.mxu0 %v1336
        %1355 = vmatprep.subr.bf16.mxu0 0
        %1356 = vmatpush1.bf16.msra.mxu0 %v1337
        %1357 = vmatprep.subr.bf16.mxu0 0
        %1358 = vmatpush1.bf16.msra.mxu0 %v1338
        %1359 = vmatprep.subr.bf16.mxu0 0
        %1360 = vmatpush1.bf16.msra.mxu0 %v1339
        %1361 = vmatprep.subr.bf16.mxu0 0
        %1362 = vmatpush1.bf16.msra.mxu0 %v1340
        %1363 = vmatprep.subr.bf16.mxu0 0
        %1364 = vmatpush1.bf16.msra.mxu0 %v1341
        %1365 = vmatprep.subr.bf16.mxu0 0
        %1366 = vmatpush1.bf16.msra.mxu0 %v1342
        %1367 = vmatprep.subr.bf16.mxu0 0
        %1368 = vmatpush1.bf16.msra.mxu0 0
        %1369 = vmatprep.subr.bf16.mxu0 0
        %1370 = vmatpush1.bf16.msra.mxu0 0
        %1371 = vmatprep.subr.bf16.mxu0 0
        %1372 = vmatpush1.bf16.msra.mxu0 0
        %1373 = vmatprep.subr.bf16.mxu0 0
        %1374 = vmatpush1.bf16.msra.mxu0 0
        %1375 = vmatprep.subr.bf16.mxu0 0
        %1376 = vmatpush1.bf16.msra.mxu0 0
        %1377 = vmatprep.subr.bf16.mxu0 0
        %1378 = vmatpush1.bf16.msra.mxu0 0
        %1379 = vmatprep.subr.bf16.mxu0 0
        %1380 = vmatpush1.bf16.msra.mxu0 0
        %1381 = vmatprep.subr.bf16.mxu0 0
        %1382 = vmatpush1.bf16.msra.mxu0 0
        %1383 = vmatprep.mubr.bf16.mxu0 0
        %1384 = vmatmul.mubr.bf16.gmra.mrb[0].mxu0 %v1285
        %v1385 = vpop.f32.mrb[0].mxu0
        %v1386 = vadd.f32 0.0, %v1385
        %v1387 = vpop.f32.mrb[0].mxu0
        %v1388 = vpop.f32.mrb[0].mxu0
        %v1389 = vadd.f32 0.0, %v1388
        %v1390 = vpop.f32.mrb[0].mxu0
        %1391 = vdwg.mxu0
        %v1392 = vadd.f32 %v1227, %v1386
        %v1393 = vadd.f32 %v1228, %v1389
        %s1394 = scalar_lea.vmem %s408, 80 [#allocation2]
        %v1395 = vld [vmem:[%s1394] sm:$0xff]
        %v1396 = vld [vmem:[%s1394 + $0x8] sm:$0xff]
        %v1399 = vunpack.c.l.b16 %v1395
        %v1400 = vunpack.c.h.b16 %v1395
        %v1401 = vunpack.c.l.b16 %v1396
        %v1402 = vunpack.c.h.b16 %v1396
        %v1403 = vpack.c.b16 %v1401, %v1399
        %v1404 = vpack.c.b16 %v1402, %v1400
        %1407 = vmatprep.subr.bf16.mxu0 0
        %1408 = vmatpush1.bf16.msra.mxu0 %v555
        %1409 = vmatprep.subr.bf16.mxu0 0
        %1410 = vmatpush1.bf16.msra.mxu0 %v556
        %1411 = vmatprep.subr.bf16.mxu0 0
        %1412 = vmatpush1.bf16.msra.mxu0 %v557
        %1413 = vmatprep.subr.bf16.mxu0 0
        %1414 = vmatpush1.bf16.msra.mxu0 %v558
        %1415 = vmatprep.subr.bf16.mxu0 0
        %1416 = vmatpush1.bf16.msra.mxu0 %v559
        %1417 = vmatprep.subr.bf16.mxu0 0
        %1418 = vmatpush1.bf16.msra.mxu0 %v560
        %1419 = vmatprep.subr.bf16.mxu0 0
        %1420 = vmatpush1.bf16.msra.mxu0 %v561
        %1421 = vmatprep.subr.bf16.mxu0 0
        %1422 = vmatpush1.bf16.msra.mxu0 %v562
        %1423 = vmatprep.subr.bf16.mxu0 0
        %1424 = vmatpush1.bf16.msra.mxu0 %v563
        %1425 = vmatprep.subr.bf16.mxu0 0
        %1426 = vmatpush1.bf16.msra.mxu0 %v564
        %1427 = vmatprep.subr.bf16.mxu0 0
        %1428 = vmatpush1.bf16.msra.mxu0 %v565
        %1429 = vmatprep.subr.bf16.mxu0 0
        %1430 = vmatpush1.bf16.msra.mxu0 %v566
        %1431 = vmatprep.subr.bf16.mxu0 0
        %1432 = vmatpush1.bf16.msra.mxu0 %v567
        %1433 = vmatprep.subr.bf16.mxu0 0
        %1434 = vmatpush1.bf16.msra.mxu0 %v568
        %1435 = vmatprep.subr.bf16.mxu0 0
        %1436 = vmatpush1.bf16.msra.mxu0 %v569
        %1437 = vmatprep.subr.bf16.mxu0 0
        %1438 = vmatpush1.bf16.msra.mxu0 %v570
        %1439 = vmatprep.mubr.bf16.mxu0 %v1404
        %1440 = vmatmul.mubr.bf16.gmra.mrb[0].mxu0 %v1403
        %v1441 = vpop.f32.mrb[0].mxu0
        %v1442 = vadd.f32 %v479, %v1441
        %v1443 = vpop.f32.mrb[0].mxu0
        %v1444 = vpop.f32.mrb[0].mxu0
        %v1445 = vadd.f32 %v479, %v1444
        %v1446 = vpop.f32.mrb[0].mxu0
        %1447 = vdwg.mxu0
        %v1448 = vmax.f32 %v1442, 0.0
        %v1449 = vmax.f32 %v1445, 0.0
        %v1450 = vpack.c.bf16 %v1449, %v1448
        %s1451 = scalar_lea.vmem %s3, 320
        %v1452 = vld [vmem:[%s1451] sm:$0xf]
        %v1453 = vld [vmem:[%s1451 + $0x4] sm:$0xf]
        %v1454 = vld [vmem:[%s1451 + $0x8] sm:$0xf]
        %v1455 = vld [vmem:[%s1451 + $0xc] sm:$0xf]
        %v1456 = vld [vmem:[%s1451 + $0x10] sm:$0xf]
        %v1457 = vld [vmem:[%s1451 + $0x14] sm:$0xf]
        %v1458 = vld [vmem:[%s1451 + $0x18] sm:$0xf]
        %v1459 = vld [vmem:[%s1451 + $0x1c] sm:$0xf]
        %v1460 = vld [vmem:[%s1451 + $0x20] sm:$0xf]
        %v1461 = vld [vmem:[%s1451 + $0x24] sm:$0xf]
        %v1462 = vld [vmem:[%s1451 + $0x28] sm:$0xf]
        %v1463 = vld [vmem:[%s1451 + $0x2c] sm:$0xf]
        %v1464 = vld [vmem:[%s1451 + $0x30] sm:$0xf]
        %v1465 = vld [vmem:[%s1451 + $0x34] sm:$0xf]
        %v1466 = vld [vmem:[%s1451 + $0x38] sm:$0xf]
        %v1467 = vld [vmem:[%s1451 + $0x3c] sm:$0xf]
        %v1484 = vunpack.c.l.b16 %v1452
        %v1485 = vunpack.c.l.b16 %v1453
        %v1486 = vunpack.c.l.b16 %v1454
        %v1487 = vunpack.c.l.b16 %v1455
        %v1488 = vunpack.c.l.b16 %v1456
        %v1489 = vunpack.c.l.b16 %v1457
        %v1490 = vunpack.c.l.b16 %v1458
        %v1491 = vunpack.c.l.b16 %v1459
        %v1492 = vunpack.c.l.b16 %v1460
        %v1493 = vunpack.c.l.b16 %v1461
        %v1494 = vunpack.c.l.b16 %v1462
        %v1495 = vunpack.c.l.b16 %v1463
        %v1496 = vunpack.c.l.b16 %v1464
        %v1497 = vunpack.c.l.b16 %v1465
        %v1498 = vunpack.c.l.b16 %v1466
        %v1499 = vunpack.c.l.b16 %v1467
        %v1500 = vpack.c.b16 %v1485, %v1484
        %v1501 = vpack.c.b16 %v1487, %v1486
        %v1502 = vpack.c.b16 %v1489, %v1488
        %v1503 = vpack.c.b16 %v1491, %v1490
        %v1504 = vpack.c.b16 %v1493, %v1492
        %v1505 = vpack.c.b16 %v1495, %v1494
        %v1506 = vpack.c.b16 %v1497, %v1496
        %v1507 = vpack.c.b16 %v1499, %v1498
        %1516 = vmatprep.subr.bf16.mxu0 0
        %1517 = vmatpush1.bf16.msra.mxu0 %v1500
        %1518 = vmatprep.subr.bf16.mxu0 0
        %1519 = vmatpush1.bf16.msra.mxu0 %v1501
        %1520 = vmatprep.subr.bf16.mxu0 0
        %1521 = vmatpush1.bf16.msra.mxu0 %v1502
        %1522 = vmatprep.subr.bf16.mxu0 0
        %1523 = vmatpush1.bf16.msra.mxu0 %v1503
        %1524 = vmatprep.subr.bf16.mxu0 0
        %1525 = vmatpush1.bf16.msra.mxu0 %v1504
        %1526 = vmatprep.subr.bf16.mxu0 0
        %1527 = vmatpush1.bf16.msra.mxu0 %v1505
        %1528 = vmatprep.subr.bf16.mxu0 0
        %1529 = vmatpush1.bf16.msra.mxu0 %v1506
        %1530 = vmatprep.subr.bf16.mxu0 0
        %1531 = vmatpush1.bf16.msra.mxu0 %v1507
        %1532 = vmatprep.subr.bf16.mxu0 0
        %1533 = vmatpush1.bf16.msra.mxu0 0
        %1534 = vmatprep.subr.bf16.mxu0 0
        %1535 = vmatpush1.bf16.msra.mxu0 0
        %1536 = vmatprep.subr.bf16.mxu0 0
        %1537 = vmatpush1.bf16.msra.mxu0 0
        %1538 = vmatprep.subr.bf16.mxu0 0
        %1539 = vmatpush1.bf16.msra.mxu0 0
        %1540 = vmatprep.subr.bf16.mxu0 0
        %1541 = vmatpush1.bf16.msra.mxu0 0
        %1542 = vmatprep.subr.bf16.mxu0 0
        %1543 = vmatpush1.bf16.msra.mxu0 0
        %1544 = vmatprep.subr.bf16.mxu0 0
        %1545 = vmatpush1.bf16.msra.mxu0 0
        %1546 = vmatprep.subr.bf16.mxu0 0
        %1547 = vmatpush1.bf16.msra.mxu0 0
        %1548 = vmatprep.mubr.bf16.mxu0 0
        %1549 = vmatmul.mubr.bf16.gmra.mrb[0].mxu0 %v1450
        %v1550 = vpop.f32.mrb[0].mxu0
        %v1551 = vadd.f32 0.0, %v1550
        %v1552 = vpop.f32.mrb[0].mxu0
        %v1553 = vpop.f32.mrb[0].mxu0
        %v1554 = vadd.f32 0.0, %v1553
        %v1555 = vpop.f32.mrb[0].mxu0
        %1556 = vdwg.mxu0
        %v1557 = vadd.f32 %v1392, %v1551
        %v1558 = vadd.f32 %v1393, %v1554
        %s1559 = scalar_lea.vmem %s408, 96 [#allocation2]
        %v1560 = vld [vmem:[%s1559] sm:$0xff]
        %v1561 = vld [vmem:[%s1559 + $0x8] sm:$0xff]
        %v1564 = vunpack.c.l.b16 %v1560
        %v1565 = vunpack.c.h.b16 %v1560
        %v1566 = vunpack.c.l.b16 %v1561
        %v1567 = vunpack.c.h.b16 %v1561
        %v1568 = vpack.c.b16 %v1566, %v1564
        %v1569 = vpack.c.b16 %v1567, %v1565
        %1572 = vmatprep.subr.bf16.mxu0 0
        %1573 = vmatpush1.bf16.msra.mxu0 %v555
        %1574 = vmatprep.subr.bf16.mxu0 0
        %1575 = vmatpush1.bf16.msra.mxu0 %v556
        %1576 = vmatprep.subr.bf16.mxu0 0
        %1577 = vmatpush1.bf16.msra.mxu0 %v557
        %1578 = vmatprep.subr.bf16.mxu0 0
        %1579 = vmatpush1.bf16.msra.mxu0 %v558
        %1580 = vmatprep.subr.bf16.mxu0 0
        %1581 = vmatpush1.bf16.msra.mxu0 %v559
        %1582 = vmatprep.subr.bf16.mxu0 0
        %1583 = vmatpush1.bf16.msra.mxu0 %v560
        %1584 = vmatprep.subr.bf16.mxu0 0
        %1585 = vmatpush1.bf16.msra.mxu0 %v561
        %1586 = vmatprep.subr.bf16.mxu0 0
        %1587 = vmatpush1.bf16.msra.mxu0 %v562
        %1588 = vmatprep.subr.bf16.mxu0 0
        %1589 = vmatpush1.bf16.msra.mxu0 %v563
        %1590 = vmatprep.subr.bf16.mxu0 0
        %1591 = vmatpush1.bf16.msra.mxu0 %v564
        %1592 = vmatprep.subr.bf16.mxu0 0
        %1593 = vmatpush1.bf16.msra.mxu0 %v565
        %1594 = vmatprep.subr.bf16.mxu0 0
        %1595 = vmatpush1.bf16.msra.mxu0 %v566
        %1596 = vmatprep.subr.bf16.mxu0 0
        %1597 = vmatpush1.bf16.msra.mxu0 %v567
        %1598 = vmatprep.subr.bf16.mxu0 0
        %1599 = vmatpush1.bf16.msra.mxu0 %v568
        %1600 = vmatprep.subr.bf16.mxu0 0
        %1601 = vmatpush1.bf16.msra.mxu0 %v569
        %1602 = vmatprep.subr.bf16.mxu0 0
        %1603 = vmatpush1.bf16.msra.mxu0 %v570
        %1604 = vmatprep.mubr.bf16.mxu0 %v1569
        %1605 = vmatmul.mubr.bf16.gmra.mrb[0].mxu0 %v1568
        %v1606 = vpop.f32.mrb[0].mxu0
        %v1607 = vadd.f32 %v479, %v1606
        %v1608 = vpop.f32.mrb[0].mxu0
        %v1609 = vpop.f32.mrb[0].mxu0
        %v1610 = vadd.f32 %v479, %v1609
        %v1611 = vpop.f32.mrb[0].mxu0
        %1612 = vdwg.mxu0
        %v1613 = vmax.f32 %v1607, 0.0
        %v1614 = vmax.f32 %v1610, 0.0
        %v1615 = vpack.c.bf16 %v1614, %v1613
        %s1616 = scalar_lea.vmem %s3, 384
        %v1617 = vld [vmem:[%s1616] sm:$0xf]
        %v1618 = vld [vmem:[%s1616 + $0x4] sm:$0xf]
        %v1619 = vld [vmem:[%s1616 + $0x8] sm:$0xf]
        %v1620 = vld [vmem:[%s1616 + $0xc] sm:$0xf]
        %v1621 = vld [vmem:[%s1616 + $0x10] sm:$0xf]
        %v1622 = vld [vmem:[%s1616 + $0x14] sm:$0xf]
        %v1623 = vld [vmem:[%s1616 + $0x18] sm:$0xf]
        %v1624 = vld [vmem:[%s1616 + $0x1c] sm:$0xf]
        %v1625 = vld [vmem:[%s1616 + $0x20] sm:$0xf]
        %v1626 = vld [vmem:[%s1616 + $0x24] sm:$0xf]
        %v1627 = vld [vmem:[%s1616 + $0x28] sm:$0xf]
        %v1628 = vld [vmem:[%s1616 + $0x2c] sm:$0xf]
        %v1629 = vld [vmem:[%s1616 + $0x30] sm:$0xf]
        %v1630 = vld [vmem:[%s1616 + $0x34] sm:$0xf]
        %v1631 = vld [vmem:[%s1616 + $0x38] sm:$0xf]
        %v1632 = vld [vmem:[%s1616 + $0x3c] sm:$0xf]
        %v1649 = vunpack.c.l.b16 %v1617
        %v1650 = vunpack.c.l.b16 %v1618
        %v1651 = vunpack.c.l.b16 %v1619
        %v1652 = vunpack.c.l.b16 %v1620
        %v1653 = vunpack.c.l.b16 %v1621
        %v1654 = vunpack.c.l.b16 %v1622
        %v1655 = vunpack.c.l.b16 %v1623
        %v1656 = vunpack.c.l.b16 %v1624
        %v1657 = vunpack.c.l.b16 %v1625
        %v1658 = vunpack.c.l.b16 %v1626
        %v1659 = vunpack.c.l.b16 %v1627
        %v1660 = vunpack.c.l.b16 %v1628
        %v1661 = vunpack.c.l.b16 %v1629
        %v1662 = vunpack.c.l.b16 %v1630
        %v1663 = vunpack.c.l.b16 %v1631
        %v1664 = vunpack.c.l.b16 %v1632
        %v1665 = vpack.c.b16 %v1650, %v1649
        %v1666 = vpack.c.b16 %v1652, %v1651
        %v1667 = vpack.c.b16 %v1654, %v1653
        %v1668 = vpack.c.b16 %v1656, %v1655
        %v1669 = vpack.c.b16 %v1658, %v1657
        %v1670 = vpack.c.b16 %v1660, %v1659
        %v1671 = vpack.c.b16 %v1662, %v1661
        %v1672 = vpack.c.b16 %v1664, %v1663
        %1681 = vmatprep.subr.bf16.mxu0 0
        %1682 = vmatpush1.bf16.msra.mxu0 %v1665
        %1683 = vmatprep.subr.bf16.mxu0 0
        %1684 = vmatpush1.bf16.msra.mxu0 %v1666
        %1685 = vmatprep.subr.bf16.mxu0 0
        %1686 = vmatpush1.bf16.msra.mxu0 %v1667
        %1687 = vmatprep.subr.bf16.mxu0 0
        %1688 = vmatpush1.bf16.msra.mxu0 %v1668
        %1689 = vmatprep.subr.bf16.mxu0 0
        %1690 = vmatpush1.bf16.msra.mxu0 %v1669
        %1691 = vmatprep.subr.bf16.mxu0 0
        %1692 = vmatpush1.bf16.msra.mxu0 %v1670
        %1693 = vmatprep.subr.bf16.mxu0 0
        %1694 = vmatpush1.bf16.msra.mxu0 %v1671
        %1695 = vmatprep.subr.bf16.mxu0 0
        %1696 = vmatpush1.bf16.msra.mxu0 %v1672
        %1697 = vmatprep.subr.bf16.mxu0 0
        %1698 = vmatpush1.bf16.msra.mxu0 0
        %1699 = vmatprep.subr.bf16.mxu0 0
        %1700 = vmatpush1.bf16.msra.mxu0 0
        %1701 = vmatprep.subr.bf16.mxu0 0
        %1702 = vmatpush1.bf16.msra.mxu0 0
        %1703 = vmatprep.subr.bf16.mxu0 0
        %1704 = vmatpush1.bf16.msra.mxu0 0
        %1705 = vmatprep.subr.bf16.mxu0 0
        %1706 = vmatpush1.bf16.msra.mxu0 0
        %1707 = vmatprep.subr.bf16.mxu0 0
        %1708 = vmatpush1.bf16.msra.mxu0 0
        %1709 = vmatprep.subr.bf16.mxu0 0
        %1710 = vmatpush1.bf16.msra.mxu0 0
        %1711 = vmatprep.subr.bf16.mxu0 0
        %1712 = vmatpush1.bf16.msra.mxu0 0
        %1713 = vmatprep.mubr.bf16.mxu0 0
        %1714 = vmatmul.mubr.bf16.gmra.mrb[0].mxu0 %v1615
        %v1715 = vpop.f32.mrb[0].mxu0
        %v1716 = vadd.f32 0.0, %v1715
        %v1717 = vpop.f32.mrb[0].mxu0
        %v1718 = vpop.f32.mrb[0].mxu0
        %v1719 = vadd.f32 0.0, %v1718
        %v1720 = vpop.f32.mrb[0].mxu0
        %1721 = vdwg.mxu0
        %v1722 = vadd.f32 %v1557, %v1716
        %v1723 = vadd.f32 %v1558, %v1719
        %s1724 = scalar_lea.vmem %s408, 112 [#allocation2]
        %v1725 = vld [vmem:[%s1724] sm:$0xff]
        %v1726 = vld [vmem:[%s1724 + $0x8] sm:$0xff]
        %v1729 = vunpack.c.l.b16 %v1725
        %v1730 = vunpack.c.h.b16 %v1725
        %v1731 = vunpack.c.l.b16 %v1726
        %v1732 = vunpack.c.h.b16 %v1726
        %v1733 = vpack.c.b16 %v1731, %v1729
        %v1734 = vpack.c.b16 %v1732, %v1730
        %1737 = vmatprep.subr.bf16.mxu0 0
        %1738 = vmatpush1.bf16.msra.mxu0 %v555
        %1739 = vmatprep.subr.bf16.mxu0 0
        %1740 = vmatpush1.bf16.msra.mxu0 %v556
        %1741 = vmatprep.subr.bf16.mxu0 0
        %1742 = vmatpush1.bf16.msra.mxu0 %v557
        %1743 = vmatprep.subr.bf16.mxu0 0
        %1744 = vmatpush1.bf16.msra.mxu0 %v558
        %1745 = vmatprep.subr.bf16.mxu0 0
        %1746 = vmatpush1.bf16.msra.mxu0 %v559
        %1747 = vmatprep.subr.bf16.mxu0 0
        %1748 = vmatpush1.bf16.msra.mxu0 %v560
        %1749 = vmatprep.subr.bf16.mxu0 0
        %1750 = vmatpush1.bf16.msra.mxu0 %v561
        %1751 = vmatprep.subr.bf16.mxu0 0
        %1752 = vmatpush1.bf16.msra.mxu0 %v562
        %1753 = vmatprep.subr.bf16.mxu0 0
        %1754 = vmatpush1.bf16.msra.mxu0 %v563
        %1755 = vmatprep.subr.bf16.mxu0 0
        %1756 = vmatpush1.bf16.msra.mxu0 %v564
        %1757 = vmatprep.subr.bf16.mxu0 0
        %1758 = vmatpush1.bf16.msra.mxu0 %v565
        %1759 = vmatprep.subr.bf16.mxu0 0
        %1760 = vmatpush1.bf16.msra.mxu0 %v566
        %1761 = vmatprep.subr.bf16.mxu0 0
        %1762 = vmatpush1.bf16.msra.mxu0 %v567
        %1763 = vmatprep.subr.bf16.mxu0 0
        %1764 = vmatpush1.bf16.msra.mxu0 %v568
        %1765 = vmatprep.subr.bf16.mxu0 0
        %1766 = vmatpush1.bf16.msra.mxu0 %v569
        %1767 = vmatprep.subr.bf16.mxu0 0
        %1768 = vmatpush1.bf16.msra.mxu0 %v570
        %1769 = vmatprep.mubr.bf16.mxu0 %v1734
        %1770 = vmatmul.mubr.bf16.gmra.mrb[0].mxu0 %v1733
        %v1771 = vpop.f32.mrb[0].mxu0
        %v1772 = vadd.f32 %v479, %v1771
        %v1773 = vpop.f32.mrb[0].mxu0
        %v1774 = vpop.f32.mrb[0].mxu0
        %v1775 = vadd.f32 %v479, %v1774
        %v1776 = vpop.f32.mrb[0].mxu0
        %1777 = vdwg.mxu0
        %v1778 = vmax.f32 %v1772, 0.0
        %v1779 = vmax.f32 %v1775, 0.0
        %v1780 = vpack.c.bf16 %v1779, %v1778
        %s1781 = scalar_lea.vmem %s3, 448
        %v1782 = vld [vmem:[%s1781] sm:$0xf]
        %v1783 = vld [vmem:[%s1781 + $0x4] sm:$0xf]
        %v1784 = vld [vmem:[%s1781 + $0x8] sm:$0xf]
        %v1785 = vld [vmem:[%s1781 + $0xc] sm:$0xf]
        %v1786 = vld [vmem:[%s1781 + $0x10] sm:$0xf]
        %v1787 = vld [vmem:[%s1781 + $0x14] sm:$0xf]
        %v1788 = vld [vmem:[%s1781 + $0x18] sm:$0xf]
        %v1789 = vld [vmem:[%s1781 + $0x1c] sm:$0xf]
        %v1790 = vld [vmem:[%s1781 + $0x20] sm:$0xf]
        %v1791 = vld [vmem:[%s1781 + $0x24] sm:$0xf]
        %v1792 = vld [vmem:[%s1781 + $0x28] sm:$0xf]
        %v1793 = vld [vmem:[%s1781 + $0x2c] sm:$0xf]
        %v1794 = vld [vmem:[%s1781 + $0x30] sm:$0xf]
        %v1795 = vld [vmem:[%s1781 + $0x34] sm:$0xf]
        %v1796 = vld [vmem:[%s1781 + $0x38] sm:$0xf]
        %v1797 = vld [vmem:[%s1781 + $0x3c] sm:$0xf]
        %v1814 = vunpack.c.l.b16 %v1782
        %v1815 = vunpack.c.l.b16 %v1783
        %v1816 = vunpack.c.l.b16 %v1784
        %v1817 = vunpack.c.l.b16 %v1785
        %v1818 = vunpack.c.l.b16 %v1786
        %v1819 = vunpack.c.l.b16 %v1787
        %v1820 = vunpack.c.l.b16 %v1788
        %v1821 = vunpack.c.l.b16 %v1789
        %v1822 = vunpack.c.l.b16 %v1790
        %v1823 = vunpack.c.l.b16 %v1791
        %v1824 = vunpack.c.l.b16 %v1792
        %v1825 = vunpack.c.l.b16 %v1793
        %v1826 = vunpack.c.l.b16 %v1794
        %v1827 = vunpack.c.l.b16 %v1795
        %v1828 = vunpack.c.l.b16 %v1796
        %v1829 = vunpack.c.l.b16 %v1797
        %v1830 = vpack.c.b16 %v1815, %v1814
        %v1831 = vpack.c.b16 %v1817, %v1816
        %v1832 = vpack.c.b16 %v1819, %v1818
        %v1833 = vpack.c.b16 %v1821, %v1820
        %v1834 = vpack.c.b16 %v1823, %v1822
        %v1835 = vpack.c.b16 %v1825, %v1824
        %v1836 = vpack.c.b16 %v1827, %v1826
        %v1837 = vpack.c.b16 %v1829, %v1828
        %1846 = vmatprep.subr.bf16.mxu0 0
        %1847 = vmatpush1.bf16.msra.mxu0 %v1830
        %1848 = vmatprep.subr.bf16.mxu0 0
        %1849 = vmatpush1.bf16.msra.mxu0 %v1831
        %1850 = vmatprep.subr.bf16.mxu0 0
        %1851 = vmatpush1.bf16.msra.mxu0 %v1832
        %1852 = vmatprep.subr.bf16.mxu0 0
        %1853 = vmatpush1.bf16.msra.mxu0 %v1833
        %1854 = vmatprep.subr.bf16.mxu0 0
        %1855 = vmatpush1.bf16.msra.mxu0 %v1834
        %1856 = vmatprep.subr.bf16.mxu0 0
        %1857 = vmatpush1.bf16.msra.mxu0 %v1835
        %1858 = vmatprep.subr.bf16.mxu0 0
        %1859 = vmatpush1.bf16.msra.mxu0 %v1836
        %1860 = vmatprep.subr.bf16.mxu0 0
        %1861 = vmatpush1.bf16.msra.mxu0 %v1837
        %1862 = vmatprep.subr.bf16.mxu0 0
        %1863 = vmatpush1.bf16.msra.mxu0 0
        %1864 = vmatprep.subr.bf16.mxu0 0
        %1865 = vmatpush1.bf16.msra.mxu0 0
        %1866 = vmatprep.subr.bf16.mxu0 0
        %1867 = vmatpush1.bf16.msra.mxu0 0
        %1868 = vmatprep.subr.bf16.mxu0 0
        %1869 = vmatpush1.bf16.msra.mxu0 0
        %1870 = vmatprep.subr.bf16.mxu0 0
        %1871 = vmatpush1.bf16.msra.mxu0 0
        %1872 = vmatprep.subr.bf16.mxu0 0
        %1873 = vmatpush1.bf16.msra.mxu0 0
        %1874 = vmatprep.subr.bf16.mxu0 0
        %1875 = vmatpush1.bf16.msra.mxu0 0
        %1876 = vmatprep.subr.bf16.mxu0 0
        %1877 = vmatpush1.bf16.msra.mxu0 0
        %1878 = vmatprep.mubr.bf16.mxu0 0
        %1879 = vmatmul.mubr.bf16.gmra.mrb[0].mxu0 %v1780
        %v1880 = vpop.f32.mrb[0].mxu0
        %v1881 = vadd.f32 0.0, %v1880
        %v1882 = vpop.f32.mrb[0].mxu0
        %v1883 = vpop.f32.mrb[0].mxu0
        %v1884 = vadd.f32 0.0, %v1883
        %v1885 = vpop.f32.mrb[0].mxu0
        %1886 = vdwg.mxu0
        %v1887 = vadd.f32 %v1722, %v1881
        %v1888 = vadd.f32 %v1723, %v1884
        %s1889 = scalar_lea.vmem %s408, 128 [#allocation2]
        %v1890 = vld [vmem:[%s1889] sm:$0xff]
        %v1891 = vld [vmem:[%s1889 + $0x8] sm:$0xff]
        %v1894 = vunpack.c.l.b16 %v1890
        %v1895 = vunpack.c.h.b16 %v1890
        %v1896 = vunpack.c.l.b16 %v1891
        %v1897 = vunpack.c.h.b16 %v1891
        %v1898 = vpack.c.b16 %v1896, %v1894
        %v1899 = vpack.c.b16 %v1897, %v1895
        %1902 = vmatprep.subr.bf16.mxu0 0
        %1903 = vmatpush1.bf16.msra.mxu0 %v555
        %1904 = vmatprep.subr.bf16.mxu0 0
        %1905 = vmatpush1.bf16.msra.mxu0 %v556
        %1906 = vmatprep.subr.bf16.mxu0 0
        %1907 = vmatpush1.bf16.msra.mxu0 %v557
        %1908 = vmatprep.subr.bf16.mxu0 0
        %1909 = vmatpush1.bf16.msra.mxu0 %v558
        %1910 = vmatprep.subr.bf16.mxu0 0
        %1911 = vmatpush1.bf16.msra.mxu0 %v559
        %1912 = vmatprep.subr.bf16.mxu0 0
        %1913 = vmatpush1.bf16.msra.mxu0 %v560
        %1914 = vmatprep.subr.bf16.mxu0 0
        %1915 = vmatpush1.bf16.msra.mxu0 %v561
        %1916 = vmatprep.subr.bf16.mxu0 0
        %1917 = vmatpush1.bf16.msra.mxu0 %v562
        %1918 = vmatprep.subr.bf16.mxu0 0
        %1919 = vmatpush1.bf16.msra.mxu0 %v563
        %1920 = vmatprep.subr.bf16.mxu0 0
        %1921 = vmatpush1.bf16.msra.mxu0 %v564
        %1922 = vmatprep.subr.bf16.mxu0 0
        %1923 = vmatpush1.bf16.msra.mxu0 %v565
        %1924 = vmatprep.subr.bf16.mxu0 0
        %1925 = vmatpush1.bf16.msra.mxu0 %v566
        %1926 = vmatprep.subr.bf16.mxu0 0
        %1927 = vmatpush1.bf16.msra.mxu0 %v567
        %1928 = vmatprep.subr.bf16.mxu0 0
        %1929 = vmatpush1.bf16.msra.mxu0 %v568
        %1930 = vmatprep.subr.bf16.mxu0 0
        %1931 = vmatpush1.bf16.msra.mxu0 %v569
        %1932 = vmatprep.subr.bf16.mxu0 0
        %1933 = vmatpush1.bf16.msra.mxu0 %v570
        %1934 = vmatprep.mubr.bf16.mxu0 %v1899
        %1935 = vmatmul.mubr.bf16.gmra.mrb[0].mxu0 %v1898
        %v1936 = vpop.f32.mrb[0].mxu0
        %v1937 = vadd.f32 %v479, %v1936
        %v1938 = vpop.f32.mrb[0].mxu0
        %v1939 = vpop.f32.mrb[0].mxu0
        %v1940 = vadd.f32 %v479, %v1939
        %v1941 = vpop.f32.mrb[0].mxu0
        %1942 = vdwg.mxu0
        %v1943 = vmax.f32 %v1937, 0.0
        %v1944 = vmax.f32 %v1940, 0.0
        %v1945 = vpack.c.bf16 %v1944, %v1943
        %s1946 = scalar_lea.vmem %s3, 512
        %v1947 = vld [vmem:[%s1946] sm:$0xf]
        %v1948 = vld [vmem:[%s1946 + $0x4] sm:$0xf]
        %v1949 = vld [vmem:[%s1946 + $0x8] sm:$0xf]
        %v1950 = vld [vmem:[%s1946 + $0xc] sm:$0xf]
        %v1951 = vld [vmem:[%s1946 + $0x10] sm:$0xf]
        %v1952 = vld [vmem:[%s1946 + $0x14] sm:$0xf]
        %v1953 = vld [vmem:[%s1946 + $0x18] sm:$0xf]
        %v1954 = vld [vmem:[%s1946 + $0x1c] sm:$0xf]
        %v1955 = vld [vmem:[%s1946 + $0x20] sm:$0xf]
        %v1956 = vld [vmem:[%s1946 + $0x24] sm:$0xf]
        %v1957 = vld [vmem:[%s1946 + $0x28] sm:$0xf]
        %v1958 = vld [vmem:[%s1946 + $0x2c] sm:$0xf]
        %v1959 = vld [vmem:[%s1946 + $0x30] sm:$0xf]
        %v1960 = vld [vmem:[%s1946 + $0x34] sm:$0xf]
        %v1961 = vld [vmem:[%s1946 + $0x38] sm:$0xf]
        %v1962 = vld [vmem:[%s1946 + $0x3c] sm:$0xf]
        %v1979 = vunpack.c.l.b16 %v1947
        %v1980 = vunpack.c.l.b16 %v1948
        %v1981 = vunpack.c.l.b16 %v1949
        %v1982 = vunpack.c.l.b16 %v1950
        %v1983 = vunpack.c.l.b16 %v1951
        %v1984 = vunpack.c.l.b16 %v1952
        %v1985 = vunpack.c.l.b16 %v1953
        %v1986 = vunpack.c.l.b16 %v1954
        %v1987 = vunpack.c.l.b16 %v1955
        %v1988 = vunpack.c.l.b16 %v1956
        %v1989 = vunpack.c.l.b16 %v1957
        %v1990 = vunpack.c.l.b16 %v1958
        %v1991 = vunpack.c.l.b16 %v1959
        %v1992 = vunpack.c.l.b16 %v1960
        %v1993 = vunpack.c.l.b16 %v1961
        %v1994 = vunpack.c.l.b16 %v1962
        %v1995 = vpack.c.b16 %v1980, %v1979
        %v1996 = vpack.c.b16 %v1982, %v1981
        %v1997 = vpack.c.b16 %v1984, %v1983
        %v1998 = vpack.c.b16 %v1986, %v1985
        %v1999 = vpack.c.b16 %v1988, %v1987
        %v2000 = vpack.c.b16 %v1990, %v1989
        %v2001 = vpack.c.b16 %v1992, %v1991
        %v2002 = vpack.c.b16 %v1994, %v1993
        %2011 = vmatprep.subr.bf16.mxu0 0
        %2012 = vmatpush1.bf16.msra.mxu0 %v1995
        %2013 = vmatprep.subr.bf16.mxu0 0
        %2014 = vmatpush1.bf16.msra.mxu0 %v1996
        %2015 = vmatprep.subr.bf16.mxu0 0
        %2016 = vmatpush1.bf16.msra.mxu0 %v1997
        %2017 = vmatprep.subr.bf16.mxu0 0
        %2018 = vmatpush1.bf16.msra.mxu0 %v1998
        %2019 = vmatprep.subr.bf16.mxu0 0
        %2020 = vmatpush1.bf16.msra.mxu0 %v1999
        %2021 = vmatprep.subr.bf16.mxu0 0
        %2022 = vmatpush1.bf16.msra.mxu0 %v2000
        %2023 = vmatprep.subr.bf16.mxu0 0
        %2024 = vmatpush1.bf16.msra.mxu0 %v2001
        %2025 = vmatprep.subr.bf16.mxu0 0
        %2026 = vmatpush1.bf16.msra.mxu0 %v2002
        %2027 = vmatprep.subr.bf16.mxu0 0
        %2028 = vmatpush1.bf16.msra.mxu0 0
        %2029 = vmatprep.subr.bf16.mxu0 0
        %2030 = vmatpush1.bf16.msra.mxu0 0
        %2031 = vmatprep.subr.bf16.mxu0 0
        %2032 = vmatpush1.bf16.msra.mxu0 0
        %2033 = vmatprep.subr.bf16.mxu0 0
        %2034 = vmatpush1.bf16.msra.mxu0 0
        %2035 = vmatprep.subr.bf16.mxu0 0
        %2036 = vmatpush1.bf16.msra.mxu0 0
        %2037 = vmatprep.subr.bf16.mxu0 0
        %2038 = vmatpush1.bf16.msra.mxu0 0
        %2039 = vmatprep.subr.bf16.mxu0 0
        %2040 = vmatpush1.bf16.msra.mxu0 0
        %2041 = vmatprep.subr.bf16.mxu0 0
        %2042 = vmatpush1.bf16.msra.mxu0 0
        %2043 = vmatprep.mubr.bf16.mxu0 0
        %2044 = vmatmul.mubr.bf16.gmra.mrb[0].mxu0 %v1945
        %v2045 = vpop.f32.mrb[0].mxu0
        %v2046 = vadd.f32 0.0, %v2045
        %v2047 = vpop.f32.mrb[0].mxu0
        %v2048 = vpop.f32.mrb[0].mxu0
        %v2049 = vadd.f32 0.0, %v2048
        %v2050 = vpop.f32.mrb[0].mxu0
        %2051 = vdwg.mxu0
        %v2052 = vadd.f32 %v1887, %v2046
        %v2053 = vadd.f32 %v1888, %v2049
        %s2054 = scalar_lea.vmem %s408, 144 [#allocation2]
        %v2055 = vld [vmem:[%s2054] sm:$0xff]
        %v2056 = vld [vmem:[%s2054 + $0x8] sm:$0xff]
        %v2059 = vunpack.c.l.b16 %v2055
        %v2060 = vunpack.c.h.b16 %v2055
        %v2061 = vunpack.c.l.b16 %v2056
        %v2062 = vunpack.c.h.b16 %v2056
        %v2063 = vpack.c.b16 %v2061, %v2059
        %v2064 = vpack.c.b16 %v2062, %v2060
        %2067 = vmatprep.subr.bf16.mxu0 0
        %2068 = vmatpush1.bf16.msra.mxu0 %v555
        %2069 = vmatprep.subr.bf16.mxu0 0
        %2070 = vmatpush1.bf16.msra.mxu0 %v556
        %2071 = vmatprep.subr.bf16.mxu0 0
        %2072 = vmatpush1.bf16.msra.mxu0 %v557
        %2073 = vmatprep.subr.bf16.mxu0 0
        %2074 = vmatpush1.bf16.msra.mxu0 %v558
        %2075 = vmatprep.subr.bf16.mxu0 0
        %2076 = vmatpush1.bf16.msra.mxu0 %v559
        %2077 = vmatprep.subr.bf16.mxu0 0
        %2078 = vmatpush1.bf16.msra.mxu0 %v560
        %2079 = vmatprep.subr.bf16.mxu0 0
        %2080 = vmatpush1.bf16.msra.mxu0 %v561
        %2081 = vmatprep.subr.bf16.mxu0 0
        %2082 = vmatpush1.bf16.msra.mxu0 %v562
        %2083 = vmatprep.subr.bf16.mxu0 0
        %2084 = vmatpush1.bf16.msra.mxu0 %v563
        %2085 = vmatprep.subr.bf16.mxu0 0
        %2086 = vmatpush1.bf16.msra.mxu0 %v564
        %2087 = vmatprep.subr.bf16.mxu0 0
        %2088 = vmatpush1.bf16.msra.mxu0 %v565
        %2089 = vmatprep.subr.bf16.mxu0 0
        %2090 = vmatpush1.bf16.msra.mxu0 %v566
        %2091 = vmatprep.subr.bf16.mxu0 0
        %2092 = vmatpush1.bf16.msra.mxu0 %v567
        %2093 = vmatprep.subr.bf16.mxu0 0
        %2094 = vmatpush1.bf16.msra.mxu0 %v568
        %2095 = vmatprep.subr.bf16.mxu0 0
        %2096 = vmatpush1.bf16.msra.mxu0 %v569
        %2097 = vmatprep.subr.bf16.mxu0 0
        %2098 = vmatpush1.bf16.msra.mxu0 %v570
        %2099 = vmatprep.mubr.bf16.mxu0 %v2064
        %2100 = vmatmul.mubr.bf16.gmra.mrb[0].mxu0 %v2063
        %v2101 = vpop.f32.mrb[0].mxu0
        %v2102 = vadd.f32 %v479, %v2101
        %v2103 = vpop.f32.mrb[0].mxu0
        %v2104 = vpop.f32.mrb[0].mxu0
        %v2105 = vadd.f32 %v479, %v2104
        %v2106 = vpop.f32.mrb[0].mxu0
        %2107 = vdwg.mxu0
        %v2108 = vmax.f32 %v2102, 0.0
        %v2109 = vmax.f32 %v2105, 0.0
        %v2110 = vpack.c.bf16 %v2109, %v2108
        %s2111 = scalar_lea.vmem %s3, 576
        %v2112 = vld [vmem:[%s2111] sm:$0xf]
        %v2113 = vld [vmem:[%s2111 + $0x4] sm:$0xf]
        %v2114 = vld [vmem:[%s2111 + $0x8] sm:$0xf]
        %v2115 = vld [vmem:[%s2111 + $0xc] sm:$0xf]
        %v2116 = vld [vmem:[%s2111 + $0x10] sm:$0xf]
        %v2117 = vld [vmem:[%s2111 + $0x14] sm:$0xf]
        %v2118 = vld [vmem:[%s2111 + $0x18] sm:$0xf]
        %v2119 = vld [vmem:[%s2111 + $0x1c] sm:$0xf]
        %v2120 = vld [vmem:[%s2111 + $0x20] sm:$0xf]
        %v2121 = vld [vmem:[%s2111 + $0x24] sm:$0xf]
        %v2122 = vld [vmem:[%s2111 + $0x28] sm:$0xf]
        %v2123 = vld [vmem:[%s2111 + $0x2c] sm:$0xf]
        %v2124 = vld [vmem:[%s2111 + $0x30] sm:$0xf]
        %v2125 = vld [vmem:[%s2111 + $0x34] sm:$0xf]
        %v2126 = vld [vmem:[%s2111 + $0x38] sm:$0xf]
        %v2127 = vld [vmem:[%s2111 + $0x3c] sm:$0xf]
        %v2144 = vunpack.c.l.b16 %v2112
        %v2145 = vunpack.c.l.b16 %v2113
        %v2146 = vunpack.c.l.b16 %v2114
        %v2147 = vunpack.c.l.b16 %v2115
        %v2148 = vunpack.c.l.b16 %v2116
        %v2149 = vunpack.c.l.b16 %v2117
        %v2150 = vunpack.c.l.b16 %v2118
        %v2151 = vunpack.c.l.b16 %v2119
        %v2152 = vunpack.c.l.b16 %v2120
        %v2153 = vunpack.c.l.b16 %v2121
        %v2154 = vunpack.c.l.b16 %v2122
        %v2155 = vunpack.c.l.b16 %v2123
        %v2156 = vunpack.c.l.b16 %v2124
        %v2157 = vunpack.c.l.b16 %v2125
        %v2158 = vunpack.c.l.b16 %v2126
        %v2159 = vunpack.c.l.b16 %v2127
        %v2160 = vpack.c.b16 %v2145, %v2144
        %v2161 = vpack.c.b16 %v2147, %v2146
        %v2162 = vpack.c.b16 %v2149, %v2148
        %v2163 = vpack.c.b16 %v2151, %v2150
        %v2164 = vpack.c.b16 %v2153, %v2152
        %v2165 = vpack.c.b16 %v2155, %v2154
        %v2166 = vpack.c.b16 %v2157, %v2156
        %v2167 = vpack.c.b16 %v2159, %v2158
        %2176 = vmatprep.subr.bf16.mxu0 0
        %2177 = vmatpush1.bf16.msra.mxu0 %v2160
        %2178 = vmatprep.subr.bf16.mxu0 0
        %2179 = vmatpush1.bf16.msra.mxu0 %v2161
        %2180 = vmatprep.subr.bf16.mxu0 0
        %2181 = vmatpush1.bf16.msra.mxu0 %v2162
        %2182 = vmatprep.subr.bf16.mxu0 0
        %2183 = vmatpush1.bf16.msra.mxu0 %v2163
        %2184 = vmatprep.subr.bf16.mxu0 0
        %2185 = vmatpush1.bf16.msra.mxu0 %v2164
        %2186 = vmatprep.subr.bf16.mxu0 0
        %2187 = vmatpush1.bf16.msra.mxu0 %v2165
        %2188 = vmatprep.subr.bf16.mxu0 0
        %2189 = vmatpush1.bf16.msra.mxu0 %v2166
        %2190 = vmatprep.subr.bf16.mxu0 0
        %2191 = vmatpush1.bf16.msra.mxu0 %v2167
        %2192 = vmatprep.subr.bf16.mxu0 0
        %2193 = vmatpush1.bf16.msra.mxu0 0
        %2194 = vmatprep.subr.bf16.mxu0 0
        %2195 = vmatpush1.bf16.msra.mxu0 0
        %2196 = vmatprep.subr.bf16.mxu0 0
        %2197 = vmatpush1.bf16.msra.mxu0 0
        %2198 = vmatprep.subr.bf16.mxu0 0
        %2199 = vmatpush1.bf16.msra.mxu0 0
        %2200 = vmatprep.subr.bf16.mxu0 0
        %2201 = vmatpush1.bf16.msra.mxu0 0
        %2202 = vmatprep.subr.bf16.mxu0 0
        %2203 = vmatpush1.bf16.msra.mxu0 0
        %2204 = vmatprep.subr.bf16.mxu0 0
        %2205 = vmatpush1.bf16.msra.mxu0 0
        %2206 = vmatprep.subr.bf16.mxu0 0
        %2207 = vmatpush1.bf16.msra.mxu0 0
        %2208 = vmatprep.mubr.bf16.mxu0 0
        %2209 = vmatmul.mubr.bf16.gmra.mrb[0].mxu0 %v2110
        %v2210 = vpop.f32.mrb[0].mxu0
        %v2211 = vadd.f32 0.0, %v2210
        %v2212 = vpop.f32.mrb[0].mxu0
        %v2213 = vpop.f32.mrb[0].mxu0
        %v2214 = vadd.f32 0.0, %v2213
        %v2215 = vpop.f32.mrb[0].mxu0
        %2216 = vdwg.mxu0
        %v2217 = vadd.f32 %v2052, %v2211
        %v2218 = vadd.f32 %v2053, %v2214
        %s2219 = scalar_lea.vmem %s408, 160 [#allocation2]
        %v2220 = vld [vmem:[%s2219] sm:$0xff]
        %v2221 = vld [vmem:[%s2219 + $0x8] sm:$0xff]
        %v2224 = vunpack.c.l.b16 %v2220
        %v2225 = vunpack.c.h.b16 %v2220
        %v2226 = vunpack.c.l.b16 %v2221
        %v2227 = vunpack.c.h.b16 %v2221
        %v2228 = vpack.c.b16 %v2226, %v2224
        %v2229 = vpack.c.b16 %v2227, %v2225
        %2232 = vmatprep.subr.bf16.mxu0 0
        %2233 = vmatpush1.bf16.msra.mxu0 %v555
        %2234 = vmatprep.subr.bf16.mxu0 0
        %2235 = vmatpush1.bf16.msra.mxu0 %v556
        %2236 = vmatprep.subr.bf16.mxu0 0
        %2237 = vmatpush1.bf16.msra.mxu0 %v557
        %2238 = vmatprep.subr.bf16.mxu0 0
        %2239 = vmatpush1.bf16.msra.mxu0 %v558
        %2240 = vmatprep.subr.bf16.mxu0 0
        %2241 = vmatpush1.bf16.msra.mxu0 %v559
        %2242 = vmatprep.subr.bf16.mxu0 0
        %2243 = vmatpush1.bf16.msra.mxu0 %v560
        %2244 = vmatprep.subr.bf16.mxu0 0
        %2245 = vmatpush1.bf16.msra.mxu0 %v561
        %2246 = vmatprep.subr.bf16.mxu0 0
        %2247 = vmatpush1.bf16.msra.mxu0 %v562
        %2248 = vmatprep.subr.bf16.mxu0 0
        %2249 = vmatpush1.bf16.msra.mxu0 %v563
        %2250 = vmatprep.subr.bf16.mxu0 0
        %2251 = vmatpush1.bf16.msra.mxu0 %v564
        %2252 = vmatprep.subr.bf16.mxu0 0
        %2253 = vmatpush1.bf16.msra.mxu0 %v565
        %2254 = vmatprep.subr.bf16.mxu0 0
        %2255 = vmatpush1.bf16.msra.mxu0 %v566
        %2256 = vmatprep.subr.bf16.mxu0 0
        %2257 = vmatpush1.bf16.msra.mxu0 %v567
        %2258 = vmatprep.subr.bf16.mxu0 0
        %2259 = vmatpush1.bf16.msra.mxu0 %v568
        %2260 = vmatprep.subr.bf16.mxu0 0
        %2261 = vmatpush1.bf16.msra.mxu0 %v569
        %2262 = vmatprep.subr.bf16.mxu0 0
        %2263 = vmatpush1.bf16.msra.mxu0 %v570
        %2264 = vmatprep.mubr.bf16.mxu0 %v2229
        %2265 = vmatmul.mubr.bf16.gmra.mrb[0].mxu0 %v2228
        %v2266 = vpop.f32.mrb[0].mxu0
        %v2267 = vadd.f32 %v479, %v2266
        %v2268 = vpop.f32.mrb[0].mxu0
        %v2269 = vpop.f32.mrb[0].mxu0
        %v2270 = vadd.f32 %v479, %v2269
        %v2271 = vpop.f32.mrb[0].mxu0
        %2272 = vdwg.mxu0
        %v2273 = vmax.f32 %v2267, 0.0
        %v2274 = vmax.f32 %v2270, 0.0
        %v2275 = vpack.c.bf16 %v2274, %v2273
        %s2276 = scalar_lea.vmem %s3, 640
        %v2277 = vld [vmem:[%s2276] sm:$0xf]
        %v2278 = vld [vmem:[%s2276 + $0x4] sm:$0xf]
        %v2279 = vld [vmem:[%s2276 + $0x8] sm:$0xf]
        %v2280 = vld [vmem:[%s2276 + $0xc] sm:$0xf]
        %v2281 = vld [vmem:[%s2276 + $0x10] sm:$0xf]
        %v2282 = vld [vmem:[%s2276 + $0x14] sm:$0xf]
        %v2283 = vld [vmem:[%s2276 + $0x18] sm:$0xf]
        %v2284 = vld [vmem:[%s2276 + $0x1c] sm:$0xf]
        %v2285 = vld [vmem:[%s2276 + $0x20] sm:$0xf]
        %v2286 = vld [vmem:[%s2276 + $0x24] sm:$0xf]
        %v2287 = vld [vmem:[%s2276 + $0x28] sm:$0xf]
        %v2288 = vld [vmem:[%s2276 + $0x2c] sm:$0xf]
        %v2289 = vld [vmem:[%s2276 + $0x30] sm:$0xf]
        %v2290 = vld [vmem:[%s2276 + $0x34] sm:$0xf]
        %v2291 = vld [vmem:[%s2276 + $0x38] sm:$0xf]
        %v2292 = vld [vmem:[%s2276 + $0x3c] sm:$0xf]
        %v2309 = vunpack.c.l.b16 %v2277
        %v2310 = vunpack.c.l.b16 %v2278
        %v2311 = vunpack.c.l.b16 %v2279
        %v2312 = vunpack.c.l.b16 %v2280
        %v2313 = vunpack.c.l.b16 %v2281
        %v2314 = vunpack.c.l.b16 %v2282
        %v2315 = vunpack.c.l.b16 %v2283
        %v2316 = vunpack.c.l.b16 %v2284
        %v2317 = vunpack.c.l.b16 %v2285
        %v2318 = vunpack.c.l.b16 %v2286
        %v2319 = vunpack.c.l.b16 %v2287
        %v2320 = vunpack.c.l.b16 %v2288
        %v2321 = vunpack.c.l.b16 %v2289
        %v2322 = vunpack.c.l.b16 %v2290
        %v2323 = vunpack.c.l.b16 %v2291
        %v2324 = vunpack.c.l.b16 %v2292
        %v2325 = vpack.c.b16 %v2310, %v2309
        %v2326 = vpack.c.b16 %v2312, %v2311
        %v2327 = vpack.c.b16 %v2314, %v2313
        %v2328 = vpack.c.b16 %v2316, %v2315
        %v2329 = vpack.c.b16 %v2318, %v2317
        %v2330 = vpack.c.b16 %v2320, %v2319
        %v2331 = vpack.c.b16 %v2322, %v2321
        %v2332 = vpack.c.b16 %v2324, %v2323
        %2341 = vmatprep.subr.bf16.mxu0 0
        %2342 = vmatpush1.bf16.msra.mxu0 %v2325
        %2343 = vmatprep.subr.bf16.mxu0 0
        %2344 = vmatpush1.bf16.msra.mxu0 %v2326
        %2345 = vmatprep.subr.bf16.mxu0 0
        %2346 = vmatpush1.bf16.msra.mxu0 %v2327
        %2347 = vmatprep.subr.bf16.mxu0 0
        %2348 = vmatpush1.bf16.msra.mxu0 %v2328
        %2349 = vmatprep.subr.bf16.mxu0 0
        %2350 = vmatpush1.bf16.msra.mxu0 %v2329
        %2351 = vmatprep.subr.bf16.mxu0 0
        %2352 = vmatpush1.bf16.msra.mxu0 %v2330
        %2353 = vmatprep.subr.bf16.mxu0 0
        %2354 = vmatpush1.bf16.msra.mxu0 %v2331
        %2355 = vmatprep.subr.bf16.mxu0 0
        %2356 = vmatpush1.bf16.msra.mxu0 %v2332
        %2357 = vmatprep.subr.bf16.mxu0 0
        %2358 = vmatpush1.bf16.msra.mxu0 0
        %2359 = vmatprep.subr.bf16.mxu0 0
        %2360 = vmatpush1.bf16.msra.mxu0 0
        %2361 = vmatprep.subr.bf16.mxu0 0
        %2362 = vmatpush1.bf16.msra.mxu0 0
        %2363 = vmatprep.subr.bf16.mxu0 0
        %2364 = vmatpush1.bf16.msra.mxu0 0
        %2365 = vmatprep.subr.bf16.mxu0 0
        %2366 = vmatpush1.bf16.msra.mxu0 0
        %2367 = vmatprep.subr.bf16.mxu0 0
        %2368 = vmatpush1.bf16.msra.mxu0 0
        %2369 = vmatprep.subr.bf16.mxu0 0
        %2370 = vmatpush1.bf16.msra.mxu0 0
        %2371 = vmatprep.subr.bf16.mxu0 0
        %2372 = vmatpush1.bf16.msra.mxu0 0
        %2373 = vmatprep.mubr.bf16.mxu0 0
        %2374 = vmatmul.mubr.bf16.gmra.mrb[0].mxu0 %v2275
        %v2375 = vpop.f32.mrb[0].mxu0
        %v2376 = vadd.f32 0.0, %v2375
        %v2377 = vpop.f32.mrb[0].mxu0
        %v2378 = vpop.f32.mrb[0].mxu0
        %v2379 = vadd.f32 0.0, %v2378
        %v2380 = vpop.f32.mrb[0].mxu0
        %2381 = vdwg.mxu0
        %v2382 = vadd.f32 %v2217, %v2376
        %v2383 = vadd.f32 %v2218, %v2379
        %s2384 = scalar_lea.vmem %s408, 176 [#allocation2]
        %v2385 = vld [vmem:[%s2384] sm:$0xff]
        %v2386 = vld [vmem:[%s2384 + $0x8] sm:$0xff]
        %v2389 = vunpack.c.l.b16 %v2385
        %v2390 = vunpack.c.h.b16 %v2385
        %v2391 = vunpack.c.l.b16 %v2386
        %v2392 = vunpack.c.h.b16 %v2386
        %v2393 = vpack.c.b16 %v2391, %v2389
        %v2394 = vpack.c.b16 %v2392, %v2390
        %2397 = vmatprep.subr.bf16.mxu0 0
        %2398 = vmatpush1.bf16.msra.mxu0 %v555
        %2399 = vmatprep.subr.bf16.mxu0 0
        %2400 = vmatpush1.bf16.msra.mxu0 %v556
        %2401 = vmatprep.subr.bf16.mxu0 0
        %2402 = vmatpush1.bf16.msra.mxu0 %v557
        %2403 = vmatprep.subr.bf16.mxu0 0
        %2404 = vmatpush1.bf16.msra.mxu0 %v558
        %2405 = vmatprep.subr.bf16.mxu0 0
        %2406 = vmatpush1.bf16.msra.mxu0 %v559
        %2407 = vmatprep.subr.bf16.mxu0 0
        %2408 = vmatpush1.bf16.msra.mxu0 %v560
        %2409 = vmatprep.subr.bf16.mxu0 0
        %2410 = vmatpush1.bf16.msra.mxu0 %v561
        %2411 = vmatprep.subr.bf16.mxu0 0
        %2412 = vmatpush1.bf16.msra.mxu0 %v562
        %2413 = vmatprep.subr.bf16.mxu0 0
        %2414 = vmatpush1.bf16.msra.mxu0 %v563
        %2415 = vmatprep.subr.bf16.mxu0 0
        %2416 = vmatpush1.bf16.msra.mxu0 %v564
        %2417 = vmatprep.subr.bf16.mxu0 0
        %2418 = vmatpush1.bf16.msra.mxu0 %v565
        %2419 = vmatprep.subr.bf16.mxu0 0
        %2420 = vmatpush1.bf16.msra.mxu0 %v566
        %2421 = vmatprep.subr.bf16.mxu0 0
        %2422 = vmatpush1.bf16.msra.mxu0 %v567
        %2423 = vmatprep.subr.bf16.mxu0 0
        %2424 = vmatpush1.bf16.msra.mxu0 %v568
        %2425 = vmatprep.subr.bf16.mxu0 0
        %2426 = vmatpush1.bf16.msra.mxu0 %v569
        %2427 = vmatprep.subr.bf16.mxu0 0
        %2428 = vmatpush1.bf16.msra.mxu0 %v570
        %2429 = vmatprep.mubr.bf16.mxu0 %v2394
        %2430 = vmatmul.mubr.bf16.gmra.mrb[0].mxu0 %v2393
        %v2431 = vpop.f32.mrb[0].mxu0
        %v2432 = vadd.f32 %v479, %v2431
        %v2433 = vpop.f32.mrb[0].mxu0
        %v2434 = vpop.f32.mrb[0].mxu0
        %v2435 = vadd.f32 %v479, %v2434
        %v2436 = vpop.f32.mrb[0].mxu0
        %2437 = vdwg.mxu0
        %v2438 = vmax.f32 %v2432, 0.0
        %v2439 = vmax.f32 %v2435, 0.0
        %v2440 = vpack.c.bf16 %v2439, %v2438
        %s2441 = scalar_lea.vmem %s3, 704
        %v2442 = vld [vmem:[%s2441] sm:$0xf]
        %v2443 = vld [vmem:[%s2441 + $0x4] sm:$0xf]
        %v2444 = vld [vmem:[%s2441 + $0x8] sm:$0xf]
        %v2445 = vld [vmem:[%s2441 + $0xc] sm:$0xf]
        %v2446 = vld [vmem:[%s2441 + $0x10] sm:$0xf]
        %v2447 = vld [vmem:[%s2441 + $0x14] sm:$0xf]
        %v2448 = vld [vmem:[%s2441 + $0x18] sm:$0xf]
        %v2449 = vld [vmem:[%s2441 + $0x1c] sm:$0xf]
        %v2450 = vld [vmem:[%s2441 + $0x20] sm:$0xf]
        %v2451 = vld [vmem:[%s2441 + $0x24] sm:$0xf]
        %v2452 = vld [vmem:[%s2441 + $0x28] sm:$0xf]
        %v2453 = vld [vmem:[%s2441 + $0x2c] sm:$0xf]
        %v2454 = vld [vmem:[%s2441 + $0x30] sm:$0xf]
        %v2455 = vld [vmem:[%s2441 + $0x34] sm:$0xf]
        %v2456 = vld [vmem:[%s2441 + $0x38] sm:$0xf]
        %v2457 = vld [vmem:[%s2441 + $0x3c] sm:$0xf]
        %v2474 = vunpack.c.l.b16 %v2442
        %v2475 = vunpack.c.l.b16 %v2443
        %v2476 = vunpack.c.l.b16 %v2444
        %v2477 = vunpack.c.l.b16 %v2445
        %v2478 = vunpack.c.l.b16 %v2446
        %v2479 = vunpack.c.l.b16 %v2447
        %v2480 = vunpack.c.l.b16 %v2448
        %v2481 = vunpack.c.l.b16 %v2449
        %v2482 = vunpack.c.l.b16 %v2450
        %v2483 = vunpack.c.l.b16 %v2451
        %v2484 = vunpack.c.l.b16 %v2452
        %v2485 = vunpack.c.l.b16 %v2453
        %v2486 = vunpack.c.l.b16 %v2454
        %v2487 = vunpack.c.l.b16 %v2455
        %v2488 = vunpack.c.l.b16 %v2456
        %v2489 = vunpack.c.l.b16 %v2457
        %v2490 = vpack.c.b16 %v2475, %v2474
        %v2491 = vpack.c.b16 %v2477, %v2476
        %v2492 = vpack.c.b16 %v2479, %v2478
        %v2493 = vpack.c.b16 %v2481, %v2480
        %v2494 = vpack.c.b16 %v2483, %v2482
        %v2495 = vpack.c.b16 %v2485, %v2484
        %v2496 = vpack.c.b16 %v2487, %v2486
        %v2497 = vpack.c.b16 %v2489, %v2488
        %2506 = vmatprep.subr.bf16.mxu0 0
        %2507 = vmatpush1.bf16.msra.mxu0 %v2490
        %2508 = vmatprep.subr.bf16.mxu0 0
        %2509 = vmatpush1.bf16.msra.mxu0 %v2491
        %2510 = vmatprep.subr.bf16.mxu0 0
        %2511 = vmatpush1.bf16.msra.mxu0 %v2492
        %2512 = vmatprep.subr.bf16.mxu0 0
        %2513 = vmatpush1.bf16.msra.mxu0 %v2493
        %2514 = vmatprep.subr.bf16.mxu0 0
        %2515 = vmatpush1.bf16.msra.mxu0 %v2494
        %2516 = vmatprep.subr.bf16.mxu0 0
        %2517 = vmatpush1.bf16.msra.mxu0 %v2495
        %2518 = vmatprep.subr.bf16.mxu0 0
        %2519 = vmatpush1.bf16.msra.mxu0 %v2496
        %2520 = vmatprep.subr.bf16.mxu0 0
        %2521 = vmatpush1.bf16.msra.mxu0 %v2497
        %2522 = vmatprep.subr.bf16.mxu0 0
        %2523 = vmatpush1.bf16.msra.mxu0 0
        %2524 = vmatprep.subr.bf16.mxu0 0
        %2525 = vmatpush1.bf16.msra.mxu0 0
        %2526 = vmatprep.subr.bf16.mxu0 0
        %2527 = vmatpush1.bf16.msra.mxu0 0
        %2528 = vmatprep.subr.bf16.mxu0 0
        %2529 = vmatpush1.bf16.msra.mxu0 0
        %2530 = vmatprep.subr.bf16.mxu0 0
        %2531 = vmatpush1.bf16.msra.mxu0 0
        %2532 = vmatprep.subr.bf16.mxu0 0
        %2533 = vmatpush1.bf16.msra.mxu0 0
        %2534 = vmatprep.subr.bf16.mxu0 0
        %2535 = vmatpush1.bf16.msra.mxu0 0
        %2536 = vmatprep.subr.bf16.mxu0 0
        %2537 = vmatpush1.bf16.msra.mxu0 0
        %2538 = vmatprep.mubr.bf16.mxu0 0
        %2539 = vmatmul.mubr.bf16.gmra.mrb[0].mxu0 %v2440
        %v2540 = vpop.f32.mrb[0].mxu0
        %v2541 = vadd.f32 0.0, %v2540
        %v2542 = vpop.f32.mrb[0].mxu0
        %v2543 = vpop.f32.mrb[0].mxu0
        %v2544 = vadd.f32 0.0, %v2543
        %v2545 = vpop.f32.mrb[0].mxu0
        %2546 = vdwg.mxu0
        %v2547 = vadd.f32 %v2382, %v2541
        %v2548 = vadd.f32 %v2383, %v2544
        %s2549 = scalar_lea.vmem %s408, 192 [#allocation2]
        %v2550 = vld [vmem:[%s2549] sm:$0xff]
        %v2551 = vld [vmem:[%s2549 + $0x8] sm:$0xff]
        %v2554 = vunpack.c.l.b16 %v2550
        %v2555 = vunpack.c.h.b16 %v2550
        %v2556 = vunpack.c.l.b16 %v2551
        %v2557 = vunpack.c.h.b16 %v2551
        %v2558 = vpack.c.b16 %v2556, %v2554
        %v2559 = vpack.c.b16 %v2557, %v2555
        %2562 = vmatprep.subr.bf16.mxu0 0
        %2563 = vmatpush1.bf16.msra.mxu0 %v555
        %2564 = vmatprep.subr.bf16.mxu0 0
        %2565 = vmatpush1.bf16.msra.mxu0 %v556
        %2566 = vmatprep.subr.bf16.mxu0 0
        %2567 = vmatpush1.bf16.msra.mxu0 %v557
        %2568 = vmatprep.subr.bf16.mxu0 0
        %2569 = vmatpush1.bf16.msra.mxu0 %v558
        %2570 = vmatprep.subr.bf16.mxu0 0
        %2571 = vmatpush1.bf16.msra.mxu0 %v559
        %2572 = vmatprep.subr.bf16.mxu0 0
        %2573 = vmatpush1.bf16.msra.mxu0 %v560
        %2574 = vmatprep.subr.bf16.mxu0 0
        %2575 = vmatpush1.bf16.msra.mxu0 %v561
        %2576 = vmatprep.subr.bf16.mxu0 0
        %2577 = vmatpush1.bf16.msra.mxu0 %v562
        %2578 = vmatprep.subr.bf16.mxu0 0
        %2579 = vmatpush1.bf16.msra.mxu0 %v563
        %2580 = vmatprep.subr.bf16.mxu0 0
        %2581 = vmatpush1.bf16.msra.mxu0 %v564
        %2582 = vmatprep.subr.bf16.mxu0 0
        %2583 = vmatpush1.bf16.msra.mxu0 %v565
        %2584 = vmatprep.subr.bf16.mxu0 0
        %2585 = vmatpush1.bf16.msra.mxu0 %v566
        %2586 = vmatprep.subr.bf16.mxu0 0
        %2587 = vmatpush1.bf16.msra.mxu0 %v567
        %2588 = vmatprep.subr.bf16.mxu0 0
        %2589 = vmatpush1.bf16.msra.mxu0 %v568
        %2590 = vmatprep.subr.bf16.mxu0 0
        %2591 = vmatpush1.bf16.msra.mxu0 %v569
        %2592 = vmatprep.subr.bf16.mxu0 0
        %2593 = vmatpush1.bf16.msra.mxu0 %v570
        %2594 = vmatprep.mubr.bf16.mxu0 %v2559
        %2595 = vmatmul.mubr.bf16.gmra.mrb[0].mxu0 %v2558
        %v2596 = vpop.f32.mrb[0].mxu0
        %v2597 = vadd.f32 %v479, %v2596
        %v2598 = vpop.f32.mrb[0].mxu0
        %v2599 = vpop.f32.mrb[0].mxu0
        %v2600 = vadd.f32 %v479, %v2599
        %v2601 = vpop.f32.mrb[0].mxu0
        %2602 = vdwg.mxu0
        %v2603 = vmax.f32 %v2597, 0.0
        %v2604 = vmax.f32 %v2600, 0.0
        %v2605 = vpack.c.bf16 %v2604, %v2603
        %s2606 = scalar_lea.vmem %s3, 768
        %v2607 = vld [vmem:[%s2606] sm:$0xf]
        %v2608 = vld [vmem:[%s2606 + $0x4] sm:$0xf]
        %v2609 = vld [vmem:[%s2606 + $0x8] sm:$0xf]
        %v2610 = vld [vmem:[%s2606 + $0xc] sm:$0xf]
        %v2611 = vld [vmem:[%s2606 + $0x10] sm:$0xf]
        %v2612 = vld [vmem:[%s2606 + $0x14] sm:$0xf]
        %v2613 = vld [vmem:[%s2606 + $0x18] sm:$0xf]
        %v2614 = vld [vmem:[%s2606 + $0x1c] sm:$0xf]
        %v2615 = vld [vmem:[%s2606 + $0x20] sm:$0xf]
        %v2616 = vld [vmem:[%s2606 + $0x24] sm:$0xf]
        %v2617 = vld [vmem:[%s2606 + $0x28] sm:$0xf]
        %v2618 = vld [vmem:[%s2606 + $0x2c] sm:$0xf]
        %v2619 = vld [vmem:[%s2606 + $0x30] sm:$0xf]
        %v2620 = vld [vmem:[%s2606 + $0x34] sm:$0xf]
        %v2621 = vld [vmem:[%s2606 + $0x38] sm:$0xf]
        %v2622 = vld [vmem:[%s2606 + $0x3c] sm:$0xf]
        %v2639 = vunpack.c.l.b16 %v2607
        %v2640 = vunpack.c.l.b16 %v2608
        %v2641 = vunpack.c.l.b16 %v2609
        %v2642 = vunpack.c.l.b16 %v2610
        %v2643 = vunpack.c.l.b16 %v2611
        %v2644 = vunpack.c.l.b16 %v2612
        %v2645 = vunpack.c.l.b16 %v2613
        %v2646 = vunpack.c.l.b16 %v2614
        %v2647 = vunpack.c.l.b16 %v2615
        %v2648 = vunpack.c.l.b16 %v2616
        %v2649 = vunpack.c.l.b16 %v2617
        %v2650 = vunpack.c.l.b16 %v2618
        %v2651 = vunpack.c.l.b16 %v2619
        %v2652 = vunpack.c.l.b16 %v2620
        %v2653 = vunpack.c.l.b16 %v2621
        %v2654 = vunpack.c.l.b16 %v2622
        %v2655 = vpack.c.b16 %v2640, %v2639
        %v2656 = vpack.c.b16 %v2642, %v2641
        %v2657 = vpack.c.b16 %v2644, %v2643
        %v2658 = vpack.c.b16 %v2646, %v2645
        %v2659 = vpack.c.b16 %v2648, %v2647
        %v2660 = vpack.c.b16 %v2650, %v2649
        %v2661 = vpack.c.b16 %v2652, %v2651
        %v2662 = vpack.c.b16 %v2654, %v2653
        %2671 = vmatprep.subr.bf16.mxu0 0
        %2672 = vmatpush1.bf16.msra.mxu0 %v2655
        %2673 = vmatprep.subr.bf16.mxu0 0
        %2674 = vmatpush1.bf16.msra.mxu0 %v2656
        %2675 = vmatprep.subr.bf16.mxu0 0
        %2676 = vmatpush1.bf16.msra.mxu0 %v2657
        %2677 = vmatprep.subr.bf16.mxu0 0
        %2678 = vmatpush1.bf16.msra.mxu0 %v2658
        %2679 = vmatprep.subr.bf16.mxu0 0
        %2680 = vmatpush1.bf16.msra.mxu0 %v2659
        %2681 = vmatprep.subr.bf16.mxu0 0
        %2682 = vmatpush1.bf16.msra.mxu0 %v2660
        %2683 = vmatprep.subr.bf16.mxu0 0
        %2684 = vmatpush1.bf16.msra.mxu0 %v2661
        %2685 = vmatprep.subr.bf16.mxu0 0
        %2686 = vmatpush1.bf16.msra.mxu0 %v2662
        %2687 = vmatprep.subr.bf16.mxu0 0
        %2688 = vmatpush1.bf16.msra.mxu0 0
        %2689 = vmatprep.subr.bf16.mxu0 0
        %2690 = vmatpush1.bf16.msra.mxu0 0
        %2691 = vmatprep.subr.bf16.mxu0 0
        %2692 = vmatpush1.bf16.msra.mxu0 0
        %2693 = vmatprep.subr.bf16.mxu0 0
        %2694 = vmatpush1.bf16.msra.mxu0 0
        %2695 = vmatprep.subr.bf16.mxu0 0
        %2696 = vmatpush1.bf16.msra.mxu0 0
        %2697 = vmatprep.subr.bf16.mxu0 0
        %2698 = vmatpush1.bf16.msra.mxu0 0
        %2699 = vmatprep.subr.bf16.mxu0 0
        %2700 = vmatpush1.bf16.msra.mxu0 0
        %2701 = vmatprep.subr.bf16.mxu0 0
        %2702 = vmatpush1.bf16.msra.mxu0 0
        %2703 = vmatprep.mubr.bf16.mxu0 0
        %2704 = vmatmul.mubr.bf16.gmra.mrb[0].mxu0 %v2605
        %v2705 = vpop.f32.mrb[0].mxu0
        %v2706 = vadd.f32 0.0, %v2705
        %v2707 = vpop.f32.mrb[0].mxu0
        %v2708 = vpop.f32.mrb[0].mxu0
        %v2709 = vadd.f32 0.0, %v2708
        %v2710 = vpop.f32.mrb[0].mxu0
        %2711 = vdwg.mxu0
        %v2712 = vadd.f32 %v2547, %v2706
        %v2713 = vadd.f32 %v2548, %v2709
        %s2714 = scalar_lea.vmem %s408, 208 [#allocation2]
        %v2715 = vld [vmem:[%s2714] sm:$0xff]
        %v2716 = vld [vmem:[%s2714 + $0x8] sm:$0xff]
        %v2719 = vunpack.c.l.b16 %v2715
        %v2720 = vunpack.c.h.b16 %v2715
        %v2721 = vunpack.c.l.b16 %v2716
        %v2722 = vunpack.c.h.b16 %v2716
        %v2723 = vpack.c.b16 %v2721, %v2719
        %v2724 = vpack.c.b16 %v2722, %v2720
        %2727 = vmatprep.subr.bf16.mxu0 0
        %2728 = vmatpush1.bf16.msra.mxu0 %v555
        %2729 = vmatprep.subr.bf16.mxu0 0
        %2730 = vmatpush1.bf16.msra.mxu0 %v556
        %2731 = vmatprep.subr.bf16.mxu0 0
        %2732 = vmatpush1.bf16.msra.mxu0 %v557
        %2733 = vmatprep.subr.bf16.mxu0 0
        %2734 = vmatpush1.bf16.msra.mxu0 %v558
        %2735 = vmatprep.subr.bf16.mxu0 0
        %2736 = vmatpush1.bf16.msra.mxu0 %v559
        %2737 = vmatprep.subr.bf16.mxu0 0
        %2738 = vmatpush1.bf16.msra.mxu0 %v560
        %2739 = vmatprep.subr.bf16.mxu0 0
        %2740 = vmatpush1.bf16.msra.mxu0 %v561
        %2741 = vmatprep.subr.bf16.mxu0 0
        %2742 = vmatpush1.bf16.msra.mxu0 %v562
        %2743 = vmatprep.subr.bf16.mxu0 0
        %2744 = vmatpush1.bf16.msra.mxu0 %v563
        %2745 = vmatprep.subr.bf16.mxu0 0
        %2746 = vmatpush1.bf16.msra.mxu0 %v564
        %2747 = vmatprep.subr.bf16.mxu0 0
        %2748 = vmatpush1.bf16.msra.mxu0 %v565
        %2749 = vmatprep.subr.bf16.mxu0 0
        %2750 = vmatpush1.bf16.msra.mxu0 %v566
        %2751 = vmatprep.subr.bf16.mxu0 0
        %2752 = vmatpush1.bf16.msra.mxu0 %v567
        %2753 = vmatprep.subr.bf16.mxu0 0
        %2754 = vmatpush1.bf16.msra.mxu0 %v568
        %2755 = vmatprep.subr.bf16.mxu0 0
        %2756 = vmatpush1.bf16.msra.mxu0 %v569
        %2757 = vmatprep.subr.bf16.mxu0 0
        %2758 = vmatpush1.bf16.msra.mxu0 %v570
        %2759 = vmatprep.mubr.bf16.mxu0 %v2724
        %2760 = vmatmul.mubr.bf16.gmra.mrb[0].mxu0 %v2723
        %v2761 = vpop.f32.mrb[0].mxu0
        %v2762 = vadd.f32 %v479, %v2761
        %v2763 = vpop.f32.mrb[0].mxu0
        %v2764 = vpop.f32.mrb[0].mxu0
        %v2765 = vadd.f32 %v479, %v2764
        %v2766 = vpop.f32.mrb[0].mxu0
        %2767 = vdwg.mxu0
        %v2768 = vmax.f32 %v2762, 0.0
        %v2769 = vmax.f32 %v2765, 0.0
        %v2770 = vpack.c.bf16 %v2769, %v2768
        %s2771 = scalar_lea.vmem %s3, 832
        %v2772 = vld [vmem:[%s2771] sm:$0xf]
        %v2773 = vld [vmem:[%s2771 + $0x4] sm:$0xf]
        %v2774 = vld [vmem:[%s2771 + $0x8] sm:$0xf]
        %v2775 = vld [vmem:[%s2771 + $0xc] sm:$0xf]
        %v2776 = vld [vmem:[%s2771 + $0x10] sm:$0xf]
        %v2777 = vld [vmem:[%s2771 + $0x14] sm:$0xf]
        %v2778 = vld [vmem:[%s2771 + $0x18] sm:$0xf]
        %v2779 = vld [vmem:[%s2771 + $0x1c] sm:$0xf]
        %v2780 = vld [vmem:[%s2771 + $0x20] sm:$0xf]
        %v2781 = vld [vmem:[%s2771 + $0x24] sm:$0xf]
        %v2782 = vld [vmem:[%s2771 + $0x28] sm:$0xf]
        %v2783 = vld [vmem:[%s2771 + $0x2c] sm:$0xf]
        %v2784 = vld [vmem:[%s2771 + $0x30] sm:$0xf]
        %v2785 = vld [vmem:[%s2771 + $0x34] sm:$0xf]
        %v2786 = vld [vmem:[%s2771 + $0x38] sm:$0xf]
        %v2787 = vld [vmem:[%s2771 + $0x3c] sm:$0xf]
        %v2804 = vunpack.c.l.b16 %v2772
        %v2805 = vunpack.c.l.b16 %v2773
        %v2806 = vunpack.c.l.b16 %v2774
        %v2807 = vunpack.c.l.b16 %v2775
        %v2808 = vunpack.c.l.b16 %v2776
        %v2809 = vunpack.c.l.b16 %v2777
        %v2810 = vunpack.c.l.b16 %v2778
        %v2811 = vunpack.c.l.b16 %v2779
        %v2812 = vunpack.c.l.b16 %v2780
        %v2813 = vunpack.c.l.b16 %v2781
        %v2814 = vunpack.c.l.b16 %v2782
        %v2815 = vunpack.c.l.b16 %v2783
        %v2816 = vunpack.c.l.b16 %v2784
        %v2817 = vunpack.c.l.b16 %v2785
        %v2818 = vunpack.c.l.b16 %v2786
        %v2819 = vunpack.c.l.b16 %v2787
        %v2820 = vpack.c.b16 %v2805, %v2804
        %v2821 = vpack.c.b16 %v2807, %v2806
        %v2822 = vpack.c.b16 %v2809, %v2808
        %v2823 = vpack.c.b16 %v2811, %v2810
        %v2824 = vpack.c.b16 %v2813, %v2812
        %v2825 = vpack.c.b16 %v2815, %v2814
        %v2826 = vpack.c.b16 %v2817, %v2816
        %v2827 = vpack.c.b16 %v2819, %v2818
        %2836 = vmatprep.subr.bf16.mxu0 0
        %2837 = vmatpush1.bf16.msra.mxu0 %v2820
        %2838 = vmatprep.subr.bf16.mxu0 0
        %2839 = vmatpush1.bf16.msra.mxu0 %v2821
        %2840 = vmatprep.subr.bf16.mxu0 0
        %2841 = vmatpush1.bf16.msra.mxu0 %v2822
        %2842 = vmatprep.subr.bf16.mxu0 0
        %2843 = vmatpush1.bf16.msra.mxu0 %v2823
        %2844 = vmatprep.subr.bf16.mxu0 0
        %2845 = vmatpush1.bf16.msra.mxu0 %v2824
        %2846 = vmatprep.subr.bf16.mxu0 0
        %2847 = vmatpush1.bf16.msra.mxu0 %v2825
        %2848 = vmatprep.subr.bf16.mxu0 0
        %2849 = vmatpush1.bf16.msra.mxu0 %v2826
        %2850 = vmatprep.subr.bf16.mxu0 0
        %2851 = vmatpush1.bf16.msra.mxu0 %v2827
        %2852 = vmatprep.subr.bf16.mxu0 0
        %2853 = vmatpush1.bf16.msra.mxu0 0
        %2854 = vmatprep.subr.bf16.mxu0 0
        %2855 = vmatpush1.bf16.msra.mxu0 0
        %2856 = vmatprep.subr.bf16.mxu0 0
        %2857 = vmatpush1.bf16.msra.mxu0 0
        %2858 = vmatprep.subr.bf16.mxu0 0
        %2859 = vmatpush1.bf16.msra.mxu0 0
        %2860 = vmatprep.subr.bf16.mxu0 0
        %2861 = vmatpush1.bf16.msra.mxu0 0
        %2862 = vmatprep.subr.bf16.mxu0 0
        %2863 = vmatpush1.bf16.msra.mxu0 0
        %2864 = vmatprep.subr.bf16.mxu0 0
        %2865 = vmatpush1.bf16.msra.mxu0 0
        %2866 = vmatprep.subr.bf16.mxu0 0
        %2867 = vmatpush1.bf16.msra.mxu0 0
        %2868 = vmatprep.mubr.bf16.mxu0 0
        %2869 = vmatmul.mubr.bf16.gmra.mrb[0].mxu0 %v2770
        %v2870 = vpop.f32.mrb[0].mxu0
        %v2871 = vadd.f32 0.0, %v2870
        %v2872 = vpop.f32.mrb[0].mxu0
        %v2873 = vpop.f32.mrb[0].mxu0
        %v2874 = vadd.f32 0.0, %v2873
        %v2875 = vpop.f32.mrb[0].mxu0
        %2876 = vdwg.mxu0
        %v2877 = vadd.f32 %v2712, %v2871
        %v2878 = vadd.f32 %v2713, %v2874
        %s2879 = scalar_lea.vmem %s408, 224 [#allocation2]
        %v2880 = vld [vmem:[%s2879] sm:$0xff]
        %v2881 = vld [vmem:[%s2879 + $0x8] sm:$0xff]
        %v2884 = vunpack.c.l.b16 %v2880
        %v2885 = vunpack.c.h.b16 %v2880
        %v2886 = vunpack.c.l.b16 %v2881
        %v2887 = vunpack.c.h.b16 %v2881
        %v2888 = vpack.c.b16 %v2886, %v2884
        %v2889 = vpack.c.b16 %v2887, %v2885
        %2892 = vmatprep.subr.bf16.mxu0 0
        %2893 = vmatpush1.bf16.msra.mxu0 %v555
        %2894 = vmatprep.subr.bf16.mxu0 0
        %2895 = vmatpush1.bf16.msra.mxu0 %v556
        %2896 = vmatprep.subr.bf16.mxu0 0
        %2897 = vmatpush1.bf16.msra.mxu0 %v557
        %2898 = vmatprep.subr.bf16.mxu0 0
        %2899 = vmatpush1.bf16.msra.mxu0 %v558
        %2900 = vmatprep.subr.bf16.mxu0 0
        %2901 = vmatpush1.bf16.msra.mxu0 %v559
        %2902 = vmatprep.subr.bf16.mxu0 0
        %2903 = vmatpush1.bf16.msra.mxu0 %v560
        %2904 = vmatprep.subr.bf16.mxu0 0
        %2905 = vmatpush1.bf16.msra.mxu0 %v561
        %2906 = vmatprep.subr.bf16.mxu0 0
        %2907 = vmatpush1.bf16.msra.mxu0 %v562
        %2908 = vmatprep.subr.bf16.mxu0 0
        %2909 = vmatpush1.bf16.msra.mxu0 %v563
        %2910 = vmatprep.subr.bf16.mxu0 0
        %2911 = vmatpush1.bf16.msra.mxu0 %v564
        %2912 = vmatprep.subr.bf16.mxu0 0
        %2913 = vmatpush1.bf16.msra.mxu0 %v565
        %2914 = vmatprep.subr.bf16.mxu0 0
        %2915 = vmatpush1.bf16.msra.mxu0 %v566
        %2916 = vmatprep.subr.bf16.mxu0 0
        %2917 = vmatpush1.bf16.msra.mxu0 %v567
        %2918 = vmatprep.subr.bf16.mxu0 0
        %2919 = vmatpush1.bf16.msra.mxu0 %v568
        %2920 = vmatprep.subr.bf16.mxu0 0
        %2921 = vmatpush1.bf16.msra.mxu0 %v569
        %2922 = vmatprep.subr.bf16.mxu0 0
        %2923 = vmatpush1.bf16.msra.mxu0 %v570
        %2924 = vmatprep.mubr.bf16.mxu0 %v2889
        %2925 = vmatmul.mubr.bf16.gmra.mrb[0].mxu0 %v2888
        %v2926 = vpop.f32.mrb[0].mxu0
        %v2927 = vadd.f32 %v479, %v2926
        %v2928 = vpop.f32.mrb[0].mxu0
        %v2929 = vpop.f32.mrb[0].mxu0
        %v2930 = vadd.f32 %v479, %v2929
        %v2931 = vpop.f32.mrb[0].mxu0
        %2932 = vdwg.mxu0
        %v2933 = vmax.f32 %v2927, 0.0
        %v2934 = vmax.f32 %v2930, 0.0
        %v2935 = vpack.c.bf16 %v2934, %v2933
        %s2936 = scalar_lea.vmem %s3, 896
        %v2937 = vld [vmem:[%s2936] sm:$0xf]
        %v2938 = vld [vmem:[%s2936 + $0x4] sm:$0xf]
        %v2939 = vld [vmem:[%s2936 + $0x8] sm:$0xf]
        %v2940 = vld [vmem:[%s2936 + $0xc] sm:$0xf]
        %v2941 = vld [vmem:[%s2936 + $0x10] sm:$0xf]
        %v2942 = vld [vmem:[%s2936 + $0x14] sm:$0xf]
        %v2943 = vld [vmem:[%s2936 + $0x18] sm:$0xf]
        %v2944 = vld [vmem:[%s2936 + $0x1c] sm:$0xf]
        %v2945 = vld [vmem:[%s2936 + $0x20] sm:$0xf]
        %v2946 = vld [vmem:[%s2936 + $0x24] sm:$0xf]
        %v2947 = vld [vmem:[%s2936 + $0x28] sm:$0xf]
        %v2948 = vld [vmem:[%s2936 + $0x2c] sm:$0xf]
        %v2949 = vld [vmem:[%s2936 + $0x30] sm:$0xf]
        %v2950 = vld [vmem:[%s2936 + $0x34] sm:$0xf]
        %v2951 = vld [vmem:[%s2936 + $0x38] sm:$0xf]
        %v2952 = vld [vmem:[%s2936 + $0x3c] sm:$0xf]
        %v2969 = vunpack.c.l.b16 %v2937
        %v2970 = vunpack.c.l.b16 %v2938
        %v2971 = vunpack.c.l.b16 %v2939
        %v2972 = vunpack.c.l.b16 %v2940
        %v2973 = vunpack.c.l.b16 %v2941
        %v2974 = vunpack.c.l.b16 %v2942
        %v2975 = vunpack.c.l.b16 %v2943
        %v2976 = vunpack.c.l.b16 %v2944
        %v2977 = vunpack.c.l.b16 %v2945
        %v2978 = vunpack.c.l.b16 %v2946
        %v2979 = vunpack.c.l.b16 %v2947
        %v2980 = vunpack.c.l.b16 %v2948
        %v2981 = vunpack.c.l.b16 %v2949
        %v2982 = vunpack.c.l.b16 %v2950
        %v2983 = vunpack.c.l.b16 %v2951
        %v2984 = vunpack.c.l.b16 %v2952
        %v2985 = vpack.c.b16 %v2970, %v2969
        %v2986 = vpack.c.b16 %v2972, %v2971
        %v2987 = vpack.c.b16 %v2974, %v2973
        %v2988 = vpack.c.b16 %v2976, %v2975
        %v2989 = vpack.c.b16 %v2978, %v2977
        %v2990 = vpack.c.b16 %v2980, %v2979
        %v2991 = vpack.c.b16 %v2982, %v2981
        %v2992 = vpack.c.b16 %v2984, %v2983
        %3001 = vmatprep.subr.bf16.mxu0 0
        %3002 = vmatpush1.bf16.msra.mxu0 %v2985
        %3003 = vmatprep.subr.bf16.mxu0 0
        %3004 = vmatpush1.bf16.msra.mxu0 %v2986
        %3005 = vmatprep.subr.bf16.mxu0 0
        %3006 = vmatpush1.bf16.msra.mxu0 %v2987
        %3007 = vmatprep.subr.bf16.mxu0 0
        %3008 = vmatpush1.bf16.msra.mxu0 %v2988
        %3009 = vmatprep.subr.bf16.mxu0 0
        %3010 = vmatpush1.bf16.msra.mxu0 %v2989
        %3011 = vmatprep.subr.bf16.mxu0 0
        %3012 = vmatpush1.bf16.msra.mxu0 %v2990
        %3013 = vmatprep.subr.bf16.mxu0 0
        %3014 = vmatpush1.bf16.msra.mxu0 %v2991
        %3015 = vmatprep.subr.bf16.mxu0 0
        %3016 = vmatpush1.bf16.msra.mxu0 %v2992
        %3017 = vmatprep.subr.bf16.mxu0 0
        %3018 = vmatpush1.bf16.msra.mxu0 0
        %3019 = vmatprep.subr.bf16.mxu0 0
        %3020 = vmatpush1.bf16.msra.mxu0 0
        %3021 = vmatprep.subr.bf16.mxu0 0
        %3022 = vmatpush1.bf16.msra.mxu0 0
        %3023 = vmatprep.subr.bf16.mxu0 0
        %3024 = vmatpush1.bf16.msra.mxu0 0
        %3025 = vmatprep.subr.bf16.mxu0 0
        %3026 = vmatpush1.bf16.msra.mxu0 0
        %3027 = vmatprep.subr.bf16.mxu0 0
        %3028 = vmatpush1.bf16.msra.mxu0 0
        %3029 = vmatprep.subr.bf16.mxu0 0
        %3030 = vmatpush1.bf16.msra.mxu0 0
        %3031 = vmatprep.subr.bf16.mxu0 0
        %3032 = vmatpush1.bf16.msra.mxu0 0
        %3033 = vmatprep.mubr.bf16.mxu0 0
        %3034 = vmatmul.mubr.bf16.gmra.mrb[0].mxu0 %v2935
        %v3035 = vpop.f32.mrb[0].mxu0
        %v3036 = vadd.f32 0.0, %v3035
        %v3037 = vpop.f32.mrb[0].mxu0
        %v3038 = vpop.f32.mrb[0].mxu0
        %v3039 = vadd.f32 0.0, %v3038
        %v3040 = vpop.f32.mrb[0].mxu0
        %3041 = vdwg.mxu0
        %v3042 = vadd.f32 %v2877, %v3036
        %v3043 = vadd.f32 %v2878, %v3039
        %s3044 = scalar_lea.vmem %s408, 240 [#allocation2]
        %v3045 = vld [vmem:[%s3044] sm:$0xff]
        %v3046 = vld [vmem:[%s3044 + $0x8] sm:$0xff]
        %v3049 = vunpack.c.l.b16 %v3045
        %v3050 = vunpack.c.h.b16 %v3045
        %v3051 = vunpack.c.l.b16 %v3046
        %v3052 = vunpack.c.h.b16 %v3046
        %v3053 = vpack.c.b16 %v3051, %v3049
        %v3054 = vpack.c.b16 %v3052, %v3050
        %3057 = vmatprep.subr.bf16.mxu0 0
        %3058 = vmatpush1.bf16.msra.mxu0 %v555
        %3059 = vmatprep.subr.bf16.mxu0 0
        %3060 = vmatpush1.bf16.msra.mxu0 %v556
        %3061 = vmatprep.subr.bf16.mxu0 0
        %3062 = vmatpush1.bf16.msra.mxu0 %v557
        %3063 = vmatprep.subr.bf16.mxu0 0
        %3064 = vmatpush1.bf16.msra.mxu0 %v558
        %3065 = vmatprep.subr.bf16.mxu0 0
        %3066 = vmatpush1.bf16.msra.mxu0 %v559
        %3067 = vmatprep.subr.bf16.mxu0 0
        %3068 = vmatpush1.bf16.msra.mxu0 %v560
        %3069 = vmatprep.subr.bf16.mxu0 0
        %3070 = vmatpush1.bf16.msra.mxu0 %v561
        %3071 = vmatprep.subr.bf16.mxu0 0
        %3072 = vmatpush1.bf16.msra.mxu0 %v562
        %3073 = vmatprep.subr.bf16.mxu0 0
        %3074 = vmatpush1.bf16.msra.mxu0 %v563
        %3075 = vmatprep.subr.bf16.mxu0 0
        %3076 = vmatpush1.bf16.msra.mxu0 %v564
        %3077 = vmatprep.subr.bf16.mxu0 0
        %3078 = vmatpush1.bf16.msra.mxu0 %v565
        %3079 = vmatprep.subr.bf16.mxu0 0
        %3080 = vmatpush1.bf16.msra.mxu0 %v566
        %3081 = vmatprep.subr.bf16.mxu0 0
        %3082 = vmatpush1.bf16.msra.mxu0 %v567
        %3083 = vmatprep.subr.bf16.mxu0 0
        %3084 = vmatpush1.bf16.msra.mxu0 %v568
        %3085 = vmatprep.subr.bf16.mxu0 0
        %3086 = vmatpush1.bf16.msra.mxu0 %v569
        %3087 = vmatprep.subr.bf16.mxu0 0
        %3088 = vmatpush1.bf16.msra.mxu0 %v570
        %3089 = vmatprep.mubr.bf16.mxu0 %v3054
        %3090 = vmatmul.mubr.bf16.gmra.mrb[0].mxu0 %v3053
        %v3091 = vpop.f32.mrb[0].mxu0
        %v3092 = vadd.f32 %v479, %v3091
        %v3093 = vpop.f32.mrb[0].mxu0
        %v3094 = vpop.f32.mrb[0].mxu0
        %v3095 = vadd.f32 %v479, %v3094
        %v3096 = vpop.f32.mrb[0].mxu0
        %3097 = vdwg.mxu0
        %v3098 = vmax.f32 %v3092, 0.0
        %v3099 = vmax.f32 %v3095, 0.0
        %v3100 = vpack.c.bf16 %v3099, %v3098
        %s3101 = scalar_lea.vmem %s3, 960
        %v3102 = vld [vmem:[%s3101] sm:$0xf]
        %v3103 = vld [vmem:[%s3101 + $0x4] sm:$0xf]
        %v3104 = vld [vmem:[%s3101 + $0x8] sm:$0xf]
        %v3105 = vld [vmem:[%s3101 + $0xc] sm:$0xf]
        %v3106 = vld [vmem:[%s3101 + $0x10] sm:$0xf]
        %v3107 = vld [vmem:[%s3101 + $0x14] sm:$0xf]
        %v3108 = vld [vmem:[%s3101 + $0x18] sm:$0xf]
        %v3109 = vld [vmem:[%s3101 + $0x1c] sm:$0xf]
        %v3110 = vld [vmem:[%s3101 + $0x20] sm:$0xf]
        %v3111 = vld [vmem:[%s3101 + $0x24] sm:$0xf]
        %v3112 = vld [vmem:[%s3101 + $0x28] sm:$0xf]
        %v3113 = vld [vmem:[%s3101 + $0x2c] sm:$0xf]
        %v3114 = vld [vmem:[%s3101 + $0x30] sm:$0xf]
        %v3115 = vld [vmem:[%s3101 + $0x34] sm:$0xf]
        %v3116 = vld [vmem:[%s3101 + $0x38] sm:$0xf]
        %v3117 = vld [vmem:[%s3101 + $0x3c] sm:$0xf]
        %v3134 = vunpack.c.l.b16 %v3102
        %v3135 = vunpack.c.l.b16 %v3103
        %v3136 = vunpack.c.l.b16 %v3104
        %v3137 = vunpack.c.l.b16 %v3105
        %v3138 = vunpack.c.l.b16 %v3106
        %v3139 = vunpack.c.l.b16 %v3107
        %v3140 = vunpack.c.l.b16 %v3108
        %v3141 = vunpack.c.l.b16 %v3109
        %v3142 = vunpack.c.l.b16 %v3110
        %v3143 = vunpack.c.l.b16 %v3111
        %v3144 = vunpack.c.l.b16 %v3112
        %v3145 = vunpack.c.l.b16 %v3113
        %v3146 = vunpack.c.l.b16 %v3114
        %v3147 = vunpack.c.l.b16 %v3115
        %v3148 = vunpack.c.l.b16 %v3116
        %v3149 = vunpack.c.l.b16 %v3117
        %v3150 = vpack.c.b16 %v3135, %v3134
        %v3151 = vpack.c.b16 %v3137, %v3136
        %v3152 = vpack.c.b16 %v3139, %v3138
        %v3153 = vpack.c.b16 %v3141, %v3140
        %v3154 = vpack.c.b16 %v3143, %v3142
        %v3155 = vpack.c.b16 %v3145, %v3144
        %v3156 = vpack.c.b16 %v3147, %v3146
        %v3157 = vpack.c.b16 %v3149, %v3148
        %3166 = vmatprep.subr.bf16.mxu0 0
        %3167 = vmatpush1.bf16.msra.mxu0 %v3150
        %3168 = vmatprep.subr.bf16.mxu0 0
        %3169 = vmatpush1.bf16.msra.mxu0 %v3151
        %3170 = vmatprep.subr.bf16.mxu0 0
        %3171 = vmatpush1.bf16.msra.mxu0 %v3152
        %3172 = vmatprep.subr.bf16.mxu0 0
        %3173 = vmatpush1.bf16.msra.mxu0 %v3153
        %3174 = vmatprep.subr.bf16.mxu0 0
        %3175 = vmatpush1.bf16.msra.mxu0 %v3154
        %3176 = vmatprep.subr.bf16.mxu0 0
        %3177 = vmatpush1.bf16.msra.mxu0 %v3155
        %3178 = vmatprep.subr.bf16.mxu0 0
        %3179 = vmatpush1.bf16.msra.mxu0 %v3156
        %3180 = vmatprep.subr.bf16.mxu0 0
        %3181 = vmatpush1.bf16.msra.mxu0 %v3157
        %3182 = vmatprep.subr.bf16.mxu0 0
        %3183 = vmatpush1.bf16.msra.mxu0 0
        %3184 = vmatprep.subr.bf16.mxu0 0
        %3185 = vmatpush1.bf16.msra.mxu0 0
        %3186 = vmatprep.subr.bf16.mxu0 0
        %3187 = vmatpush1.bf16.msra.mxu0 0
        %3188 = vmatprep.subr.bf16.mxu0 0
        %3189 = vmatpush1.bf16.msra.mxu0 0
        %3190 = vmatprep.subr.bf16.mxu0 0
        %3191 = vmatpush1.bf16.msra.mxu0 0
        %3192 = vmatprep.subr.bf16.mxu0 0
        %3193 = vmatpush1.bf16.msra.mxu0 0
        %3194 = vmatprep.subr.bf16.mxu0 0
        %3195 = vmatpush1.bf16.msra.mxu0 0
        %3196 = vmatprep.subr.bf16.mxu0 0
        %3197 = vmatpush1.bf16.msra.mxu0 0
        %3198 = vmatprep.mubr.bf16.mxu0 0
        %3199 = vmatmul.mubr.bf16.gmra.mrb[0].mxu0 %v3100
        %v3200 = vpop.f32.mrb[0].mxu0
        %v3201 = vadd.f32 0.0, %v3200
        %v3202 = vpop.f32.mrb[0].mxu0
        %v3203 = vpop.f32.mrb[0].mxu0
        %v3204 = vadd.f32 0.0, %v3203
        %v3205 = vpop.f32.mrb[0].mxu0
        %3206 = vdwg.mxu0
        %v3207 = vadd.f32 %v3042, %v3201
        %v3208 = vadd.f32 %v3043, %v3204
        %v3209 = vld [vmem:[%s4] sm:$0x1]
        %v3211 = vlaneseq
        %v3212 = vshrl.u32 %v3211, 7
        %v3213 = vsub.s32 0, %v3212
        %v3214 = vrot.slane %v3209, %v3213
        %v3216 = vadd.f32 %v3207, %v3214
        %v3217 = vadd.f32 %v3208, %v3214
        %v3218 = vmax.f32 %v3216, 0.0
        %v3219 = vmax.f32 %v3217, 0.0
        %v3220 = vpack.c.bf16 %v3219, %v3218
        %v3221 = vld [vmem:[%s5] sm:$0xf]
        %v3222 = vld [vmem:[%s5 + $0x4] sm:$0xf]
        %v3223 = vld [vmem:[%s5 + $0x8] sm:$0xf]
        %v3224 = vld [vmem:[%s5 + $0xc] sm:$0xf]
        %v3225 = vld [vmem:[%s5 + $0x10] sm:$0xf]
        %v3226 = vld [vmem:[%s5 + $0x14] sm:$0xf]
        %v3227 = vld [vmem:[%s5 + $0x18] sm:$0xf]
        %v3228 = vld [vmem:[%s5 + $0x1c] sm:$0xf]
        %v3229 = vld [vmem:[%s5 + $0x20] sm:$0xf]
        %v3230 = vld [vmem:[%s5 + $0x24] sm:$0xf]
        %v3231 = vld [vmem:[%s5 + $0x28] sm:$0xf]
        %v3232 = vld [vmem:[%s5 + $0x2c] sm:$0xf]
        %v3233 = vld [vmem:[%s5 + $0x30] sm:$0xf]
        %v3234 = vld [vmem:[%s5 + $0x34] sm:$0xf]
        %v3235 = vld [vmem:[%s5 + $0x38] sm:$0xf]
        %v3236 = vld [vmem:[%s5 + $0x3c] sm:$0xf]
        %v3237 = vld [vmem:[%s6] sm:$0x1]
        %v3239 = vlaneseq
        %v3240 = vshrl.u32 %v3239, 7
        %v3241 = vsub.s32 0, %v3240
        %v3242 = vrot.slane %v3237, %v3241
        %v3260 = vunpack.c.l.b16 %v3221
        %v3261 = vunpack.c.l.b16 %v3222
        %v3262 = vunpack.c.l.b16 %v3223
        %v3263 = vunpack.c.l.b16 %v3224
        %v3264 = vunpack.c.l.b16 %v3225
        %v3265 = vunpack.c.l.b16 %v3226
        %v3266 = vunpack.c.l.b16 %v3227
        %v3267 = vunpack.c.l.b16 %v3228
        %v3268 = vunpack.c.l.b16 %v3229
        %v3269 = vunpack.c.l.b16 %v3230
        %v3270 = vunpack.c.l.b16 %v3231
        %v3271 = vunpack.c.l.b16 %v3232
        %v3272 = vunpack.c.l.b16 %v3233
        %v3273 = vunpack.c.l.b16 %v3234
        %v3274 = vunpack.c.l.b16 %v3235
        %v3275 = vunpack.c.l.b16 %v3236
        %v3276 = vpack.c.b16 %v3261, %v3260
        %v3277 = vpack.c.b16 %v3263, %v3262
        %v3278 = vpack.c.b16 %v3265, %v3264
        %v3279 = vpack.c.b16 %v3267, %v3266
        %v3280 = vpack.c.b16 %v3269, %v3268
        %v3281 = vpack.c.b16 %v3271, %v3270
        %v3282 = vpack.c.b16 %v3273, %v3272
        %v3283 = vpack.c.b16 %v3275, %v3274
        %3292 = vmatprep.subr.bf16.mxu0 0
        %3293 = vmatpush1.bf16.msra.mxu0 %v3276
        %3294 = vmatprep.subr.bf16.mxu0 0
        %3295 = vmatpush1.bf16.msra.mxu0 %v3277
        %3296 = vmatprep.subr.bf16.mxu0 0
        %3297 = vmatpush1.bf16.msra.mxu0 %v3278
        %3298 = vmatprep.subr.bf16.mxu0 0
        %3299 = vmatpush1.bf16.msra.mxu0 %v3279
        %3300 = vmatprep.subr.bf16.mxu0 0
        %3301 = vmatpush1.bf16.msra.mxu0 %v3280
        %3302 = vmatprep.subr.bf16.mxu0 0
        %3303 = vmatpush1.bf16.msra.mxu0 %v3281
        %3304 = vmatprep.subr.bf16.mxu0 0
        %3305 = vmatpush1.bf16.msra.mxu0 %v3282
        %3306 = vmatprep.subr.bf16.mxu0 0
        %3307 = vmatpush1.bf16.msra.mxu0 %v3283
        %3308 = vmatprep.subr.bf16.mxu0 0
        %3309 = vmatpush1.bf16.msra.mxu0 0
        %3310 = vmatprep.subr.bf16.mxu0 0
        %3311 = vmatpush1.bf16.msra.mxu0 0
        %3312 = vmatprep.subr.bf16.mxu0 0
        %3313 = vmatpush1.bf16.msra.mxu0 0
        %3314 = vmatprep.subr.bf16.mxu0 0
        %3315 = vmatpush1.bf16.msra.mxu0 0
        %3316 = vmatprep.subr.bf16.mxu0 0
        %3317 = vmatpush1.bf16.msra.mxu0 0
        %3318 = vmatprep.subr.bf16.mxu0 0
        %3319 = vmatpush1.bf16.msra.mxu0 0
        %3320 = vmatprep.subr.bf16.mxu0 0
        %3321 = vmatpush1.bf16.msra.mxu0 0
        %3322 = vmatprep.subr.bf16.mxu0 0
        %3323 = vmatpush1.bf16.msra.mxu0 0
        %3324 = vmatprep.mubr.bf16.mxu0 0
        %3325 = vmatmul.mubr.bf16.gmra.mrb[0].mxu0 %v3220
        %v3326 = vpop.f32.mrb[0].mxu0
        %v3327 = vadd.f32 %v3242, %v3326
        %v3328 = vpop.f32.mrb[0].mxu0
        %v3329 = vpop.f32.mrb[0].mxu0
        %v3330 = vadd.f32 %v3242, %v3329
        %v3331 = vpop.f32.mrb[0].mxu0
        %3332 = vdwg.mxu0
        %3333 = vst [vmem:[%s436] sm:$0xff] %v3327
        %3334 = vst [vmem:[%s436 + $0x8] sm:$0xff] %v3330
        %s3335 = sand.u32 %s181, 1
        %s3336 = scalar_lea.sflag [#allocation4], %s3335
        %s3337 = sand.u32 %s181, 1
        %s3338 = smul.addr %s3337, 16
        %s3339 = scalar_lea.vmem [#allocation3], %s3338
        // Predicated region
        $region87: #{small_patch_embed_forward.1} parent=81 // pred_check
          %p3340 = pneg %p191
        $region88: #{small_patch_embed_forward.1} parent=81 // pred_check_branch
          %3342 = sbr.rel (%p3340) target = $region90
        $region89: #{small_patch_embed_forward.1} parent=81 // pred_region
          %s3343 = smul.u32 2, %s21
          %s3345 = ssub.s32 256, 256
          %3346 = vsyncadd %s3336, %s3345
          %s3347 = smul.addr %s3343, 128
          %s3348 = scalar_lea.hbm %s7, %s3347
          %s3349 = sshll.u32 %s3339, 4
          %s3350 = int_to_ptr.vmem [resolvable:$true] %s3349
          %3355 = dma.vmem_to_hbm [thread:$0]  %s3350, 256, %s3348, %s3336, 128, 128, 8
        $region90: #{small_patch_embed_forward.1} parent=81 // pred_fallthru
          _
      $region82: #{small_patch_embed_forward.1} parent=5 // pred_fallthru
        _
      %p3356 = scmp.le.s32.totalorder 2, %s16
      // Predicated region
      $region91: #{small_patch_embed_forward.1} parent=5 // pred_check
        %p3357 = pneg %p3356
      $region92: #{small_patch_embed_forward.1} parent=5 // pred_check_branch
        %3359 = sbr.rel (%p3357) target = $region94
      $region93: #{small_patch_embed_forward.1} parent=5 // pred_region
        %s3360 = ssub.s32 %s16, 2
        // Predicated region
        $region95: #{small_patch_embed_forward.1} parent=93 // pred_check
          %p3361 = pneg %p197
        $region96: #{small_patch_embed_forward.1} parent=93 // pred_check_branch
          %3363 = sbr.rel (%p3361) target = $region98
        $region97: #{small_patch_embed_forward.1} parent=93 // pred_region
          %s3364 = sand.u32 %s182, 1
          %s3365 = scalar_lea.sflag [#allocation4], %s3364
          %s3366 = sand.u32 %s182, 1
          %s3367 = smul.addr %s3366, 16
          %s3368 = scalar_lea.vmem [#allocation3], %s3367
          %3369 = dma.done %s3365, 256
        $region98: #{small_patch_embed_forward.1} parent=93 // pred_fallthru
          _
      $region94: #{small_patch_embed_forward.1} parent=5 // pred_fallthru
        _
    $region6: #{small_patch_embed_forward.1} parent=1 // loop_footer
      %s20 = sadd.s32 1, %s16
    $region7: #{small_patch_embed_forward.1} parent=1 // loop_footer_branch
      %15 = sbr.rel target = $region3
    $region8: #{small_patch_embed_forward.1} parent=1 // loop_exit
      _
    %3370 = vsyncpa [#allocation4], 1
    %s3371 = scalar_lea.sflag [#allocation4], 1
    %3372 = vsyncpa %s3371, 1

</llo_original>
